<compile_context>
chip_gen: v6e
topology: v6e:2x2x1
jax: 0.10.0
libtpu: 0.0.40
codegen_flags: <defaults>
</compile_context>

<pallas_src>
import functools

import jax
import jax.numpy as jnp
from jax import lax
from jax.experimental import pallas as pl
from jax.experimental.pallas import tpu as pltpu


# ---------------------------------------------------------------------------
# Small helpers
# ---------------------------------------------------------------------------
def _round_up(x, m):
    return (x + m - 1) // m * m


def _choose_tm(m, cap=512):
    """Row-tile size: big enough to amortize per-step overhead (~0.35us/step),
    small enough to double-buffer within v5e's 16 MiB scoped VMEM default."""
    if m >= cap:
        return cap
    return _round_up(m, 16)  # multiple of 16 keeps bf16 sublane packing aligned


def _pad_rows(x, mp):
    m = x.shape[0]
    if mp == m:
        return x
    return jnp.pad(x, ((0, mp - m), (0, 0)))


def _fused_fits_vmem(mp, k, cout, out_itemsize, budget=8 * 1024 * 1024):
    """Conservative VMEM estimate for the single-tile fused conv+BN path
    (x2 for Pallas double-buffering of the BlockSpec'd operands)."""
    per_buf = mp * k * 2 + k * cout * 2 + mp * cout * out_itemsize + 4 * cout * 4
    live_f32 = 2 * mp * cout * 4  # y and y*y temporaries
    return 2 * per_buf + live_f32 <= budget


# ---------------------------------------------------------------------------
# Pallas kernels
# ---------------------------------------------------------------------------
def _matmul_lrelu_kernel(p_ref, w_ref, o_ref):
    # bf16 patches @ bf16 weight on the MXU, f32 accumulate, LeakyReLU(0.2) in f32.
    y = jnp.dot(p_ref[...], w_ref[...], preferred_element_type=jnp.float32)
    o_ref[...] = jnp.where(y >= 0.0, y, 0.2 * y).astype(o_ref.dtype)


def _fused_conv_bn_lrelu_kernel(p_ref, w_ref, g_ref, b_ref, o_ref, *, inv_m, eps):
    # Whole batch in one tile: matmul + full-batch BN stats + normalize + LeakyReLU
    # fused; the f32 conv result never leaves VMEM.
    y = jnp.dot(p_ref[...], w_ref[...], preferred_element_type=jnp.float32)
    mean = jnp.sum(y, axis=0, keepdims=True) * inv_m       # zero-padded rows add 0
    var = jnp.sum(y * y, axis=0, keepdims=True) * inv_m - mean * mean
    scale = g_ref[...] * lax.rsqrt(var + eps)
    shift = b_ref[...] - mean * scale
    z = y * scale + shift
    o_ref[...] = jnp.where(z >= 0.0, z, 0.2 * z).astype(o_ref.dtype)


def _matmul_stats_kernel(p_ref, w_ref, y_ref, sum_ref, ssq_ref):
    # Pass 1 of tiled conv+BN: matmul tile + accumulate full-batch per-channel sum
    # and sum-of-squares into resident (1, Cout) accumulators (grid = "arbitrary").
    y = jnp.dot(p_ref[...], w_ref[...], preferred_element_type=jnp.float32)
    y_ref[...] = y

    @pl.when(pl.program_id(0) == 0)
    def _():
        sum_ref[...] = jnp.zeros_like(sum_ref)
        ssq_ref[...] = jnp.zeros_like(ssq_ref)

    sum_ref[...] += jnp.sum(y, axis=0, keepdims=True)
    ssq_ref[...] += jnp.sum(y * y, axis=0, keepdims=True)


def _bn_fold_lrelu_kernel(y_ref, sum_ref, ssq_ref, g_ref, b_ref, o_ref, *, inv_m, eps):
    # Pass 2 of tiled conv+BN: fold stats -> scale/shift in-kernel (EUP rsqrt),
    # then normalize + LeakyReLU(0.2).
    mean = sum_ref[...] * inv_m
    var = ssq_ref[...] * inv_m - mean * mean
    scale = g_ref[...] * lax.rsqrt(var + eps)
    shift = b_ref[...] - mean * scale
    z = y_ref[...] * scale + shift
    o_ref[...] = jnp.where(z >= 0.0, z, 0.2 * z).astype(o_ref.dtype)


# ---------------------------------------------------------------------------
# Tiled pallas_call wrappers
# ---------------------------------------------------------------------------
def _conv_lrelu(patches, w, out_dtype):
    m, k = patches.shape
    cout = w.shape[1]
    tm = _choose_tm(m)
    mp = _round_up(m, tm)
    patches_p = _pad_rows(patches, mp)

    out = pl.pallas_call(
        _matmul_lrelu_kernel,
        out_shape=jax.ShapeDtypeStruct((mp, cout), out_dtype),
        grid=(mp // tm,),
        in_specs=[pl.BlockSpec((tm, k), lambda i: (i, 0)),
                  pl.BlockSpec((k, cout), lambda i: (0, 0))],   # weight VMEM-resident
        out_specs=pl.BlockSpec((tm, cout), lambda i: (i, 0)),
        compiler_params=pltpu.CompilerParams(
            dimension_semantics=("parallel",)),
    )(patches_p, w)
    return out[:m]


def _conv_bn_lrelu(patches, w, gamma, beta, out_dtype, eps=1e-5):
    m, k = patches.shape
    cout = w.shape[1]
    inv_m = 1.0 / float(m)  # padded rows are zero -> divide by the real row count

    # ---- Fast path: whole batch in one tile, fully fused ----
    mp1 = _round_up(m, 16)
    if _fused_fits_vmem(mp1, k, cout, jnp.dtype(out_dtype).itemsize):
        patches_p = _pad_rows(patches, mp1)
        kern = functools.partial(_fused_conv_bn_lrelu_kernel, inv_m=inv_m, eps=eps)
        out = pl.pallas_call(
            kern,
            out_shape=jax.ShapeDtypeStruct((mp1, cout), out_dtype),
            grid=(1,),
            in_specs=[pl.BlockSpec((mp1, k), lambda i: (0, 0)),
                      pl.BlockSpec((k, cout), lambda i: (0, 0)),
                      pl.BlockSpec((1, cout), lambda i: (0, 0)),
                      pl.BlockSpec((1, cout), lambda i: (0, 0))],
            out_specs=pl.BlockSpec((mp1, cout), lambda i: (0, 0)),
            compiler_params=pltpu.CompilerParams(
                dimension_semantics=("arbitrary",)),
        )(patches_p, w, gamma, beta)
        return out[:m]

    # ---- General path: tiled two-pass (full-batch BN stats across tiles) ----
    tm = _choose_tm(m)
    mp = _round_up(m, tm)
    patches_p = _pad_rows(patches, mp)

    y, col_sum, col_ssq = pl.pallas_call(
        _matmul_stats_kernel,
        out_shape=(jax.ShapeDtypeStruct((mp, cout), jnp.float32),
                   jax.ShapeDtypeStruct((1, cout), jnp.float32),
                   jax.ShapeDtypeStruct((1, cout), jnp.float32)),
        grid=(mp // tm,),
        in_specs=[pl.BlockSpec((tm, k), lambda i: (i, 0)),
                  pl.BlockSpec((k, cout), lambda i: (0, 0))],
        out_specs=(pl.BlockSpec((tm, cout), lambda i: (i, 0)),
                   pl.BlockSpec((1, cout), lambda i: (0, 0)),
                   pl.BlockSpec((1, cout), lambda i: (0, 0))),
        compiler_params=pltpu.CompilerParams(
            dimension_semantics=("arbitrary",)),   # stats accumulator is resident
    )(patches_p, w)

    kern2 = functools.partial(_bn_fold_lrelu_kernel, inv_m=inv_m, eps=eps)
    out = pl.pallas_call(
        kern2,
        out_shape=jax.ShapeDtypeStruct((mp, cout), out_dtype),
        grid=(mp // tm,),
        in_specs=[pl.BlockSpec((tm, cout), lambda i: (i, 0)),
                  pl.BlockSpec((1, cout), lambda i: (0, 0)),
                  pl.BlockSpec((1, cout), lambda i: (0, 0)),
                  pl.BlockSpec((1, cout), lambda i: (0, 0)),
                  pl.BlockSpec((1, cout), lambda i: (0, 0))],
        out_specs=pl.BlockSpec((tm, cout), lambda i: (i, 0)),
        compiler_params=pltpu.CompilerParams(
            dimension_semantics=("parallel",)),
    )(y, col_sum, col_ssq, gamma, beta)
    return out[:m]


# ---------------------------------------------------------------------------
# Glue: im2col (k=4, s=2, p=1) matching PyTorch Conv2d(4, stride=2, padding=1,
# bias=False) output sizes 28->14->7->3.  Fused inside the jit; emits bf16 directly.
# ---------------------------------------------------------------------------
def _im2col(x, k=4, s=2, p=1):
    n, h, w, c = x.shape
    xp = jnp.pad(x, ((0, 0), (p, p), (p, p), (0, 0)))
    oh = (h + 2 * p - k) // s + 1
    ow = (w + 2 * p - k) // s + 1
    cols = []
    for i in range(k):
        for j in range(k):
            cols.append(xp[:, i:i + s * oh:s, j:j + s * ow:s, :])  # (N, OH, OW, C)
    patches = jnp.stack(cols, axis=3)          # (N, OH, OW, k*k, C)  K-order (kh,kw,cin)
    return patches.reshape(n * oh * ow, k * k * c), oh, ow


def _conv_w_to_mm(w_oihw):
    # (Cout, Cin, KH, KW) -> (KH*KW*Cin, Cout) matching im2col K-ordering.
    co, ci, kh, kw = w_oihw.shape
    return jnp.transpose(w_oihw, (2, 3, 1, 0)).reshape(kh * kw * ci, co)


# ---------------------------------------------------------------------------
# Parameters (deterministic, shapes from the PyTorch __init__)
# ---------------------------------------------------------------------------
def init_params(key):
    ks = jax.random.split(key, 4)
    w1 = jax.random.normal(ks[0], (64, 1, 4, 4), jnp.float32) * 0.05
    w2 = jax.random.normal(ks[1], (128, 64, 4, 4), jnp.float32) * 0.05
    w3 = jax.random.normal(ks[2], (256, 128, 4, 4), jnp.float32) * 0.05
    wl = jax.random.normal(ks[3], (1, 256 * 3 * 3), jnp.float32) * 0.02

    # Pre-permute the Linear weight (NCHW flatten order) to NHWC flatten order so
    # the forward pass needs no runtime transpose before the matmul.
    wl_nhwc = jnp.transpose(wl.reshape(1, 256, 3, 3), (0, 2, 3, 1)).reshape(1, 256 * 9)

    return {
        "w1": _conv_w_to_mm(w1).astype(jnp.bfloat16),   # (16, 64)
        "w2": _conv_w_to_mm(w2).astype(jnp.bfloat16),   # (1024, 128)
        "w3": _conv_w_to_mm(w3).astype(jnp.bfloat16),   # (2048, 256)
        "g2": jnp.ones((1, 128), jnp.float32),          # BatchNorm2d(128) weight
        "b2": jnp.zeros((1, 128), jnp.float32),         # BatchNorm2d(128) bias
        "g3": jnp.ones((1, 256), jnp.float32),          # BatchNorm2d(256) weight
        "b3": jnp.zeros((1, 256), jnp.float32),         # BatchNorm2d(256) bias
        "wl": jnp.transpose(wl_nhwc, (1, 0)),           # (2304, 1)  NHWC-order
        "bl": jnp.zeros((1, 1), jnp.float32),           # Linear bias
    }


# ---------------------------------------------------------------------------
# Forward pass (matches the PyTorch nn.Sequential semantics, training-mode BN)
# ---------------------------------------------------------------------------
@jax.jit
def discriminator_forward(x_nchw, params):
    n = x_nchw.shape[0]
    x = jnp.transpose(x_nchw, (0, 2, 3, 1)).astype(jnp.bfloat16)  # NCHW -> NHWC, bf16

    # Conv2d(1->64) + LeakyReLU(0.2)
    p, oh, ow = _im2col(x)
    x = _conv_lrelu(p, params["w1"], jnp.bfloat16).reshape(n, oh, ow, 64)

    # Conv2d(64->128) + BatchNorm2d(128) + LeakyReLU(0.2)
    p, oh, ow = _im2col(x)
    x = _conv_bn_lrelu(p, params["w2"], params["g2"], params["b2"],
                       jnp.bfloat16).reshape(n, oh, ow, 128)

    # Conv2d(128->256) + BatchNorm2d(256) + LeakyReLU(0.2)
    p, oh, ow = _im2col(x)
    x = _conv_bn_lrelu(p, params["w3"], params["g3"], params["b3"],
                       jnp.float32).reshape(n, oh, ow, 256)

    # Flatten (NHWC order; Linear weight was pre-permuted to match) + Linear + Sigmoid.
    # Negligible FLOPs and a 1-lane output -> left to XLA.
    flat = x.reshape(n, oh * ow * 256)
    logits = flat @ params["wl"] + params["bl"]
    return jax.nn.sigmoid(logits)  # (N, 1)


if __name__ == "__main__":
    key = jax.random.PRNGKey(0)
    k_x, k_p = jax.random.split(key)
    # Input size implied by Linear(256*3*3, 1): 28x28 single-channel images.
    x = jax.random.normal(k_x, (2, 1, 28, 28), jnp.float32)
    params = init_params(k_p)

    out = discriminator_forward(x, params)
    out = jax.block_until_ready(out)
    assert out.shape == (2, 1)
    assert bool(jnp.all(jnp.isfinite(out)))
    assert bool(jnp.all((out >= 0.0) & (out <= 1.0)))
    print("KERNEL_OK")
</pallas_src>

<mosaic_0001>
module attributes {stable_mosaic.version = 11 : i64} {
  func.func @_matmul_lrelu_kernel(%arg0: i32, %arg1: memref<400x16xbf16, #tpu.memory_space<vmem>>, %arg2: memref<16x64xbf16, #tpu.memory_space<vmem>>, %arg3: memref<400x64xbf16, #tpu.memory_space<vmem>>) attributes {dimension_semantics = [#tpu.dimension_semantics<parallel>], iteration_bounds = array<i64: 1>, scalar_prefetch = 0 : i64, scratch_operands = 0 : i64, tpu.core_type = #tpu.core_type<tc>, window_params = [{transform_indices = @transform_0, window_bounds = array<i64: 400, 16>}, {pipeline_mode = #tpu.pipeline_mode<synchronous>, transform_indices = @transform_1, window_bounds = array<i64: 16, 64>}, {transform_indices = @transform_2, window_bounds = array<i64: 400, 64>}]} {
    %c0 = arith.constant 0 : index
    %c0_0 = arith.constant 0 : index
    %0 = vector.load %arg1[%c0, %c0_0] : memref<400x16xbf16, #tpu.memory_space<vmem>>, vector<400x16xbf16>
    %c0_1 = arith.constant 0 : index
    %c0_2 = arith.constant 0 : index
    %1 = vector.load %arg2[%c0_1, %c0_2] : memref<16x64xbf16, #tpu.memory_space<vmem>>, vector<16x64xbf16>
    %cst = arith.constant dense<0.000000e+00> : vector<400x64xf32>
    %2 = tpu.matmul %0, %1, %cst {dimension_numbers = #tpu.dot_dimension_numbers<[1], [0], [0], [1], [0, 0, 1, 1], [], []>} : vector<400x16xbf16>, vector<16x64xbf16>, vector<400x64xf32> -> vector<400x64xf32>
    %cst_3 = arith.constant 0.000000e+00 : f32
    %3 = vector.broadcast %cst_3 : f32 to vector<400x64xf32>
    %4 = arith.cmpf oge, %2, %3 : vector<400x64xf32>
    %cst_4 = arith.constant 2.000000e-01 : f32
    %5 = vector.broadcast %cst_4 : f32 to vector<400x64xf32>
    %6 = arith.mulf %5, %2 : vector<400x64xf32>
    %7 = arith.select %4, %2, %6 : vector<400x64xi1>, vector<400x64xf32>
    %8 = arith.truncf %7 : vector<400x64xf32> to vector<400x64xbf16>
    %c0_5 = arith.constant 0 : index
    %c0_6 = arith.constant 0 : index
    %9 = vector.load %arg3[%c0_5, %c0_6] : memref<400x64xbf16, #tpu.memory_space<vmem>>, vector<400x64xbf16>
    tpu.vector_store %arg3[%c0_5, %c0_6], %8 {strides = array<i32>} : memref<400x64xbf16, #tpu.memory_space<vmem>>, vector<400x64xbf16>,
    return
  }
  func.func @transform_0(%arg0: i32) -> (i32, i32) {
    %c0_i32 = arith.constant 0 : i32
    %c0_i32_0 = arith.constant 0 : i32
    return %arg0, %c0_i32 : i32, i32
  }
  func.func @transform_1(%arg0: i32) -> (i32, i32) {
    %c0_i32 = arith.constant 0 : i32
    %c0_i32_0 = arith.constant 0 : i32
    %c0_i32_1 = arith.constant 0 : i32
    return %c0_i32, %c0_i32_0 : i32, i32
  }
  func.func @transform_2(%arg0: i32) -> (i32, i32) {
    %c0_i32 = arith.constant 0 : i32
    %c0_i32_0 = arith.constant 0 : i32
    return %arg0, %c0_i32 : i32, i32
  }
}

module attributes {stable_mosaic.version = 11 : i64} {
  func.func @_fused_conv_bn_lrelu_kernel(%arg0: i32, %arg1: memref<112x1024xbf16, #tpu.memory_space<vmem>>, %arg2: memref<1024x128xbf16, #tpu.memory_space<vmem>>, %arg3: memref<1x128xf32, #tpu.memory_space<vmem>>, %arg4: memref<1x128xf32, #tpu.memory_space<vmem>>, %arg5: memref<112x128xbf16, #tpu.memory_space<vmem>>) attributes {dimension_semantics = [#tpu.dimension_semantics<arbitrary>], iteration_bounds = array<i64: 1>, scalar_prefetch = 0 : i64, scratch_operands = 0 : i64, tpu.core_type = #tpu.core_type<tc>, window_params = [{pipeline_mode = #tpu.pipeline_mode<synchronous>, transform_indices = @transform_0, window_bounds = array<i64: 112, 1024>}, {pipeline_mode = #tpu.pipeline_mode<synchronous>, transform_indices = @transform_1, window_bounds = array<i64: 1024, 128>}, {pipeline_mode = #tpu.pipeline_mode<synchronous>, transform_indices = @transform_2, window_bounds = array<i64: 1, 128>}, {pipeline_mode = #tpu.pipeline_mode<synchronous>, transform_indices = @transform_3, window_bounds = array<i64: 1, 128>}, {pipeline_mode = #tpu.pipeline_mode<synchronous>, transform_indices = @transform_4, window_bounds = array<i64: 112, 128>}]} {
    %c0 = arith.constant 0 : index
    %c0_0 = arith.constant 0 : index
    %0 = vector.load %arg1[%c0, %c0_0] : memref<112x1024xbf16, #tpu.memory_space<vmem>>, vector<112x1024xbf16>
    %c0_1 = arith.constant 0 : index
    %c0_2 = arith.constant 0 : index
    %1 = vector.load %arg2[%c0_1, %c0_2] : memref<1024x128xbf16, #tpu.memory_space<vmem>>, vector<1024x128xbf16>
    %cst = arith.constant dense<0.000000e+00> : vector<112x128xf32>
    %2 = tpu.matmul %0, %1, %cst {dimension_numbers = #tpu.dot_dimension_numbers<[1], [0], [0], [1], [0, 0, 1, 1], [], []>} : vector<112x1024xbf16>, vector<1024x128xbf16>, vector<112x128xf32> -> vector<112x128xf32>
    %cst_3 = arith.constant dense<0.000000e+00> : vector<128xf32>
    %3 = vector.multi_reduction <add>, %2, %cst_3 [0] : vector<112x128xf32> to vector<128xf32>
    %4 = vector.shape_cast %3 : vector<128xf32> to vector<1x128xf32>
    %cst_4 = arith.constant 0.0102040814 : f32
    %5 = vector.broadcast %cst_4 : f32 to vector<1x128xf32>
    %6 = arith.mulf %4, %5 : vector<1x128xf32>
    %7 = arith.mulf %2, %2 : vector<112x128xf32>
    %cst_5 = arith.constant dense<0.000000e+00> : vector<128xf32>
    %8 = vector.multi_reduction <add>, %7, %cst_5 [0] : vector<112x128xf32> to vector<128xf32>
    %9 = vector.shape_cast %8 : vector<128xf32> to vector<1x128xf32>
    %cst_6 = arith.constant 0.0102040814 : f32
    %10 = vector.broadcast %cst_6 : f32 to vector<1x128xf32>
    %11 = arith.mulf %9, %10 : vector<1x128xf32>
    %12 = arith.mulf %6, %6 : vector<1x128xf32>
    %13 = arith.subf %11, %12 : vector<1x128xf32>
    %c0_7 = arith.constant 0 : index
    %c0_8 = arith.constant 0 : index
    %14 = vector.load %arg3[%c0_7, %c0_8] : memref<1x128xf32, #tpu.memory_space<vmem>>, vector<1x128xf32>
    %cst_9 = arith.constant 9.99999974E-6 : f32
    %15 = vector.broadcast %cst_9 : f32 to vector<1x128xf32>
    %16 = arith.addf %13, %15 : vector<1x128xf32>
    %17 = math.rsqrt %16 : vector<1x128xf32>
    %18 = arith.mulf %14, %17 : vector<1x128xf32>
    %c0_10 = arith.constant 0 : index
    %c0_11 = arith.constant 0 : index
    %19 = vector.load %arg4[%c0_10, %c0_11] : memref<1x128xf32, #tpu.memory_space<vmem>>, vector<1x128xf32>
    %20 = arith.mulf %6, %18 : vector<1x128xf32>
    %21 = arith.subf %19, %20 : vector<1x128xf32>
    %22 = vector.broadcast %18 : vector<1x128xf32> to vector<112x128xf32>
    %23 = arith.mulf %2, %22 : vector<112x128xf32>
    %24 = vector.broadcast %21 : vector<1x128xf32> to vector<112x128xf32>
    %25 = arith.addf %23, %24 : vector<112x128xf32>
    %cst_12 = arith.constant 0.000000e+00 : f32
    %26 = vector.broadcast %cst_12 : f32 to vector<112x128xf32>
    %27 = arith.cmpf oge, %25, %26 : vector<112x128xf32>
    %cst_13 = arith.constant 2.000000e-01 : f32
    %28 = vector.broadcast %cst_13 : f32 to vector<112x128xf32>
    %29 = arith.mulf %28, %25 : vector<112x128xf32>
    %30 = arith.select %27, %25, %29 : vector<112x128xi1>, vector<112x128xf32>
    %31 = arith.truncf %30 : vector<112x128xf32> to vector<112x128xbf16>
    %c0_14 = arith.constant 0 : index
    %c0_15 = arith.constant 0 : index
    %32 = vector.load %arg5[%c0_14, %c0_15] : memref<112x128xbf16, #tpu.memory_space<vmem>>, vector<112x128xbf16>
    tpu.vector_store %arg5[%c0_14, %c0_15], %31 {strides = array<i32>} : memref<112x128xbf16, #tpu.memory_space<vmem>>, vector<112x128xbf16>,
    return
  }
  func.func @transform_0(%arg0: i32) -> (i32, i32) {
    %c0_i32 = arith.constant 0 : i32
    %c0_i32_0 = arith.constant 0 : i32
    %c0_i32_1 = arith.constant 0 : i32
    return %c0_i32, %c0_i32_0 : i32, i32
  }
  func.func @transform_1(%arg0: i32) -> (i32, i32) {
    %c0_i32 = arith.constant 0 : i32
    %c0_i32_0 = arith.constant 0 : i32
    %c0_i32_1 = arith.constant 0 : i32
    return %c0_i32, %c0_i32_0 : i32, i32
  }
  func.func @transform_2(%arg0: i32) -> (i32, i32) {
    %c0_i32 = arith.constant 0 : i32
    %c0_i32_0 = arith.constant 0 : i32
    %c0_i32_1 = arith.constant 0 : i32
    return %c0_i32, %c0_i32_0 : i32, i32
  }
  func.func @transform_3(%arg0: i32) -> (i32, i32) {
    %c0_i32 = arith.constant 0 : i32
    %c0_i32_0 = arith.constant 0 : i32
    %c0_i32_1 = arith.constant 0 : i32
    return %c0_i32, %c0_i32_0 : i32, i32
  }
  func.func @transform_4(%arg0: i32) -> (i32, i32) {
    %c0_i32 = arith.constant 0 : i32
    %c0_i32_0 = arith.constant 0 : i32
    %c0_i32_1 = arith.constant 0 : i32
    return %c0_i32, %c0_i32_0 : i32, i32
  }
}

module attributes {stable_mosaic.version = 11 : i64} {
  func.func @_fused_conv_bn_lrelu_kernel(%arg0: i32, %arg1: memref<32x2048xbf16, #tpu.memory_space<vmem>>, %arg2: memref<2048x256xbf16, #tpu.memory_space<vmem>>, %arg3: memref<1x256xf32, #tpu.memory_space<vmem>>, %arg4: memref<1x256xf32, #tpu.memory_space<vmem>>, %arg5: memref<32x256xf32, #tpu.memory_space<vmem>>) attributes {dimension_semantics = [#tpu.dimension_semantics<arbitrary>], iteration_bounds = array<i64: 1>, scalar_prefetch = 0 : i64, scratch_operands = 0 : i64, tpu.core_type = #tpu.core_type<tc>, window_params = [{pipeline_mode = #tpu.pipeline_mode<synchronous>, transform_indices = @transform_0, window_bounds = array<i64: 32, 2048>}, {pipeline_mode = #tpu.pipeline_mode<synchronous>, transform_indices = @transform_1, window_bounds = array<i64: 2048, 256>}, {pipeline_mode = #tpu.pipeline_mode<synchronous>, transform_indices = @transform_2, window_bounds = array<i64: 1, 256>}, {pipeline_mode = #tpu.pipeline_mode<synchronous>, transform_indices = @transform_3, window_bounds = array<i64: 1, 256>}, {pipeline_mode = #tpu.pipeline_mode<synchronous>, transform_indices = @transform_4, window_bounds = array<i64: 32, 256>}]} {
    %c0 = arith.constant 0 : index
    %c0_0 = arith.constant 0 : index
    %0 = vector.load %arg1[%c0, %c0_0] : memref<32x2048xbf16, #tpu.memory_space<vmem>>, vector<32x2048xbf16>
    %c0_1 = arith.constant 0 : index
    %c0_2 = arith.constant 0 : index
    %1 = vector.load %arg2[%c0_1, %c0_2] : memref<2048x256xbf16, #tpu.memory_space<vmem>>, vector<2048x256xbf16>
    %cst = arith.constant dense<0.000000e+00> : vector<32x256xf32>
    %2 = tpu.matmul %0, %1, %cst {dimension_numbers = #tpu.dot_dimension_numbers<[1], [0], [0], [1], [0, 0, 1, 1], [], []>} : vector<32x2048xbf16>, vector<2048x256xbf16>, vector<32x256xf32> -> vector<32x256xf32>
    %cst_3 = arith.constant dense<0.000000e+00> : vector<256xf32>
    %3 = vector.multi_reduction <add>, %2, %cst_3 [0] : vector<32x256xf32> to vector<256xf32>
    %4 = vector.shape_cast %3 : vector<256xf32> to vector<1x256xf32>
    %cst_4 = arith.constant 0.055555556 : f32
    %5 = vector.broadcast %cst_4 : f32 to vector<1x256xf32>
    %6 = arith.mulf %4, %5 : vector<1x256xf32>
    %7 = arith.mulf %2, %2 : vector<32x256xf32>
    %cst_5 = arith.constant dense<0.000000e+00> : vector<256xf32>
    %8 = vector.multi_reduction <add>, %7, %cst_5 [0] : vector<32x256xf32> to vector<256xf32>
    %9 = vector.shape_cast %8 : vector<256xf32> to vector<1x256xf32>
    %cst_6 = arith.constant 0.055555556 : f32
    %10 = vector.broadcast %cst_6 : f32 to vector<1x256xf32>
    %11 = arith.mulf %9, %10 : vector<1x256xf32>
    %12 = arith.mulf %6, %6 : vector<1x256xf32>
    %13 = arith.subf %11, %12 : vector<1x256xf32>
    %c0_7 = arith.constant 0 : index
    %c0_8 = arith.constant 0 : index
    %14 = vector.load %arg3[%c0_7, %c0_8] : memref<1x256xf32, #tpu.memory_space<vmem>>, vector<1x256xf32>
    %cst_9 = arith.constant 9.99999974E-6 : f32
    %15 = vector.broadcast %cst_9 : f32 to vector<1x256xf32>
    %16 = arith.addf %13, %15 : vector<1x256xf32>
    %17 = math.rsqrt %16 : vector<1x256xf32>
    %18 = arith.mulf %14, %17 : vector<1x256xf32>
    %c0_10 = arith.constant 0 : index
    %c0_11 = arith.constant 0 : index
    %19 = vector.load %arg4[%c0_10, %c0_11] : memref<1x256xf32, #tpu.memory_space<vmem>>, vector<1x256xf32>
    %20 = arith.mulf %6, %18 : vector<1x256xf32>
    %21 = arith.subf %19, %20 : vector<1x256xf32>
    %22 = vector.broadcast %18 : vector<1x256xf32> to vector<32x256xf32>
    %23 = arith.mulf %2, %22 : vector<32x256xf32>
    %24 = vector.broadcast %21 : vector<1x256xf32> to vector<32x256xf32>
    %25 = arith.addf %23, %24 : vector<32x256xf32>
    %cst_12 = arith.constant 0.000000e+00 : f32
    %26 = vector.broadcast %cst_12 : f32 to vector<32x256xf32>
    %27 = arith.cmpf oge, %25, %26 : vector<32x256xf32>
    %cst_13 = arith.constant 2.000000e-01 : f32
    %28 = vector.broadcast %cst_13 : f32 to vector<32x256xf32>
    %29 = arith.mulf %28, %25 : vector<32x256xf32>
    %30 = arith.select %27, %25, %29 : vector<32x256xi1>, vector<32x256xf32>
    %c0_14 = arith.constant 0 : index
    %c0_15 = arith.constant 0 : index
    %31 = vector.load %arg5[%c0_14, %c0_15] : memref<32x256xf32, #tpu.memory_space<vmem>>, vector<32x256xf32>
    tpu.vector_store %arg5[%c0_14, %c0_15], %30 {strides = array<i32>} : memref<32x256xf32, #tpu.memory_space<vmem>>, vector<32x256xf32>,
    return
  }
  func.func @transform_0(%arg0: i32) -> (i32, i32) {
    %c0_i32 = arith.constant 0 : i32
    %c0_i32_0 = arith.constant 0 : i32
    %c0_i32_1 = arith.constant 0 : i32
    return %c0_i32, %c0_i32_0 : i32, i32
  }
  func.func @transform_1(%arg0: i32) -> (i32, i32) {
    %c0_i32 = arith.constant 0 : i32
    %c0_i32_0 = arith.constant 0 : i32
    %c0_i32_1 = arith.constant 0 : i32
    return %c0_i32, %c0_i32_0 : i32, i32
  }
  func.func @transform_2(%arg0: i32) -> (i32, i32) {
    %c0_i32 = arith.constant 0 : i32
    %c0_i32_0 = arith.constant 0 : i32
    %c0_i32_1 = arith.constant 0 : i32
    return %c0_i32, %c0_i32_0 : i32, i32
  }
  func.func @transform_3(%arg0: i32) -> (i32, i32) {
    %c0_i32 = arith.constant 0 : i32
    %c0_i32_0 = arith.constant 0 : i32
    %c0_i32_1 = arith.constant 0 : i32
    return %c0_i32, %c0_i32_0 : i32, i32
  }
  func.func @transform_4(%arg0: i32) -> (i32, i32) {
    %c0_i32 = arith.constant 0 : i32
    %c0_i32_0 = arith.constant 0 : i32
    %c0_i32_1 = arith.constant 0 : i32
    return %c0_i32, %c0_i32_0 : i32, i32
  }
}

</mosaic_0001>

<llo_original>
// kernel: discriminator_forward.3
$region0: #{discriminator_forward.3}
  #allocation0 [shape = 'u32[]', space=smem, size = 0x4, offset = 0x4, fixed_abs, tag = 'smem constant byte address 0x4 - core index']
  #allocation1 [shape = 'u32[144,128]{1,0:T(1,128)}', space=vmem, size = 0x12000, scoped, tag = 'internal scratch']
  %s0 = inlined_call_operand.vmem [shape: bf16[400,16], index: 0, kind: input, shape index: {}]
  %s1 = inlined_call_operand.vmem [shape: bf16[16,64], index: 1, kind: input, shape index: {}]
  %s2 = inlined_call_operand.vmem [shape: bf16[400,64], index: 2, kind: output, shape index: {}]
  %s3 = sld [smem:[#allocation0]]
  $region18: #{discriminator_forward.3} parent=0
    _
  %s5 = ssub.s32 1, %s3
  %s6 = scalar_select 0, %s5, %s3
  // Predicated region
  $region2: #{discriminator_forward.3} parent=0 // pred_check
    _
  $region3: #{discriminator_forward.3} parent=0 // pred_check_branch
    %8 = sbr.rel (0) target = $region5
  $region4: #{discriminator_forward.3} parent=0 // pred_region
    _
  $region5: #{discriminator_forward.3} parent=0 // pred_fallthru
    _
  // Predicated region
  $region6: #{discriminator_forward.3} parent=0 // pred_check
    _
  $region7: #{discriminator_forward.3} parent=0 // pred_check_branch
    %10 = sbr.rel (0) target = $region9
  $region8: #{discriminator_forward.3} parent=0 // pred_region
    _
  $region9: #{discriminator_forward.3} parent=0 // pred_fallthru
    _
  %v12 = vld [vmem:[%s0] sm:$0xf]
  %v13 = vld [vmem:[%s0 + $0x4] sm:$0xf]
  %v14 = vld [vmem:[%s0 + $0x8] sm:$0xf]
  %v15 = vld [vmem:[%s0 + $0xc] sm:$0xf]
  %v16 = vld [vmem:[%s0 + $0x10] sm:$0xf]
  %v17 = vld [vmem:[%s0 + $0x14] sm:$0xf]
  %v18 = vld [vmem:[%s0 + $0x18] sm:$0xf]
  %v19 = vld [vmem:[%s0 + $0x1c] sm:$0xf]
  %v20 = vld [vmem:[%s0 + $0x20] sm:$0xf]
  %v21 = vld [vmem:[%s0 + $0x24] sm:$0xf]
  %v22 = vld [vmem:[%s0 + $0x28] sm:$0xf]
  %v23 = vld [vmem:[%s0 + $0x2c] sm:$0xf]
  %v24 = vld [vmem:[%s0 + $0x30] sm:$0xf]
  %v25 = vld [vmem:[%s0 + $0x34] sm:$0xf]
  %v26 = vld [vmem:[%s0 + $0x38] sm:$0xf]
  %v27 = vld [vmem:[%s0 + $0x3c] sm:$0xf]
  %v28 = vld [vmem:[%s0 + $0x40] sm:$0xf]
  %v29 = vld [vmem:[%s0 + $0x44] sm:$0xf]
  %v30 = vld [vmem:[%s0 + $0x48] sm:$0xf]
  %v31 = vld [vmem:[%s0 + $0x4c] sm:$0xf]
  %v32 = vld [vmem:[%s0 + $0x50] sm:$0xf]
  %v33 = vld [vmem:[%s0 + $0x54] sm:$0xf]
  %v34 = vld [vmem:[%s0 + $0x58] sm:$0xf]
  %v35 = vld [vmem:[%s0 + $0x5c] sm:$0xf]
  %v36 = vld [vmem:[%s0 + $0x60] sm:$0xf]
  %v37 = vld [vmem:[%s0 + $0x64] sm:$0xf]
  %v38 = vld [vmem:[%s0 + $0x68] sm:$0xf]
  %v39 = vld [vmem:[%s0 + $0x6c] sm:$0xf]
  %v40 = vld [vmem:[%s0 + $0x70] sm:$0xf]
  %v41 = vld [vmem:[%s0 + $0x74] sm:$0xf]
  %v42 = vld [vmem:[%s0 + $0x78] sm:$0xf]
  %v43 = vld [vmem:[%s0 + $0x7c] sm:$0xf]
  %v44 = vld [vmem:[%s0 + $0x80] sm:$0xf]
  %v45 = vld [vmem:[%s0 + $0x84] sm:$0xf]
  %v46 = vld [vmem:[%s0 + $0x88] sm:$0xf]
  %v47 = vld [vmem:[%s0 + $0x8c] sm:$0xf]
  %v48 = vld [vmem:[%s0 + $0x90] sm:$0xf]
  %v49 = vld [vmem:[%s0 + $0x94] sm:$0xf]
  %v50 = vld [vmem:[%s0 + $0x98] sm:$0xf]
  %v51 = vld [vmem:[%s0 + $0x9c] sm:$0xf]
  %v52 = vld [vmem:[%s0 + $0xa0] sm:$0xf]
  %v53 = vld [vmem:[%s0 + $0xa4] sm:$0xf]
  %v54 = vld [vmem:[%s0 + $0xa8] sm:$0xf]
  %v55 = vld [vmem:[%s0 + $0xac] sm:$0xf]
  %v56 = vld [vmem:[%s0 + $0xb0] sm:$0xf]
  %v57 = vld [vmem:[%s0 + $0xb4] sm:$0xf]
  %v58 = vld [vmem:[%s0 + $0xb8] sm:$0xf]
  %v59 = vld [vmem:[%s0 + $0xbc] sm:$0xf]
  %v60 = vld [vmem:[%s0 + $0xc0] sm:$0xf]
  %v61 = vld [vmem:[%s0 + $0xc4] sm:$0xf]
  %v62 = vld [vmem:[%s1] sm:$0xf]
  %v63 = vld [vmem:[%s1 + $0x4] sm:$0xf]
  %v114 = vunpack.c.l.b16 %v12
  %v115 = vunpack.c.l.b16 %v13
  %v116 = vunpack.c.l.b16 %v14
  %v117 = vunpack.c.l.b16 %v15
  %v118 = vunpack.c.l.b16 %v16
  %v119 = vunpack.c.l.b16 %v17
  %v120 = vunpack.c.l.b16 %v18
  %v121 = vunpack.c.l.b16 %v19
  %v122 = vunpack.c.l.b16 %v20
  %v123 = vunpack.c.l.b16 %v21
  %v124 = vunpack.c.l.b16 %v22
  %v125 = vunpack.c.l.b16 %v23
  %v126 = vunpack.c.l.b16 %v24
  %v127 = vunpack.c.l.b16 %v25
  %v128 = vunpack.c.l.b16 %v26
  %v129 = vunpack.c.l.b16 %v27
  %v130 = vunpack.c.l.b16 %v28
  %v131 = vunpack.c.l.b16 %v29
  %v132 = vunpack.c.l.b16 %v30
  %v133 = vunpack.c.l.b16 %v31
  %v134 = vunpack.c.l.b16 %v32
  %v135 = vunpack.c.l.b16 %v33
  %v136 = vunpack.c.l.b16 %v34
  %v137 = vunpack.c.l.b16 %v35
  %v138 = vunpack.c.l.b16 %v36
  %v139 = vunpack.c.l.b16 %v37
  %v140 = vunpack.c.l.b16 %v38
  %v141 = vunpack.c.l.b16 %v39
  %v142 = vunpack.c.l.b16 %v40
  %v143 = vunpack.c.l.b16 %v41
  %v144 = vunpack.c.l.b16 %v42
  %v145 = vunpack.c.l.b16 %v43
  %v146 = vunpack.c.l.b16 %v44
  %v147 = vunpack.c.l.b16 %v45
  %v148 = vunpack.c.l.b16 %v46
  %v149 = vunpack.c.l.b16 %v47
  %v150 = vunpack.c.l.b16 %v48
  %v151 = vunpack.c.l.b16 %v49
  %v152 = vunpack.c.l.b16 %v50
  %v153 = vunpack.c.l.b16 %v51
  %v154 = vunpack.c.l.b16 %v52
  %v155 = vunpack.c.l.b16 %v53
  %v156 = vunpack.c.l.b16 %v54
  %v157 = vunpack.c.l.b16 %v55
  %v158 = vunpack.c.l.b16 %v56
  %v159 = vunpack.c.l.b16 %v57
  %v160 = vunpack.c.l.b16 %v58
  %v161 = vunpack.c.l.b16 %v59
  %v162 = vunpack.c.l.b16 %v60
  %v163 = vunpack.c.l.b16 %v61
  %v164 = vpack.c.b16 %v115, %v114
  %v165 = vpack.c.b16 %v117, %v116
  %v166 = vpack.c.b16 %v119, %v118
  %v167 = vpack.c.b16 %v121, %v120
  %v168 = vpack.c.b16 %v123, %v122
  %v169 = vpack.c.b16 %v125, %v124
  %v170 = vpack.c.b16 %v127, %v126
  %v171 = vpack.c.b16 %v129, %v128
  %v172 = vpack.c.b16 %v131, %v130
  %v173 = vpack.c.b16 %v133, %v132
  %v174 = vpack.c.b16 %v135, %v134
  %v175 = vpack.c.b16 %v137, %v136
  %v176 = vpack.c.b16 %v139, %v138
  %v177 = vpack.c.b16 %v141, %v140
  %v178 = vpack.c.b16 %v143, %v142
  %v179 = vpack.c.b16 %v145, %v144
  %v180 = vpack.c.b16 %v147, %v146
  %v181 = vpack.c.b16 %v149, %v148
  %v182 = vpack.c.b16 %v151, %v150
  %v183 = vpack.c.b16 %v153, %v152
  %v184 = vpack.c.b16 %v155, %v154
  %v185 = vpack.c.b16 %v157, %v156
  %v186 = vpack.c.b16 %v159, %v158
  %v187 = vpack.c.b16 %v161, %v160
  %v188 = vpack.c.b16 %v163, %v162
  %v191 = vunpack.c.l.b16 %v62
  %v192 = vunpack.c.l.b16 %v63
  %v193 = vpack.c.b16 %v192, %v191
  %vm195 = vcmask 130048
  %v197 = vsel %vm195, %v164, 0
  %v200 = vsel %vm195, %v165, 0
  %v203 = vsel %vm195, %v166, 0
  %v206 = vsel %vm195, %v167, 0
  %v209 = vsel %vm195, %v168, 0
  %v212 = vsel %vm195, %v169, 0
  %v215 = vsel %vm195, %v170, 0
  %v218 = vsel %vm195, %v171, 0
  %v221 = vsel %vm195, %v172, 0
  %v224 = vsel %vm195, %v173, 0
  %v227 = vsel %vm195, %v174, 0
  %v230 = vsel %vm195, %v175, 0
  %v233 = vsel %vm195, %v176, 0
  %v236 = vsel %vm195, %v177, 0
  %v239 = vsel %vm195, %v178, 0
  %v242 = vsel %vm195, %v179, 0
  %v245 = vsel %vm195, %v180, 0
  %v248 = vsel %vm195, %v181, 0
  %v251 = vsel %vm195, %v182, 0
  %v254 = vsel %vm195, %v183, 0
  %v257 = vsel %vm195, %v184, 0
  %v260 = vsel %vm195, %v185, 0
  %v263 = vsel %vm195, %v186, 0
  %v266 = vsel %vm195, %v187, 0
  %v269 = vsel %vm195, %v188, 0
  %271 = vmatprep.subr.bf16.mxu0 0
  %272 = vmatpush1.bf16.msra.mxu0 0
  %273 = vmatprep.subr.bf16.mxu0 0
  %274 = vmatpush1.bf16.msra.mxu0 0
  %275 = vmatprep.subr.bf16.mxu0 0
  %276 = vmatpush1.bf16.msra.mxu0 0
  %277 = vmatprep.subr.bf16.mxu0 0
  %278 = vmatpush1.bf16.msra.mxu0 0
  %279 = vmatprep.subr.bf16.mxu0 0
  %280 = vmatpush1.bf16.msra.mxu0 0
  %281 = vmatprep.subr.bf16.mxu0 0
  %282 = vmatpush1.bf16.msra.mxu0 0
  %283 = vmatprep.subr.bf16.mxu0 0
  %284 = vmatpush1.bf16.msra.mxu0 0
  %285 = vmatprep.subr.bf16.mxu0 0
  %286 = vmatpush1.bf16.msra.mxu0 %v193
  %287 = vmatprep.subr.bf16.mxu0 0
  %288 = vmatpush2.bf16.msra.mxu0 0
  %289 = vmatprep.subr.bf16.mxu0 0
  %290 = vmatpush2.bf16.msra.mxu0 0
  %291 = vmatprep.subr.bf16.mxu0 0
  %292 = vmatpush2.bf16.msra.mxu0 0
  %293 = vmatprep.subr.bf16.mxu0 0
  %294 = vmatpush2.bf16.msra.mxu0 0
  %295 = vmatprep.subr.bf16.mxu0 0
  %296 = vmatpush2.bf16.msra.mxu0 0
  %297 = vmatprep.subr.bf16.mxu0 0
  %298 = vmatpush2.bf16.msra.mxu0 0
  %299 = vmatprep.subr.bf16.mxu0 0
  %300 = vmatpush2.bf16.msra.mxu0 0
  %301 = vmatprep.subr.bf16.mxu0 0
  %302 = vmatpush2.bf16.msra.mxu0 0
  %303 = vmatprep.mubr.bf16.mxu0 0
  %304 = vmatmul.mubr.bf16.gmra.mxu0 %v197
  %v305 = vpop.f32.mrf.mxu0
  %v306 = vadd.f32 0.0, %v305
  %v307 = vpop.f32.mrf.mxu0
  %v308 = vpop.f32.mrf.mxu0
  %v309 = vadd.f32 0.0, %v308
  %v310 = vpop.f32.mrf.mxu0
  %311 = vmatprep.mubr.bf16.mxu0 0
  %312 = vmatmul.mubr.bf16.gmra.mxu0 %v200
  %v313 = vpop.f32.mrf.mxu0
  %v314 = vadd.f32 0.0, %v313
  %v315 = vpop.f32.mrf.mxu0
  %v316 = vpop.f32.mrf.mxu0
  %v317 = vadd.f32 0.0, %v316
  %v318 = vpop.f32.mrf.mxu0
  %319 = vmatprep.mubr.bf16.mxu0 0
  %320 = vmatmul.mubr.bf16.gmra.mxu0 %v203
  %v321 = vpop.f32.mrf.mxu0
  %v322 = vadd.f32 0.0, %v321
  %v323 = vpop.f32.mrf.mxu0
  %v324 = vpop.f32.mrf.mxu0
  %v325 = vadd.f32 0.0, %v324
  %v326 = vpop.f32.mrf.mxu0
  %327 = vmatprep.mubr.bf16.mxu0 0
  %328 = vmatmul.mubr.bf16.gmra.mxu0 %v206
  %v329 = vpop.f32.mrf.mxu0
  %v330 = vadd.f32 0.0, %v329
  %v331 = vpop.f32.mrf.mxu0
  %v332 = vpop.f32.mrf.mxu0
  %v333 = vadd.f32 0.0, %v332
  %v334 = vpop.f32.mrf.mxu0
  %335 = vmatprep.mubr.bf16.mxu0 0
  %336 = vmatmul.mubr.bf16.gmra.mxu0 %v209
  %v337 = vpop.f32.mrf.mxu0
  %v338 = vadd.f32 0.0, %v337
  %v339 = vpop.f32.mrf.mxu0
  %v340 = vpop.f32.mrf.mxu0
  %v341 = vadd.f32 0.0, %v340
  %v342 = vpop.f32.mrf.mxu0
  %343 = vmatprep.mubr.bf16.mxu0 0
  %344 = vmatmul.mubr.bf16.gmra.mxu0 %v212
  %v345 = vpop.f32.mrf.mxu0
  %v346 = vadd.f32 0.0, %v345
  %v347 = vpop.f32.mrf.mxu0
  %v348 = vpop.f32.mrf.mxu0
  %v349 = vadd.f32 0.0, %v348
  %v350 = vpop.f32.mrf.mxu0
  %351 = vmatprep.mubr.bf16.mxu0 0
  %352 = vmatmul.mubr.bf16.gmra.mxu0 %v215
  %v353 = vpop.f32.mrf.mxu0
  %v354 = vadd.f32 0.0, %v353
  %v355 = vpop.f32.mrf.mxu0
  %v356 = vpop.f32.mrf.mxu0
  %v357 = vadd.f32 0.0, %v356
  %v358 = vpop.f32.mrf.mxu0
  %359 = vmatprep.mubr.bf16.mxu0 0
  %360 = vmatmul.mubr.bf16.gmra.mxu0 %v218
  %v361 = vpop.f32.mrf.mxu0
  %v362 = vadd.f32 0.0, %v361
  %v363 = vpop.f32.mrf.mxu0
  %v364 = vpop.f32.mrf.mxu0
  %v365 = vadd.f32 0.0, %v364
  %v366 = vpop.f32.mrf.mxu0
  %367 = vmatprep.mubr.bf16.mxu0 0
  %368 = vmatmul.mubr.bf16.gmra.mxu0 %v221
  %v369 = vpop.f32.mrf.mxu0
  %v370 = vadd.f32 0.0, %v369
  %v371 = vpop.f32.mrf.mxu0
  %v372 = vpop.f32.mrf.mxu0
  %v373 = vadd.f32 0.0, %v372
  %v374 = vpop.f32.mrf.mxu0
  %375 = vmatprep.mubr.bf16.mxu0 0
  %376 = vmatmul.mubr.bf16.gmra.mxu0 %v224
  %v377 = vpop.f32.mrf.mxu0
  %v378 = vadd.f32 0.0, %v377
  %v379 = vpop.f32.mrf.mxu0
  %v380 = vpop.f32.mrf.mxu0
  %v381 = vadd.f32 0.0, %v380
  %v382 = vpop.f32.mrf.mxu0
  %383 = vmatprep.mubr.bf16.mxu0 0
  %384 = vmatmul.mubr.bf16.gmra.mxu0 %v227
  %v385 = vpop.f32.mrf.mxu0
  %v386 = vadd.f32 0.0, %v385
  %v387 = vpop.f32.mrf.mxu0
  %v388 = vpop.f32.mrf.mxu0
  %v389 = vadd.f32 0.0, %v388
  %v390 = vpop.f32.mrf.mxu0
  %391 = vmatprep.mubr.bf16.mxu0 0
  %392 = vmatmul.mubr.bf16.gmra.mxu0 %v230
  %v393 = vpop.f32.mrf.mxu0
  %v394 = vadd.f32 0.0, %v393
  %v395 = vpop.f32.mrf.mxu0
  %v396 = vpop.f32.mrf.mxu0
  %v397 = vadd.f32 0.0, %v396
  %v398 = vpop.f32.mrf.mxu0
  %399 = vmatprep.mubr.bf16.mxu0 0
  %400 = vmatmul.mubr.bf16.gmra.mxu0 %v233
  %v401 = vpop.f32.mrf.mxu0
  %v402 = vadd.f32 0.0, %v401
  %v403 = vpop.f32.mrf.mxu0
  %v404 = vpop.f32.mrf.mxu0
  %v405 = vadd.f32 0.0, %v404
  %v406 = vpop.f32.mrf.mxu0
  %407 = vmatprep.mubr.bf16.mxu0 0
  %408 = vmatmul.mubr.bf16.gmra.mxu0 %v236
  %v409 = vpop.f32.mrf.mxu0
  %v410 = vadd.f32 0.0, %v409
  %v411 = vpop.f32.mrf.mxu0
  %v412 = vpop.f32.mrf.mxu0
  %v413 = vadd.f32 0.0, %v412
  %v414 = vpop.f32.mrf.mxu0
  %415 = vmatprep.mubr.bf16.mxu0 0
  %416 = vmatmul.mubr.bf16.gmra.mxu0 %v239
  %v417 = vpop.f32.mrf.mxu0
  %v418 = vadd.f32 0.0, %v417
  %v419 = vpop.f32.mrf.mxu0
  %v420 = vpop.f32.mrf.mxu0
  %v421 = vadd.f32 0.0, %v420
  %v422 = vpop.f32.mrf.mxu0
  %423 = vmatprep.mubr.bf16.mxu0 0
  %424 = vmatmul.mubr.bf16.gmra.mxu0 %v242
  %v425 = vpop.f32.mrf.mxu0
  %v426 = vadd.f32 0.0, %v425
  %v427 = vpop.f32.mrf.mxu0
  %v428 = vpop.f32.mrf.mxu0
  %v429 = vadd.f32 0.0, %v428
  %v430 = vpop.f32.mrf.mxu0
  %431 = vmatprep.mubr.bf16.mxu0 0
  %432 = vmatmul.mubr.bf16.gmra.mxu0 %v245
  %v433 = vpop.f32.mrf.mxu0
  %v434 = vadd.f32 0.0, %v433
  %v435 = vpop.f32.mrf.mxu0
  %v436 = vpop.f32.mrf.mxu0
  %v437 = vadd.f32 0.0, %v436
  %v438 = vpop.f32.mrf.mxu0
  %439 = vmatprep.mubr.bf16.mxu0 0
  %440 = vmatmul.mubr.bf16.gmra.mxu0 %v248
  %v441 = vpop.f32.mrf.mxu0
  %v442 = vadd.f32 0.0, %v441
  %v443 = vpop.f32.mrf.mxu0
  %v444 = vpop.f32.mrf.mxu0
  %v445 = vadd.f32 0.0, %v444
  %v446 = vpop.f32.mrf.mxu0
  %447 = vmatprep.mubr.bf16.mxu0 0
  %448 = vmatmul.mubr.bf16.gmra.mxu0 %v251
  %v449 = vpop.f32.mrf.mxu0
  %v450 = vadd.f32 0.0, %v449
  %v451 = vpop.f32.mrf.mxu0
  %v452 = vpop.f32.mrf.mxu0
  %v453 = vadd.f32 0.0, %v452
  %v454 = vpop.f32.mrf.mxu0
  %455 = vmatprep.mubr.bf16.mxu0 0
  %456 = vmatmul.mubr.bf16.gmra.mxu0 %v254
  %v457 = vpop.f32.mrf.mxu0
  %v458 = vadd.f32 0.0, %v457
  %v459 = vpop.f32.mrf.mxu0
  %v460 = vpop.f32.mrf.mxu0
  %v461 = vadd.f32 0.0, %v460
  %v462 = vpop.f32.mrf.mxu0
  %463 = vmatprep.mubr.bf16.mxu0 0
  %464 = vmatmul.mubr.bf16.gmra.mxu0 %v257
  %v465 = vpop.f32.mrf.mxu0
  %v466 = vadd.f32 0.0, %v465
  %v467 = vpop.f32.mrf.mxu0
  %v468 = vpop.f32.mrf.mxu0
  %v469 = vadd.f32 0.0, %v468
  %v470 = vpop.f32.mrf.mxu0
  %471 = vmatprep.mubr.bf16.mxu0 0
  %472 = vmatmul.mubr.bf16.gmra.mxu0 %v260
  %v473 = vpop.f32.mrf.mxu0
  %v474 = vadd.f32 0.0, %v473
  %v475 = vpop.f32.mrf.mxu0
  %v476 = vpop.f32.mrf.mxu0
  %v477 = vadd.f32 0.0, %v476
  %v478 = vpop.f32.mrf.mxu0
  %479 = vmatprep.mubr.bf16.mxu0 0
  %480 = vmatmul.mubr.bf16.gmra.mxu0 %v263
  %v481 = vpop.f32.mrf.mxu0
  %v482 = vadd.f32 0.0, %v481
  %v483 = vpop.f32.mrf.mxu0
  %v484 = vpop.f32.mrf.mxu0
  %v485 = vadd.f32 0.0, %v484
  %v486 = vpop.f32.mrf.mxu0
  %487 = vmatprep.mubr.bf16.mxu0 0
  %488 = vmatmul.mubr.bf16.gmra.mxu0 %v266
  %v489 = vpop.f32.mrf.mxu0
  %v490 = vadd.f32 0.0, %v489
  %v491 = vpop.f32.mrf.mxu0
  %v492 = vpop.f32.mrf.mxu0
  %v493 = vadd.f32 0.0, %v492
  %v494 = vpop.f32.mrf.mxu0
  %495 = vmatprep.mubr.bf16.mxu0 0
  %496 = vmatmul.mubr.bf16.gmra.mxu0 %v269
  %v497 = vpop.f32.mrf.mxu0
  %v498 = vadd.f32 0.0, %v497
  %v499 = vpop.f32.mrf.mxu0
  %v500 = vpop.f32.mrf.mxu0
  %v501 = vadd.f32 0.0, %v500
  %v502 = vpop.f32.mrf.mxu0
  %503 = vdwg.mxu0
  %vm504 = vcmp.ge.f32.partialorder %v306, 0.0
  %vm505 = vcmp.ge.f32.partialorder %v309, 0.0
  %vm506 = vcmp.ge.f32.partialorder %v314, 0.0
  %vm507 = vcmp.ge.f32.partialorder %v317, 0.0
  %vm508 = vcmp.ge.f32.partialorder %v322, 0.0
  %vm509 = vcmp.ge.f32.partialorder %v325, 0.0
  %vm510 = vcmp.ge.f32.partialorder %v330, 0.0
  %vm511 = vcmp.ge.f32.partialorder %v333, 0.0
  %vm512 = vcmp.ge.f32.partialorder %v338, 0.0
  %vm513 = vcmp.ge.f32.partialorder %v341, 0.0
  %vm514 = vcmp.ge.f32.partialorder %v346, 0.0
  %vm515 = vcmp.ge.f32.partialorder %v349, 0.0
  %vm516 = vcmp.ge.f32.partialorder %v354, 0.0
  %vm517 = vcmp.ge.f32.partialorder %v357, 0.0
  %vm518 = vcmp.ge.f32.partialorder %v362, 0.0
  %vm519 = vcmp.ge.f32.partialorder %v365, 0.0
  %vm520 = vcmp.ge.f32.partialorder %v370, 0.0
  %vm521 = vcmp.ge.f32.partialorder %v373, 0.0
  %vm522 = vcmp.ge.f32.partialorder %v378, 0.0
  %vm523 = vcmp.ge.f32.partialorder %v381, 0.0
  %vm524 = vcmp.ge.f32.partialorder %v386, 0.0
  %vm525 = vcmp.ge.f32.partialorder %v389, 0.0
  %vm526 = vcmp.ge.f32.partialorder %v394, 0.0
  %vm527 = vcmp.ge.f32.partialorder %v397, 0.0
  %vm528 = vcmp.ge.f32.partialorder %v402, 0.0
  %vm529 = vcmp.ge.f32.partialorder %v405, 0.0
  %vm530 = vcmp.ge.f32.partialorder %v410, 0.0
  %vm531 = vcmp.ge.f32.partialorder %v413, 0.0
  %vm532 = vcmp.ge.f32.partialorder %v418, 0.0
  %vm533 = vcmp.ge.f32.partialorder %v421, 0.0
  %vm534 = vcmp.ge.f32.partialorder %v426, 0.0
  %vm535 = vcmp.ge.f32.partialorder %v429, 0.0
  %vm536 = vcmp.ge.f32.partialorder %v434, 0.0
  %vm537 = vcmp.ge.f32.partialorder %v437, 0.0
  %vm538 = vcmp.ge.f32.partialorder %v442, 0.0
  %vm539 = vcmp.ge.f32.partialorder %v445, 0.0
  %vm540 = vcmp.ge.f32.partialorder %v450, 0.0
  %vm541 = vcmp.ge.f32.partialorder %v453, 0.0
  %vm542 = vcmp.ge.f32.partialorder %v458, 0.0
  %vm543 = vcmp.ge.f32.partialorder %v461, 0.0
  %vm544 = vcmp.ge.f32.partialorder %v466, 0.0
  %vm545 = vcmp.ge.f32.partialorder %v469, 0.0
  %vm546 = vcmp.ge.f32.partialorder %v474, 0.0
  %vm547 = vcmp.ge.f32.partialorder %v477, 0.0
  %vm548 = vcmp.ge.f32.partialorder %v482, 0.0
  %vm549 = vcmp.ge.f32.partialorder %v485, 0.0
  %vm550 = vcmp.ge.f32.partialorder %v490, 0.0
  %vm551 = vcmp.ge.f32.partialorder %v493, 0.0
  %vm552 = vcmp.ge.f32.partialorder %v498, 0.0
  %vm553 = vcmp.ge.f32.partialorder %v501, 0.0
  %v554 = vmul.f32 %v306, 0.2
  %v555 = vmul.f32 %v309, 0.2
  %v556 = vmul.f32 %v314, 0.2
  %v557 = vmul.f32 %v317, 0.2
  %v558 = vmul.f32 %v322, 0.2
  %v559 = vmul.f32 %v325, 0.2
  %v560 = vmul.f32 %v330, 0.2
  %v561 = vmul.f32 %v333, 0.2
  %v562 = vmul.f32 %v338, 0.2
  %v563 = vmul.f32 %v341, 0.2
  %v564 = vmul.f32 %v346, 0.2
  %v565 = vmul.f32 %v349, 0.2
  %v566 = vmul.f32 %v354, 0.2
  %v567 = vmul.f32 %v357, 0.2
  %v568 = vmul.f32 %v362, 0.2
  %v569 = vmul.f32 %v365, 0.2
  %v570 = vmul.f32 %v370, 0.2
  %v571 = vmul.f32 %v373, 0.2
  %v572 = vmul.f32 %v378, 0.2
  %v573 = vmul.f32 %v381, 0.2
  %v574 = vmul.f32 %v386, 0.2
  %v575 = vmul.f32 %v389, 0.2
  %v576 = vmul.f32 %v394, 0.2
  %v577 = vmul.f32 %v397, 0.2
  %v578 = vmul.f32 %v402, 0.2
  %v579 = vmul.f32 %v405, 0.2
  %v580 = vmul.f32 %v410, 0.2
  %v581 = vmul.f32 %v413, 0.2
  %v582 = vmul.f32 %v418, 0.2
  %v583 = vmul.f32 %v421, 0.2
  %v584 = vmul.f32 %v426, 0.2
  %v585 = vmul.f32 %v429, 0.2
  %v586 = vmul.f32 %v434, 0.2
  %v587 = vmul.f32 %v437, 0.2
  %v588 = vmul.f32 %v442, 0.2
  %v589 = vmul.f32 %v445, 0.2
  %v590 = vmul.f32 %v450, 0.2
  %v591 = vmul.f32 %v453, 0.2
  %v592 = vmul.f32 %v458, 0.2
  %v593 = vmul.f32 %v461, 0.2
  %v594 = vmul.f32 %v466, 0.2
  %v595 = vmul.f32 %v469, 0.2
  %v596 = vmul.f32 %v474, 0.2
  %v597 = vmul.f32 %v477, 0.2
  %v598 = vmul.f32 %v482, 0.2
  %v599 = vmul.f32 %v485, 0.2
  %v600 = vmul.f32 %v490, 0.2
  %v601 = vmul.f32 %v493, 0.2
  %v602 = vmul.f32 %v498, 0.2
  %v603 = vmul.f32 %v501, 0.2
  %v604 = vsel %vm504, %v306, %v554
  %v605 = vsel %vm505, %v309, %v555
  %v606 = vsel %vm506, %v314, %v556
  %v607 = vsel %vm507, %v317, %v557
  %v608 = vsel %vm508, %v322, %v558
  %v609 = vsel %vm509, %v325, %v559
  %v610 = vsel %vm510, %v330, %v560
  %v611 = vsel %vm511, %v333, %v561
  %v612 = vsel %vm512, %v338, %v562
  %v613 = vsel %vm513, %v341, %v563
  %v614 = vsel %vm514, %v346, %v564
  %v615 = vsel %vm515, %v349, %v565
  %v616 = vsel %vm516, %v354, %v566
  %v617 = vsel %vm517, %v357, %v567
  %v618 = vsel %vm518, %v362, %v568
  %v619 = vsel %vm519, %v365, %v569
  %v620 = vsel %vm520, %v370, %v570
  %v621 = vsel %vm521, %v373, %v571
  %v622 = vsel %vm522, %v378, %v572
  %v623 = vsel %vm523, %v381, %v573
  %v624 = vsel %vm524, %v386, %v574
  %v625 = vsel %vm525, %v389, %v575
  %v626 = vsel %vm526, %v394, %v576
  %v627 = vsel %vm527, %v397, %v577
  %v628 = vsel %vm528, %v402, %v578
  %v629 = vsel %vm529, %v405, %v579
  %v630 = vsel %vm530, %v410, %v580
  %v631 = vsel %vm531, %v413, %v581
  %v632 = vsel %vm532, %v418, %v582
  %v633 = vsel %vm533, %v421, %v583
  %v634 = vsel %vm534, %v426, %v584
  %v635 = vsel %vm535, %v429, %v585
  %v636 = vsel %vm536, %v434, %v586
  %v637 = vsel %vm537, %v437, %v587
  %v638 = vsel %vm538, %v442, %v588
  %v639 = vsel %vm539, %v445, %v589
  %v640 = vsel %vm540, %v450, %v590
  %v641 = vsel %vm541, %v453, %v591
  %v642 = vsel %vm542, %v458, %v592
  %v643 = vsel %vm543, %v461, %v593
  %v644 = vsel %vm544, %v466, %v594
  %v645 = vsel %vm545, %v469, %v595
  %v646 = vsel %vm546, %v474, %v596
  %v647 = vsel %vm547, %v477, %v597
  %v648 = vsel %vm548, %v482, %v598
  %v649 = vsel %vm549, %v485, %v599
  %v650 = vsel %vm550, %v490, %v600
  %v651 = vsel %vm551, %v493, %v601
  %v652 = vsel %vm552, %v498, %v602
  %v653 = vsel %vm553, %v501, %v603
  %v654 = vpack.c.bf16 %v605, %v604
  %v655 = vpack.c.bf16 %v607, %v606
  %v656 = vpack.c.bf16 %v609, %v608
  %v657 = vpack.c.bf16 %v611, %v610
  %v658 = vpack.c.bf16 %v613, %v612
  %v659 = vpack.c.bf16 %v615, %v614
  %v660 = vpack.c.bf16 %v617, %v616
  %v661 = vpack.c.bf16 %v619, %v618
  %v662 = vpack.c.bf16 %v621, %v620
  %v663 = vpack.c.bf16 %v623, %v622
  %v664 = vpack.c.bf16 %v625, %v624
  %v665 = vpack.c.bf16 %v627, %v626
  %v666 = vpack.c.bf16 %v629, %v628
  %v667 = vpack.c.bf16 %v631, %v630
  %v668 = vpack.c.bf16 %v633, %v632
  %v669 = vpack.c.bf16 %v635, %v634
  %v670 = vpack.c.bf16 %v637, %v636
  %v671 = vpack.c.bf16 %v639, %v638
  %v672 = vpack.c.bf16 %v641, %v640
  %v673 = vpack.c.bf16 %v643, %v642
  %v674 = vpack.c.bf16 %v645, %v644
  %v675 = vpack.c.bf16 %v647, %v646
  %v676 = vpack.c.bf16 %v649, %v648
  %v677 = vpack.c.bf16 %v651, %v650
  %v678 = vpack.c.bf16 %v653, %v652
  %v704 = vunpack.c.l.b16 %v654
  %v705 = vunpack.c.h.b16 %v654
  %v706 = vunpack.c.l.b16 %v655
  %v707 = vunpack.c.h.b16 %v655
  %v708 = vunpack.c.l.b16 %v656
  %v709 = vunpack.c.h.b16 %v656
  %v710 = vunpack.c.l.b16 %v657
  %v711 = vunpack.c.h.b16 %v657
  %v712 = vunpack.c.l.b16 %v658
  %v713 = vunpack.c.h.b16 %v658
  %v714 = vunpack.c.l.b16 %v659
  %v715 = vunpack.c.h.b16 %v659
  %v716 = vunpack.c.l.b16 %v660
  %v717 = vunpack.c.h.b16 %v660
  %v718 = vunpack.c.l.b16 %v661
  %v719 = vunpack.c.h.b16 %v661
  %v720 = vunpack.c.l.b16 %v662
  %v721 = vunpack.c.h.b16 %v662
  %v722 = vunpack.c.l.b16 %v663
  %v723 = vunpack.c.h.b16 %v663
  %v724 = vunpack.c.l.b16 %v664
  %v725 = vunpack.c.h.b16 %v664
  %v726 = vunpack.c.l.b16 %v665
  %v727 = vunpack.c.h.b16 %v665
  %v728 = vunpack.c.l.b16 %v666
  %v729 = vunpack.c.h.b16 %v666
  %v730 = vunpack.c.l.b16 %v667
  %v731 = vunpack.c.h.b16 %v667
  %v732 = vunpack.c.l.b16 %v668
  %v733 = vunpack.c.h.b16 %v668
  %v734 = vunpack.c.l.b16 %v669
  %v735 = vunpack.c.h.b16 %v669
  %v736 = vunpack.c.l.b16 %v670
  %v737 = vunpack.c.h.b16 %v670
  %v738 = vunpack.c.l.b16 %v671
  %v739 = vunpack.c.h.b16 %v671
  %v740 = vunpack.c.l.b16 %v672
  %v741 = vunpack.c.h.b16 %v672
  %v742 = vunpack.c.l.b16 %v673
  %v743 = vunpack.c.h.b16 %v673
  %v744 = vunpack.c.l.b16 %v674
  %v745 = vunpack.c.h.b16 %v674
  %v746 = vunpack.c.l.b16 %v675
  %v747 = vunpack.c.h.b16 %v675
  %v748 = vunpack.c.l.b16 %v676
  %v749 = vunpack.c.h.b16 %v676
  %v750 = vunpack.c.l.b16 %v677
  %v751 = vunpack.c.h.b16 %v677
  %v752 = vunpack.c.l.b16 %v678
  %v753 = vunpack.c.h.b16 %v678
  %v754 = vpack.c.b16 %v704, %v704
  %v755 = vpack.c.b16 %v705, %v705
  %v756 = vpack.c.b16 %v706, %v706
  %v757 = vpack.c.b16 %v707, %v707
  %v758 = vpack.c.b16 %v708, %v708
  %v759 = vpack.c.b16 %v709, %v709
  %v760 = vpack.c.b16 %v710, %v710
  %v761 = vpack.c.b16 %v711, %v711
  %v762 = vpack.c.b16 %v712, %v712
  %v763 = vpack.c.b16 %v713, %v713
  %v764 = vpack.c.b16 %v714, %v714
  %v765 = vpack.c.b16 %v715, %v715
  %v766 = vpack.c.b16 %v716, %v716
  %v767 = vpack.c.b16 %v717, %v717
  %v768 = vpack.c.b16 %v718, %v718
  %v769 = vpack.c.b16 %v719, %v719
  %v770 = vpack.c.b16 %v720, %v720
  %v771 = vpack.c.b16 %v721, %v721
  %v772 = vpack.c.b16 %v722, %v722
  %v773 = vpack.c.b16 %v723, %v723
  %v774 = vpack.c.b16 %v724, %v724
  %v775 = vpack.c.b16 %v725, %v725
  %v776 = vpack.c.b16 %v726, %v726
  %v777 = vpack.c.b16 %v727, %v727
  %v778 = vpack.c.b16 %v728, %v728
  %v779 = vpack.c.b16 %v729, %v729
  %v780 = vpack.c.b16 %v730, %v730
  %v781 = vpack.c.b16 %v731, %v731
  %v782 = vpack.c.b16 %v732, %v732
  %v783 = vpack.c.b16 %v733, %v733
  %v784 = vpack.c.b16 %v734, %v734
  %v785 = vpack.c.b16 %v735, %v735
  %v786 = vpack.c.b16 %v736, %v736
  %v787 = vpack.c.b16 %v737, %v737
  %v788 = vpack.c.b16 %v738, %v738
  %v789 = vpack.c.b16 %v739, %v739
  %v790 = vpack.c.b16 %v740, %v740
  %v791 = vpack.c.b16 %v741, %v741
  %v792 = vpack.c.b16 %v742, %v742
  %v793 = vpack.c.b16 %v743, %v743
  %v794 = vpack.c.b16 %v744, %v744
  %v795 = vpack.c.b16 %v745, %v745
  %v796 = vpack.c.b16 %v746, %v746
  %v797 = vpack.c.b16 %v747, %v747
  %v798 = vpack.c.b16 %v748, %v748
  %v799 = vpack.c.b16 %v749, %v749
  %v800 = vpack.c.b16 %v750, %v750
  %v801 = vpack.c.b16 %v751, %v751
  %v802 = vpack.c.b16 %v752, %v752
  %v803 = vpack.c.b16 %v753, %v753
  %vm854 = vcmask 519168
  %855 = vst.msk [vmem:[%s2] sm:$0xf] %vm854, %v754
  %856 = vst.msk [vmem:[%s2 + $0x4] sm:$0xf] %vm854, %v755
  %857 = vst.msk [vmem:[%s2 + $0x8] sm:$0xf] %vm854, %v756
  %858 = vst.msk [vmem:[%s2 + $0xc] sm:$0xf] %vm854, %v757
  %859 = vst.msk [vmem:[%s2 + $0x10] sm:$0xf] %vm854, %v758
  %860 = vst.msk [vmem:[%s2 + $0x14] sm:$0xf] %vm854, %v759
  %861 = vst.msk [vmem:[%s2 + $0x18] sm:$0xf] %vm854, %v760
  %862 = vst.msk [vmem:[%s2 + $0x1c] sm:$0xf] %vm854, %v761
  %863 = vst.msk [vmem:[%s2 + $0x20] sm:$0xf] %vm854, %v762
  %864 = vst.msk [vmem:[%s2 + $0x24] sm:$0xf] %vm854, %v763
  %865 = vst.msk [vmem:[%s2 + $0x28] sm:$0xf] %vm854, %v764
  %866 = vst.msk [vmem:[%s2 + $0x2c] sm:$0xf] %vm854, %v765
  %867 = vst.msk [vmem:[%s2 + $0x30] sm:$0xf] %vm854, %v766
  %868 = vst.msk [vmem:[%s2 + $0x34] sm:$0xf] %vm854, %v767
  %869 = vst.msk [vmem:[%s2 + $0x38] sm:$0xf] %vm854, %v768
  %870 = vst.msk [vmem:[%s2 + $0x3c] sm:$0xf] %vm854, %v769
  %871 = vst.msk [vmem:[%s2 + $0x40] sm:$0xf] %vm854, %v770
  %872 = vst.msk [vmem:[%s2 + $0x44] sm:$0xf] %vm854, %v771
  %873 = vst.msk [vmem:[%s2 + $0x48] sm:$0xf] %vm854, %v772
  %874 = vst.msk [vmem:[%s2 + $0x4c] sm:$0xf] %vm854, %v773
  %875 = vst.msk [vmem:[%s2 + $0x50] sm:$0xf] %vm854, %v774
  %876 = vst.msk [vmem:[%s2 + $0x54] sm:$0xf] %vm854, %v775
  %877 = vst.msk [vmem:[%s2 + $0x58] sm:$0xf] %vm854, %v776
  %878 = vst.msk [vmem:[%s2 + $0x5c] sm:$0xf] %vm854, %v777
  %879 = vst.msk [vmem:[%s2 + $0x60] sm:$0xf] %vm854, %v778
  %880 = vst.msk [vmem:[%s2 + $0x64] sm:$0xf] %vm854, %v779
  %881 = vst.msk [vmem:[%s2 + $0x68] sm:$0xf] %vm854, %v780
  %882 = vst.msk [vmem:[%s2 + $0x6c] sm:$0xf] %vm854, %v781
  %883 = vst.msk [vmem:[%s2 + $0x70] sm:$0xf] %vm854, %v782
  %884 = vst.msk [vmem:[%s2 + $0x74] sm:$0xf] %vm854, %v783
  %885 = vst.msk [vmem:[%s2 + $0x78] sm:$0xf] %vm854, %v784
  %886 = vst.msk [vmem:[%s2 + $0x7c] sm:$0xf] %vm854, %v785
  %887 = vst.msk [vmem:[%s2 + $0x80] sm:$0xf] %vm854, %v786
  %888 = vst.msk [vmem:[%s2 + $0x84] sm:$0xf] %vm854, %v787
  %889 = vst.msk [vmem:[%s2 + $0x88] sm:$0xf] %vm854, %v788
  %890 = vst.msk [vmem:[%s2 + $0x8c] sm:$0xf] %vm854, %v789
  %891 = vst.msk [vmem:[%s2 + $0x90] sm:$0xf] %vm854, %v790
  %892 = vst.msk [vmem:[%s2 + $0x94] sm:$0xf] %vm854, %v791
  %893 = vst.msk [vmem:[%s2 + $0x98] sm:$0xf] %vm854, %v792
  %894 = vst.msk [vmem:[%s2 + $0x9c] sm:$0xf] %vm854, %v793
  %895 = vst.msk [vmem:[%s2 + $0xa0] sm:$0xf] %vm854, %v794
  %896 = vst.msk [vmem:[%s2 + $0xa4] sm:$0xf] %vm854, %v795
  %897 = vst.msk [vmem:[%s2 + $0xa8] sm:$0xf] %vm854, %v796
  %898 = vst.msk [vmem:[%s2 + $0xac] sm:$0xf] %vm854, %v797
  %899 = vst.msk [vmem:[%s2 + $0xb0] sm:$0xf] %vm854, %v798
  %900 = vst.msk [vmem:[%s2 + $0xb4] sm:$0xf] %vm854, %v799
  %901 = vst.msk [vmem:[%s2 + $0xb8] sm:$0xf] %vm854, %v800
  %902 = vst.msk [vmem:[%s2 + $0xbc] sm:$0xf] %vm854, %v801
  %903 = vst.msk [vmem:[%s2 + $0xc0] sm:$0xf] %vm854, %v802
  %904 = vst.msk [vmem:[%s2 + $0xc4] sm:$0xf] %vm854, %v803
  // Predicated region
  $region10: #{discriminator_forward.3} parent=0 // pred_check
    _
  $region11: #{discriminator_forward.3} parent=0 // pred_check_branch
    %906 = sbr.rel (0) target = $region13
  $region12: #{discriminator_forward.3} parent=0 // pred_region
    _
  $region13: #{discriminator_forward.3} parent=0 // pred_fallthru
    _
  // Predicated region
  $region14: #{discriminator_forward.3} parent=0 // pred_check
    _
  $region15: #{discriminator_forward.3} parent=0 // pred_check_branch
    %908 = sbr.rel (0) target = $region17
  $region16: #{discriminator_forward.3} parent=0 // pred_region
    _
  $region17: #{discriminator_forward.3} parent=0 // pred_fallthru
    _

// kernel: discriminator_forward.4
$region0: #{discriminator_forward.4}
  #allocation0 [shape = 'u32[]', space=smem, size = 0x4, offset = 0x4, fixed_abs, tag = 'smem constant byte address 0x4 - core index']
  #allocation1 [shape = 'u32[144,128]{1,0:T(1,128)}', space=vmem, size = 0x12000, scoped, tag = 'internal scratch']
  %s0 = inlined_call_operand.vmem [shape: bf16[112,1024], index: 0, kind: input, shape index: {}]
  %s1 = inlined_call_operand.vmem [shape: bf16[1024,128], index: 1, kind: input, shape index: {}]
  %s2 = inlined_call_operand.vmem [shape: f32[1,128], index: 2, kind: input, shape index: {}]
  %s3 = inlined_call_operand.vmem [shape: f32[1,128], index: 3, kind: input, shape index: {}]
  %s4 = inlined_call_operand.vmem [shape: bf16[112,128], index: 4, kind: output, shape index: {}]
  %s5 = sld [smem:[#allocation0]]
  $region26: #{discriminator_forward.4} parent=0
    _
  %s7 = ssub.s32 1, %s5
  %s8 = scalar_select 0, %s7, %s5
  // Predicated region
  $region2: #{discriminator_forward.4} parent=0 // pred_check
    _
  $region3: #{discriminator_forward.4} parent=0 // pred_check_branch
    %10 = sbr.rel (0) target = $region5
  $region4: #{discriminator_forward.4} parent=0 // pred_region
    _
  $region5: #{discriminator_forward.4} parent=0 // pred_fallthru
    _
  // Predicated region
  $region6: #{discriminator_forward.4} parent=0 // pred_check
    _
  $region7: #{discriminator_forward.4} parent=0 // pred_check_branch
    %12 = sbr.rel (0) target = $region9
  $region8: #{discriminator_forward.4} parent=0 // pred_region
    _
  $region9: #{discriminator_forward.4} parent=0 // pred_fallthru
    _
  // Predicated region
  $region10: #{discriminator_forward.4} parent=0 // pred_check
    _
  $region11: #{discriminator_forward.4} parent=0 // pred_check_branch
    %14 = sbr.rel (0) target = $region13
  $region12: #{discriminator_forward.4} parent=0 // pred_region
    _
  $region13: #{discriminator_forward.4} parent=0 // pred_fallthru
    _
  // Predicated region
  $region14: #{discriminator_forward.4} parent=0 // pred_check
    _
  $region15: #{discriminator_forward.4} parent=0 // pred_check_branch
    %16 = sbr.rel (0) target = $region17
  $region16: #{discriminator_forward.4} parent=0 // pred_region
    _
  $region17: #{discriminator_forward.4} parent=0 // pred_fallthru
    _
  %v18 = vld [vmem:[%s0] sm:$0xff]
  %v19 = vld [vmem:[%s0 + $0x8] sm:$0xff]
  %v20 = vld [vmem:[%s0 + $0x10] sm:$0xff]
  %v21 = vld [vmem:[%s0 + $0x18] sm:$0xff]
  %v22 = vld [vmem:[%s0 + $0x20] sm:$0xff]
  %v23 = vld [vmem:[%s0 + $0x28] sm:$0xff]
  %v24 = vld [vmem:[%s0 + $0x30] sm:$0xff]
  %v25 = vld [vmem:[%s0 + $0x38] sm:$0xff]
  %v26 = vld [vmem:[%s0 + $0x40] sm:$0xff]
  %v27 = vld [vmem:[%s0 + $0x48] sm:$0xff]
  %v28 = vld [vmem:[%s0 + $0x50] sm:$0xff]
  %v29 = vld [vmem:[%s0 + $0x58] sm:$0xff]
  %v30 = vld [vmem:[%s0 + $0x60] sm:$0xff]
  %v31 = vld [vmem:[%s0 + $0x68] sm:$0xff]
  %v32 = vld [vmem:[%s0 + $0x70] sm:$0xff]
  %v33 = vld [vmem:[%s0 + $0x78] sm:$0xff]
  %v34 = vld [vmem:[%s0 + $0x80] sm:$0xff]
  %v35 = vld [vmem:[%s0 + $0x88] sm:$0xff]
  %v36 = vld [vmem:[%s0 + $0x90] sm:$0xff]
  %v37 = vld [vmem:[%s0 + $0x98] sm:$0xff]
  %v38 = vld [vmem:[%s0 + $0xa0] sm:$0xff]
  %v39 = vld [vmem:[%s0 + $0xa8] sm:$0xff]
  %v40 = vld [vmem:[%s0 + $0xb0] sm:$0xff]
  %v41 = vld [vmem:[%s0 + $0xb8] sm:$0xff]
  %v42 = vld [vmem:[%s0 + $0xc0] sm:$0xff]
  %v43 = vld [vmem:[%s0 + $0xc8] sm:$0xff]
  %v44 = vld [vmem:[%s0 + $0xd0] sm:$0xff]
  %v45 = vld [vmem:[%s0 + $0xd8] sm:$0xff]
  %v46 = vld [vmem:[%s0 + $0xe0] sm:$0xff]
  %v47 = vld [vmem:[%s0 + $0xe8] sm:$0xff]
  %v48 = vld [vmem:[%s0 + $0xf0] sm:$0xff]
  %v49 = vld [vmem:[%s0 + $0xf8] sm:$0xff]
  %v50 = vld [vmem:[%s0 + $0x100] sm:$0xff]
  %v51 = vld [vmem:[%s0 + $0x108] sm:$0xff]
  %v52 = vld [vmem:[%s0 + $0x110] sm:$0xff]
  %v53 = vld [vmem:[%s0 + $0x118] sm:$0xff]
  %v54 = vld [vmem:[%s0 + $0x120] sm:$0xff]
  %v55 = vld [vmem:[%s0 + $0x128] sm:$0xff]
  %v56 = vld [vmem:[%s0 + $0x130] sm:$0xff]
  %v57 = vld [vmem:[%s0 + $0x138] sm:$0xff]
  %v58 = vld [vmem:[%s0 + $0x140] sm:$0xff]
  %v59 = vld [vmem:[%s0 + $0x148] sm:$0xff]
  %v60 = vld [vmem:[%s0 + $0x150] sm:$0xff]
  %v61 = vld [vmem:[%s0 + $0x158] sm:$0xff]
  %v62 = vld [vmem:[%s0 + $0x160] sm:$0xff]
  %v63 = vld [vmem:[%s0 + $0x168] sm:$0xff]
  %v64 = vld [vmem:[%s0 + $0x170] sm:$0xff]
  %v65 = vld [vmem:[%s0 + $0x178] sm:$0xff]
  %v66 = vld [vmem:[%s0 + $0x180] sm:$0xff]
  %v67 = vld [vmem:[%s0 + $0x188] sm:$0xff]
  %v68 = vld [vmem:[%s0 + $0x190] sm:$0xff]
  %v69 = vld [vmem:[%s0 + $0x198] sm:$0xff]
  %v70 = vld [vmem:[%s0 + $0x1a0] sm:$0xff]
  %v71 = vld [vmem:[%s0 + $0x1a8] sm:$0xff]
  %v72 = vld [vmem:[%s0 + $0x1b0] sm:$0xff]
  %v73 = vld [vmem:[%s0 + $0x1b8] sm:$0xff]
  %v74 = vld [vmem:[%s1] sm:$0xf]
  %v75 = vld [vmem:[%s1 + $0x4] sm:$0xf]
  %v76 = vld [vmem:[%s1 + $0x8] sm:$0xf]
  %v77 = vld [vmem:[%s1 + $0xc] sm:$0xf]
  %v78 = vld [vmem:[%s1 + $0x10] sm:$0xf]
  %v79 = vld [vmem:[%s1 + $0x14] sm:$0xf]
  %v80 = vld [vmem:[%s1 + $0x18] sm:$0xf]
  %v81 = vld [vmem:[%s1 + $0x1c] sm:$0xf]
  %v82 = vld [vmem:[%s1 + $0x20] sm:$0xf]
  %v83 = vld [vmem:[%s1 + $0x24] sm:$0xf]
  %v84 = vld [vmem:[%s1 + $0x28] sm:$0xf]
  %v85 = vld [vmem:[%s1 + $0x2c] sm:$0xf]
  %v86 = vld [vmem:[%s1 + $0x30] sm:$0xf]
  %v87 = vld [vmem:[%s1 + $0x34] sm:$0xf]
  %v88 = vld [vmem:[%s1 + $0x38] sm:$0xf]
  %v89 = vld [vmem:[%s1 + $0x3c] sm:$0xf]
  %v90 = vld [vmem:[%s1 + $0x40] sm:$0xf]
  %v91 = vld [vmem:[%s1 + $0x44] sm:$0xf]
  %v92 = vld [vmem:[%s1 + $0x48] sm:$0xf]
  %v93 = vld [vmem:[%s1 + $0x4c] sm:$0xf]
  %v94 = vld [vmem:[%s1 + $0x50] sm:$0xf]
  %v95 = vld [vmem:[%s1 + $0x54] sm:$0xf]
  %v96 = vld [vmem:[%s1 + $0x58] sm:$0xf]
  %v97 = vld [vmem:[%s1 + $0x5c] sm:$0xf]
  %v98 = vld [vmem:[%s1 + $0x60] sm:$0xf]
  %v99 = vld [vmem:[%s1 + $0x64] sm:$0xf]
  %v100 = vld [vmem:[%s1 + $0x68] sm:$0xf]
  %v101 = vld [vmem:[%s1 + $0x6c] sm:$0xf]
  %v102 = vld [vmem:[%s1 + $0x70] sm:$0xf]
  %v103 = vld [vmem:[%s1 + $0x74] sm:$0xf]
  %v104 = vld [vmem:[%s1 + $0x78] sm:$0xf]
  %v105 = vld [vmem:[%s1 + $0x7c] sm:$0xf]
  %v106 = vld [vmem:[%s1 + $0x80] sm:$0xf]
  %v107 = vld [vmem:[%s1 + $0x84] sm:$0xf]
  %v108 = vld [vmem:[%s1 + $0x88] sm:$0xf]
  %v109 = vld [vmem:[%s1 + $0x8c] sm:$0xf]
  %v110 = vld [vmem:[%s1 + $0x90] sm:$0xf]
  %v111 = vld [vmem:[%s1 + $0x94] sm:$0xf]
  %v112 = vld [vmem:[%s1 + $0x98] sm:$0xf]
  %v113 = vld [vmem:[%s1 + $0x9c] sm:$0xf]
  %v114 = vld [vmem:[%s1 + $0xa0] sm:$0xf]
  %v115 = vld [vmem:[%s1 + $0xa4] sm:$0xf]
  %v116 = vld [vmem:[%s1 + $0xa8] sm:$0xf]
  %v117 = vld [vmem:[%s1 + $0xac] sm:$0xf]
  %v118 = vld [vmem:[%s1 + $0xb0] sm:$0xf]
  %v119 = vld [vmem:[%s1 + $0xb4] sm:$0xf]
  %v120 = vld [vmem:[%s1 + $0xb8] sm:$0xf]
  %v121 = vld [vmem:[%s1 + $0xbc] sm:$0xf]
  %v122 = vld [vmem:[%s1 + $0xc0] sm:$0xf]
  %v123 = vld [vmem:[%s1 + $0xc4] sm:$0xf]
  %v124 = vld [vmem:[%s1 + $0xc8] sm:$0xf]
  %v125 = vld [vmem:[%s1 + $0xcc] sm:$0xf]
  %v126 = vld [vmem:[%s1 + $0xd0] sm:$0xf]
  %v127 = vld [vmem:[%s1 + $0xd4] sm:$0xf]
  %v128 = vld [vmem:[%s1 + $0xd8] sm:$0xf]
  %v129 = vld [vmem:[%s1 + $0xdc] sm:$0xf]
  %v130 = vld [vmem:[%s1 + $0xe0] sm:$0xf]
  %v131 = vld [vmem:[%s1 + $0xe4] sm:$0xf]
  %v132 = vld [vmem:[%s1 + $0xe8] sm:$0xf]
  %v133 = vld [vmem:[%s1 + $0xec] sm:$0xf]
  %v134 = vld [vmem:[%s1 + $0xf0] sm:$0xf]
  %v135 = vld [vmem:[%s1 + $0xf4] sm:$0xf]
  %v136 = vld [vmem:[%s1 + $0xf8] sm:$0xf]
  %v137 = vld [vmem:[%s1 + $0xfc] sm:$0xf]
  %v138 = vld [vmem:[%s1 + $0x100] sm:$0xf]
  %v139 = vld [vmem:[%s1 + $0x104] sm:$0xf]
  %v140 = vld [vmem:[%s1 + $0x108] sm:$0xf]
  %v141 = vld [vmem:[%s1 + $0x10c] sm:$0xf]
  %v142 = vld [vmem:[%s1 + $0x110] sm:$0xf]
  %v143 = vld [vmem:[%s1 + $0x114] sm:$0xf]
  %v144 = vld [vmem:[%s1 + $0x118] sm:$0xf]
  %v145 = vld [vmem:[%s1 + $0x11c] sm:$0xf]
  %v146 = vld [vmem:[%s1 + $0x120] sm:$0xf]
  %v147 = vld [vmem:[%s1 + $0x124] sm:$0xf]
  %v148 = vld [vmem:[%s1 + $0x128] sm:$0xf]
  %v149 = vld [vmem:[%s1 + $0x12c] sm:$0xf]
  %v150 = vld [vmem:[%s1 + $0x130] sm:$0xf]
  %v151 = vld [vmem:[%s1 + $0x134] sm:$0xf]
  %v152 = vld [vmem:[%s1 + $0x138] sm:$0xf]
  %v153 = vld [vmem:[%s1 + $0x13c] sm:$0xf]
  %v154 = vld [vmem:[%s1 + $0x140] sm:$0xf]
  %v155 = vld [vmem:[%s1 + $0x144] sm:$0xf]
  %v156 = vld [vmem:[%s1 + $0x148] sm:$0xf]
  %v157 = vld [vmem:[%s1 + $0x14c] sm:$0xf]
  %v158 = vld [vmem:[%s1 + $0x150] sm:$0xf]
  %v159 = vld [vmem:[%s1 + $0x154] sm:$0xf]
  %v160 = vld [vmem:[%s1 + $0x158] sm:$0xf]
  %v161 = vld [vmem:[%s1 + $0x15c] sm:$0xf]
  %v162 = vld [vmem:[%s1 + $0x160] sm:$0xf]
  %v163 = vld [vmem:[%s1 + $0x164] sm:$0xf]
  %v164 = vld [vmem:[%s1 + $0x168] sm:$0xf]
  %v165 = vld [vmem:[%s1 + $0x16c] sm:$0xf]
  %v166 = vld [vmem:[%s1 + $0x170] sm:$0xf]
  %v167 = vld [vmem:[%s1 + $0x174] sm:$0xf]
  %v168 = vld [vmem:[%s1 + $0x178] sm:$0xf]
  %v169 = vld [vmem:[%s1 + $0x17c] sm:$0xf]
  %v170 = vld [vmem:[%s1 + $0x180] sm:$0xf]
  %v171 = vld [vmem:[%s1 + $0x184] sm:$0xf]
  %v172 = vld [vmem:[%s1 + $0x188] sm:$0xf]
  %v173 = vld [vmem:[%s1 + $0x18c] sm:$0xf]
  %v174 = vld [vmem:[%s1 + $0x190] sm:$0xf]
  %v175 = vld [vmem:[%s1 + $0x194] sm:$0xf]
  %v176 = vld [vmem:[%s1 + $0x198] sm:$0xf]
  %v177 = vld [vmem:[%s1 + $0x19c] sm:$0xf]
  %v178 = vld [vmem:[%s1 + $0x1a0] sm:$0xf]
  %v179 = vld [vmem:[%s1 + $0x1a4] sm:$0xf]
  %v180 = vld [vmem:[%s1 + $0x1a8] sm:$0xf]
  %v181 = vld [vmem:[%s1 + $0x1ac] sm:$0xf]
  %v182 = vld [vmem:[%s1 + $0x1b0] sm:$0xf]
  %v183 = vld [vmem:[%s1 + $0x1b4] sm:$0xf]
  %v184 = vld [vmem:[%s1 + $0x1b8] sm:$0xf]
  %v185 = vld [vmem:[%s1 + $0x1bc] sm:$0xf]
  %v186 = vld [vmem:[%s1 + $0x1c0] sm:$0xf]
  %v187 = vld [vmem:[%s1 + $0x1c4] sm:$0xf]
  %v188 = vld [vmem:[%s1 + $0x1c8] sm:$0xf]
  %v189 = vld [vmem:[%s1 + $0x1cc] sm:$0xf]
  %v190 = vld [vmem:[%s1 + $0x1d0] sm:$0xf]
  %v191 = vld [vmem:[%s1 + $0x1d4] sm:$0xf]
  %v192 = vld [vmem:[%s1 + $0x1d8] sm:$0xf]
  %v193 = vld [vmem:[%s1 + $0x1dc] sm:$0xf]
  %v194 = vld [vmem:[%s1 + $0x1e0] sm:$0xf]
  %v195 = vld [vmem:[%s1 + $0x1e4] sm:$0xf]
  %v196 = vld [vmem:[%s1 + $0x1e8] sm:$0xf]
  %v197 = vld [vmem:[%s1 + $0x1ec] sm:$0xf]
  %v198 = vld [vmem:[%s1 + $0x1f0] sm:$0xf]
  %v199 = vld [vmem:[%s1 + $0x1f4] sm:$0xf]
  %v200 = vld [vmem:[%s1 + $0x1f8] sm:$0xf]
  %v201 = vld [vmem:[%s1 + $0x1fc] sm:$0xf]
  %v258 = vunpack.c.l.b16 %v18
  %v259 = vunpack.c.h.b16 %v18
  %v260 = vunpack.c.l.b16 %v19
  %v261 = vunpack.c.h.b16 %v19
  %v262 = vunpack.c.l.b16 %v20
  %v263 = vunpack.c.h.b16 %v20
  %v264 = vunpack.c.l.b16 %v21
  %v265 = vunpack.c.h.b16 %v21
  %v266 = vunpack.c.l.b16 %v22
  %v267 = vunpack.c.h.b16 %v22
  %v268 = vunpack.c.l.b16 %v23
  %v269 = vunpack.c.h.b16 %v23
  %v270 = vunpack.c.l.b16 %v24
  %v271 = vunpack.c.h.b16 %v24
  %v272 = vunpack.c.l.b16 %v25
  %v273 = vunpack.c.h.b16 %v25
  %v274 = vunpack.c.l.b16 %v26
  %v275 = vunpack.c.h.b16 %v26
  %v276 = vunpack.c.l.b16 %v27
  %v277 = vunpack.c.h.b16 %v27
  %v278 = vunpack.c.l.b16 %v28
  %v279 = vunpack.c.h.b16 %v28
  %v280 = vunpack.c.l.b16 %v29
  %v281 = vunpack.c.h.b16 %v29
  %v282 = vunpack.c.l.b16 %v30
  %v283 = vunpack.c.h.b16 %v30
  %v284 = vunpack.c.l.b16 %v31
  %v285 = vunpack.c.h.b16 %v31
  %v286 = vunpack.c.l.b16 %v32
  %v287 = vunpack.c.h.b16 %v32
  %v288 = vunpack.c.l.b16 %v33
  %v289 = vunpack.c.h.b16 %v33
  %v290 = vunpack.c.l.b16 %v34
  %v291 = vunpack.c.h.b16 %v34
  %v292 = vunpack.c.l.b16 %v35
  %v293 = vunpack.c.h.b16 %v35
  %v294 = vunpack.c.l.b16 %v36
  %v295 = vunpack.c.h.b16 %v36
  %v296 = vunpack.c.l.b16 %v37
  %v297 = vunpack.c.h.b16 %v37
  %v298 = vunpack.c.l.b16 %v38
  %v299 = vunpack.c.h.b16 %v38
  %v300 = vunpack.c.l.b16 %v39
  %v301 = vunpack.c.h.b16 %v39
  %v302 = vunpack.c.l.b16 %v40
  %v303 = vunpack.c.h.b16 %v40
  %v304 = vunpack.c.l.b16 %v41
  %v305 = vunpack.c.h.b16 %v41
  %v306 = vunpack.c.l.b16 %v42
  %v307 = vunpack.c.h.b16 %v42
  %v308 = vunpack.c.l.b16 %v43
  %v309 = vunpack.c.h.b16 %v43
  %v310 = vunpack.c.l.b16 %v44
  %v311 = vunpack.c.h.b16 %v44
  %v312 = vunpack.c.l.b16 %v45
  %v313 = vunpack.c.h.b16 %v45
  %v314 = vunpack.c.l.b16 %v46
  %v315 = vunpack.c.h.b16 %v46
  %v316 = vunpack.c.l.b16 %v47
  %v317 = vunpack.c.h.b16 %v47
  %v318 = vunpack.c.l.b16 %v48
  %v319 = vunpack.c.h.b16 %v48
  %v320 = vunpack.c.l.b16 %v49
  %v321 = vunpack.c.h.b16 %v49
  %v322 = vunpack.c.l.b16 %v50
  %v323 = vunpack.c.h.b16 %v50
  %v324 = vunpack.c.l.b16 %v51
  %v325 = vunpack.c.h.b16 %v51
  %v326 = vunpack.c.l.b16 %v52
  %v327 = vunpack.c.h.b16 %v52
  %v328 = vunpack.c.l.b16 %v53
  %v329 = vunpack.c.h.b16 %v53
  %v330 = vunpack.c.l.b16 %v54
  %v331 = vunpack.c.h.b16 %v54
  %v332 = vunpack.c.l.b16 %v55
  %v333 = vunpack.c.h.b16 %v55
  %v334 = vunpack.c.l.b16 %v56
  %v335 = vunpack.c.h.b16 %v56
  %v336 = vunpack.c.l.b16 %v57
  %v337 = vunpack.c.h.b16 %v57
  %v338 = vunpack.c.l.b16 %v58
  %v339 = vunpack.c.h.b16 %v58
  %v340 = vunpack.c.l.b16 %v59
  %v341 = vunpack.c.h.b16 %v59
  %v342 = vunpack.c.l.b16 %v60
  %v343 = vunpack.c.h.b16 %v60
  %v344 = vunpack.c.l.b16 %v61
  %v345 = vunpack.c.h.b16 %v61
  %v346 = vunpack.c.l.b16 %v62
  %v347 = vunpack.c.h.b16 %v62
  %v348 = vunpack.c.l.b16 %v63
  %v349 = vunpack.c.h.b16 %v63
  %v350 = vunpack.c.l.b16 %v64
  %v351 = vunpack.c.h.b16 %v64
  %v352 = vunpack.c.l.b16 %v65
  %v353 = vunpack.c.h.b16 %v65
  %v354 = vunpack.c.l.b16 %v66
  %v355 = vunpack.c.h.b16 %v66
  %v356 = vunpack.c.l.b16 %v67
  %v357 = vunpack.c.h.b16 %v67
  %v358 = vunpack.c.l.b16 %v68
  %v359 = vunpack.c.h.b16 %v68
  %v360 = vunpack.c.l.b16 %v69
  %v361 = vunpack.c.h.b16 %v69
  %v362 = vunpack.c.l.b16 %v70
  %v363 = vunpack.c.h.b16 %v70
  %v364 = vunpack.c.l.b16 %v71
  %v365 = vunpack.c.h.b16 %v71
  %v366 = vunpack.c.l.b16 %v72
  %v367 = vunpack.c.h.b16 %v72
  %v368 = vunpack.c.l.b16 %v73
  %v369 = vunpack.c.h.b16 %v73
  %v370 = vpack.c.b16 %v266, %v258
  %v371 = vpack.c.b16 %v267, %v259
  %v372 = vpack.c.b16 %v268, %v260
  %v373 = vpack.c.b16 %v269, %v261
  %v374 = vpack.c.b16 %v270, %v262
  %v375 = vpack.c.b16 %v271, %v263
  %v376 = vpack.c.b16 %v272, %v264
  %v377 = vpack.c.b16 %v273, %v265
  %v378 = vpack.c.b16 %v282, %v274
  %v379 = vpack.c.b16 %v283, %v275
  %v380 = vpack.c.b16 %v284, %v276
  %v381 = vpack.c.b16 %v285, %v277
  %v382 = vpack.c.b16 %v286, %v278
  %v383 = vpack.c.b16 %v287, %v279
  %v384 = vpack.c.b16 %v288, %v280
  %v385 = vpack.c.b16 %v289, %v281
  %v386 = vpack.c.b16 %v298, %v290
  %v387 = vpack.c.b16 %v299, %v291
  %v388 = vpack.c.b16 %v300, %v292
  %v389 = vpack.c.b16 %v301, %v293
  %v390 = vpack.c.b16 %v302, %v294
  %v391 = vpack.c.b16 %v303, %v295
  %v392 = vpack.c.b16 %v304, %v296
  %v393 = vpack.c.b16 %v305, %v297
  %v394 = vpack.c.b16 %v314, %v306
  %v395 = vpack.c.b16 %v315, %v307
  %v396 = vpack.c.b16 %v316, %v308
  %v397 = vpack.c.b16 %v317, %v309
  %v398 = vpack.c.b16 %v318, %v310
  %v399 = vpack.c.b16 %v319, %v311
  %v400 = vpack.c.b16 %v320, %v312
  %v401 = vpack.c.b16 %v321, %v313
  %v402 = vpack.c.b16 %v330, %v322
  %v403 = vpack.c.b16 %v331, %v323
  %v404 = vpack.c.b16 %v332, %v324
  %v405 = vpack.c.b16 %v333, %v325
  %v406 = vpack.c.b16 %v334, %v326
  %v407 = vpack.c.b16 %v335, %v327
  %v408 = vpack.c.b16 %v336, %v328
  %v409 = vpack.c.b16 %v337, %v329
  %v410 = vpack.c.b16 %v346, %v338
  %v411 = vpack.c.b16 %v347, %v339
  %v412 = vpack.c.b16 %v348, %v340
  %v413 = vpack.c.b16 %v349, %v341
  %v414 = vpack.c.b16 %v350, %v342
  %v415 = vpack.c.b16 %v351, %v343
  %v416 = vpack.c.b16 %v352, %v344
  %v417 = vpack.c.b16 %v353, %v345
  %v418 = vpack.c.b16 %v362, %v354
  %v419 = vpack.c.b16 %v363, %v355
  %v420 = vpack.c.b16 %v364, %v356
  %v421 = vpack.c.b16 %v365, %v357
  %v422 = vpack.c.b16 %v366, %v358
  %v423 = vpack.c.b16 %v367, %v359
  %v424 = vpack.c.b16 %v368, %v360
  %v425 = vpack.c.b16 %v369, %v361
  %v610 = vunpack.c.l.b16 %v74
  %v611 = vunpack.c.l.b16 %v75
  %v612 = vunpack.c.l.b16 %v76
  %v613 = vunpack.c.l.b16 %v77
  %v614 = vunpack.c.l.b16 %v78
  %v615 = vunpack.c.l.b16 %v79
  %v616 = vunpack.c.l.b16 %v80
  %v617 = vunpack.c.l.b16 %v81
  %v618 = vunpack.c.l.b16 %v82
  %v619 = vunpack.c.l.b16 %v83
  %v620 = vunpack.c.l.b16 %v84
  %v621 = vunpack.c.l.b16 %v85
  %v622 = vunpack.c.l.b16 %v86
  %v623 = vunpack.c.l.b16 %v87
  %v624 = vunpack.c.l.b16 %v88
  %v625 = vunpack.c.l.b16 %v89
  %v626 = vunpack.c.l.b16 %v90
  %v627 = vunpack.c.l.b16 %v91
  %v628 = vunpack.c.l.b16 %v92
  %v629 = vunpack.c.l.b16 %v93
  %v630 = vunpack.c.l.b16 %v94
  %v631 = vunpack.c.l.b16 %v95
  %v632 = vunpack.c.l.b16 %v96
  %v633 = vunpack.c.l.b16 %v97
  %v634 = vunpack.c.l.b16 %v98
  %v635 = vunpack.c.l.b16 %v99
  %v636 = vunpack.c.l.b16 %v100
  %v637 = vunpack.c.l.b16 %v101
  %v638 = vunpack.c.l.b16 %v102
  %v639 = vunpack.c.l.b16 %v103
  %v640 = vunpack.c.l.b16 %v104
  %v641 = vunpack.c.l.b16 %v105
  %v642 = vunpack.c.l.b16 %v106
  %v643 = vunpack.c.l.b16 %v107
  %v644 = vunpack.c.l.b16 %v108
  %v645 = vunpack.c.l.b16 %v109
  %v646 = vunpack.c.l.b16 %v110
  %v647 = vunpack.c.l.b16 %v111
  %v648 = vunpack.c.l.b16 %v112
  %v649 = vunpack.c.l.b16 %v113
  %v650 = vunpack.c.l.b16 %v114
  %v651 = vunpack.c.l.b16 %v115
  %v652 = vunpack.c.l.b16 %v116
  %v653 = vunpack.c.l.b16 %v117
  %v654 = vunpack.c.l.b16 %v118
  %v655 = vunpack.c.l.b16 %v119
  %v656 = vunpack.c.l.b16 %v120
  %v657 = vunpack.c.l.b16 %v121
  %v658 = vunpack.c.l.b16 %v122
  %v659 = vunpack.c.l.b16 %v123
  %v660 = vunpack.c.l.b16 %v124
  %v661 = vunpack.c.l.b16 %v125
  %v662 = vunpack.c.l.b16 %v126
  %v663 = vunpack.c.l.b16 %v127
  %v664 = vunpack.c.l.b16 %v128
  %v665 = vunpack.c.l.b16 %v129
  %v666 = vunpack.c.l.b16 %v130
  %v667 = vunpack.c.l.b16 %v131
  %v668 = vunpack.c.l.b16 %v132
  %v669 = vunpack.c.l.b16 %v133
  %v670 = vunpack.c.l.b16 %v134
  %v671 = vunpack.c.l.b16 %v135
  %v672 = vunpack.c.l.b16 %v136
  %v673 = vunpack.c.l.b16 %v137
  %v674 = vunpack.c.l.b16 %v138
  %v675 = vunpack.c.l.b16 %v139
  %v676 = vunpack.c.l.b16 %v140
  %v677 = vunpack.c.l.b16 %v141
  %v678 = vunpack.c.l.b16 %v142
  %v679 = vunpack.c.l.b16 %v143
  %v680 = vunpack.c.l.b16 %v144
  %v681 = vunpack.c.l.b16 %v145
  %v682 = vunpack.c.l.b16 %v146
  %v683 = vunpack.c.l.b16 %v147
  %v684 = vunpack.c.l.b16 %v148
  %v685 = vunpack.c.l.b16 %v149
  %v686 = vunpack.c.l.b16 %v150
  %v687 = vunpack.c.l.b16 %v151
  %v688 = vunpack.c.l.b16 %v152
  %v689 = vunpack.c.l.b16 %v153
  %v690 = vunpack.c.l.b16 %v154
  %v691 = vunpack.c.l.b16 %v155
  %v692 = vunpack.c.l.b16 %v156
  %v693 = vunpack.c.l.b16 %v157
  %v694 = vunpack.c.l.b16 %v158
  %v695 = vunpack.c.l.b16 %v159
  %v696 = vunpack.c.l.b16 %v160
  %v697 = vunpack.c.l.b16 %v161
  %v698 = vunpack.c.l.b16 %v162
  %v699 = vunpack.c.l.b16 %v163
  %v700 = vunpack.c.l.b16 %v164
  %v701 = vunpack.c.l.b16 %v165
  %v702 = vunpack.c.l.b16 %v166
  %v703 = vunpack.c.l.b16 %v167
  %v704 = vunpack.c.l.b16 %v168
  %v705 = vunpack.c.l.b16 %v169
  %v706 = vunpack.c.l.b16 %v170
  %v707 = vunpack.c.l.b16 %v171
  %v708 = vunpack.c.l.b16 %v172
  %v709 = vunpack.c.l.b16 %v173
  %v710 = vunpack.c.l.b16 %v174
  %v711 = vunpack.c.l.b16 %v175
  %v712 = vunpack.c.l.b16 %v176
  %v713 = vunpack.c.l.b16 %v177
  %v714 = vunpack.c.l.b16 %v178
  %v715 = vunpack.c.l.b16 %v179
  %v716 = vunpack.c.l.b16 %v180
  %v717 = vunpack.c.l.b16 %v181
  %v718 = vunpack.c.l.b16 %v182
  %v719 = vunpack.c.l.b16 %v183
  %v720 = vunpack.c.l.b16 %v184
  %v721 = vunpack.c.l.b16 %v185
  %v722 = vunpack.c.l.b16 %v186
  %v723 = vunpack.c.l.b16 %v187
  %v724 = vunpack.c.l.b16 %v188
  %v725 = vunpack.c.l.b16 %v189
  %v726 = vunpack.c.l.b16 %v190
  %v727 = vunpack.c.l.b16 %v191
  %v728 = vunpack.c.l.b16 %v192
  %v729 = vunpack.c.l.b16 %v193
  %v730 = vunpack.c.l.b16 %v194
  %v731 = vunpack.c.l.b16 %v195
  %v732 = vunpack.c.l.b16 %v196
  %v733 = vunpack.c.l.b16 %v197
  %v734 = vunpack.c.l.b16 %v198
  %v735 = vunpack.c.l.b16 %v199
  %v736 = vunpack.c.l.b16 %v200
  %v737 = vunpack.c.l.b16 %v201
  %v738 = vpack.c.b16 %v611, %v610
  %v739 = vpack.c.b16 %v613, %v612
  %v740 = vpack.c.b16 %v615, %v614
  %v741 = vpack.c.b16 %v617, %v616
  %v742 = vpack.c.b16 %v619, %v618
  %v743 = vpack.c.b16 %v621, %v620
  %v744 = vpack.c.b16 %v623, %v622
  %v745 = vpack.c.b16 %v625, %v624
  %v746 = vpack.c.b16 %v627, %v626
  %v747 = vpack.c.b16 %v629, %v628
  %v748 = vpack.c.b16 %v631, %v630
  %v749 = vpack.c.b16 %v633, %v632
  %v750 = vpack.c.b16 %v635, %v634
  %v751 = vpack.c.b16 %v637, %v636
  %v752 = vpack.c.b16 %v639, %v638
  %v753 = vpack.c.b16 %v641, %v640
  %v754 = vpack.c.b16 %v643, %v642
  %v755 = vpack.c.b16 %v645, %v644
  %v756 = vpack.c.b16 %v647, %v646
  %v757 = vpack.c.b16 %v649, %v648
  %v758 = vpack.c.b16 %v651, %v650
  %v759 = vpack.c.b16 %v653, %v652
  %v760 = vpack.c.b16 %v655, %v654
  %v761 = vpack.c.b16 %v657, %v656
  %v762 = vpack.c.b16 %v659, %v658
  %v763 = vpack.c.b16 %v661, %v660
  %v764 = vpack.c.b16 %v663, %v662
  %v765 = vpack.c.b16 %v665, %v664
  %v766 = vpack.c.b16 %v667, %v666
  %v767 = vpack.c.b16 %v669, %v668
  %v768 = vpack.c.b16 %v671, %v670
  %v769 = vpack.c.b16 %v673, %v672
  %v770 = vpack.c.b16 %v675, %v674
  %v771 = vpack.c.b16 %v677, %v676
  %v772 = vpack.c.b16 %v679, %v678
  %v773 = vpack.c.b16 %v681, %v680
  %v774 = vpack.c.b16 %v683, %v682
  %v775 = vpack.c.b16 %v685, %v684
  %v776 = vpack.c.b16 %v687, %v686
  %v777 = vpack.c.b16 %v689, %v688
  %v778 = vpack.c.b16 %v691, %v690
  %v779 = vpack.c.b16 %v693, %v692
  %v780 = vpack.c.b16 %v695, %v694
  %v781 = vpack.c.b16 %v697, %v696
  %v782 = vpack.c.b16 %v699, %v698
  %v783 = vpack.c.b16 %v701, %v700
  %v784 = vpack.c.b16 %v703, %v702
  %v785 = vpack.c.b16 %v705, %v704
  %v786 = vpack.c.b16 %v707, %v706
  %v787 = vpack.c.b16 %v709, %v708
  %v788 = vpack.c.b16 %v711, %v710
  %v789 = vpack.c.b16 %v713, %v712
  %v790 = vpack.c.b16 %v715, %v714
  %v791 = vpack.c.b16 %v717, %v716
  %v792 = vpack.c.b16 %v719, %v718
  %v793 = vpack.c.b16 %v721, %v720
  %v794 = vpack.c.b16 %v723, %v722
  %v795 = vpack.c.b16 %v725, %v724
  %v796 = vpack.c.b16 %v727, %v726
  %v797 = vpack.c.b16 %v729, %v728
  %v798 = vpack.c.b16 %v731, %v730
  %v799 = vpack.c.b16 %v733, %v732
  %v800 = vpack.c.b16 %v735, %v734
  %v801 = vpack.c.b16 %v737, %v736
  %866 = vmatprep.subr.bf16.mxu0 0
  %867 = vmatpush1.bf16.msra.mxu0 %v745
  %868 = vmatprep.subr.bf16.mxu0 0
  %869 = vmatpush1.bf16.msra.mxu0 %v744
  %870 = vmatprep.subr.bf16.mxu0 0
  %871 = vmatpush1.bf16.msra.mxu0 %v743
  %872 = vmatprep.subr.bf16.mxu0 0
  %873 = vmatpush1.bf16.msra.mxu0 %v742
  %874 = vmatprep.subr.bf16.mxu0 0
  %875 = vmatpush1.bf16.msra.mxu0 %v741
  %876 = vmatprep.subr.bf16.mxu0 0
  %877 = vmatpush1.bf16.msra.mxu0 %v740
  %878 = vmatprep.subr.bf16.mxu0 0
  %879 = vmatpush1.bf16.msra.mxu0 %v739
  %880 = vmatprep.subr.bf16.mxu0 0
  %881 = vmatpush1.bf16.msra.mxu0 %v738
  %882 = vmatprep.subr.bf16.mxu0 0
  %883 = vmatpush2.bf16.msra.mxu0 %v753
  %884 = vmatprep.subr.bf16.mxu0 0
  %885 = vmatpush2.bf16.msra.mxu0 %v752
  %886 = vmatprep.subr.bf16.mxu0 0
  %887 = vmatpush2.bf16.msra.mxu0 %v751
  %888 = vmatprep.subr.bf16.mxu0 0
  %889 = vmatpush2.bf16.msra.mxu0 %v750
  %890 = vmatprep.subr.bf16.mxu0 0
  %891 = vmatpush2.bf16.msra.mxu0 %v749
  %892 = vmatprep.subr.bf16.mxu0 0
  %893 = vmatpush2.bf16.msra.mxu0 %v748
  %894 = vmatprep.subr.bf16.mxu0 0
  %895 = vmatpush2.bf16.msra.mxu0 %v747
  %896 = vmatprep.subr.bf16.mxu0 0
  %897 = vmatpush2.bf16.msra.mxu0 %v746
  %898 = vmatprep.mubr.bf16.mxu0 %v371
  %899 = vmatmul.mubr.bf16.gmra.mxu0 %v370
  %v900 = vpop.f32.mrf.mxu0
  %v901 = vadd.f32 0.0, %v900
  %v902 = vpop.f32.mrf.mxu0
  %v903 = vpop.f32.mrf.mxu0
  %v904 = vadd.f32 0.0, %v903
  %v905 = vpop.f32.mrf.mxu0
  %906 = vmatprep.mubr.bf16.mxu0 %v379
  %907 = vmatmul.mubr.bf16.gmra.mxu0 %v378
  %v908 = vpop.f32.mrf.mxu0
  %v909 = vadd.f32 0.0, %v908
  %v910 = vpop.f32.mrf.mxu0
  %v911 = vpop.f32.mrf.mxu0
  %v912 = vadd.f32 0.0, %v911
  %v913 = vpop.f32.mrf.mxu0
  %914 = vmatprep.mubr.bf16.mxu0 %v387
  %915 = vmatmul.mubr.bf16.gmra.mxu0 %v386
  %v916 = vpop.f32.mrf.mxu0
  %v917 = vadd.f32 0.0, %v916
  %v918 = vpop.f32.mrf.mxu0
  %v919 = vpop.f32.mrf.mxu0
  %v920 = vadd.f32 0.0, %v919
  %v921 = vpop.f32.mrf.mxu0
  %922 = vmatprep.mubr.bf16.mxu0 %v395
  %923 = vmatmul.mubr.bf16.gmra.mxu0 %v394
  %v924 = vpop.f32.mrf.mxu0
  %v925 = vadd.f32 0.0, %v924
  %v926 = vpop.f32.mrf.mxu0
  %v927 = vpop.f32.mrf.mxu0
  %v928 = vadd.f32 0.0, %v927
  %v929 = vpop.f32.mrf.mxu0
  %930 = vmatprep.mubr.bf16.mxu0 %v403
  %931 = vmatmul.mubr.bf16.gmra.mxu0 %v402
  %v932 = vpop.f32.mrf.mxu0
  %v933 = vadd.f32 0.0, %v932
  %v934 = vpop.f32.mrf.mxu0
  %v935 = vpop.f32.mrf.mxu0
  %v936 = vadd.f32 0.0, %v935
  %v937 = vpop.f32.mrf.mxu0
  %938 = vmatprep.mubr.bf16.mxu0 %v411
  %939 = vmatmul.mubr.bf16.gmra.mxu0 %v410
  %v940 = vpop.f32.mrf.mxu0
  %v941 = vadd.f32 0.0, %v940
  %v942 = vpop.f32.mrf.mxu0
  %v943 = vpop.f32.mrf.mxu0
  %v944 = vadd.f32 0.0, %v943
  %v945 = vpop.f32.mrf.mxu0
  %946 = vmatprep.mubr.bf16.mxu0 %v419
  %947 = vmatmul.mubr.bf16.gmra.mxu0 %v418
  %v948 = vpop.f32.mrf.mxu0
  %v949 = vadd.f32 0.0, %v948
  %v950 = vpop.f32.mrf.mxu0
  %v951 = vpop.f32.mrf.mxu0
  %v952 = vadd.f32 0.0, %v951
  %v953 = vpop.f32.mrf.mxu0
  %954 = vdwg.mxu0
  %955 = vmatprep.subr.bf16.mxu0 0
  %956 = vmatpush1.bf16.msra.mxu0 %v761
  %957 = vmatprep.subr.bf16.mxu0 0
  %958 = vmatpush1.bf16.msra.mxu0 %v760
  %959 = vmatprep.subr.bf16.mxu0 0
  %960 = vmatpush1.bf16.msra.mxu0 %v759
  %961 = vmatprep.subr.bf16.mxu0 0
  %962 = vmatpush1.bf16.msra.mxu0 %v758
  %963 = vmatprep.subr.bf16.mxu0 0
  %964 = vmatpush1.bf16.msra.mxu0 %v757
  %965 = vmatprep.subr.bf16.mxu0 0
  %966 = vmatpush1.bf16.msra.mxu0 %v756
  %967 = vmatprep.subr.bf16.mxu0 0
  %968 = vmatpush1.bf16.msra.mxu0 %v755
  %969 = vmatprep.subr.bf16.mxu0 0
  %970 = vmatpush1.bf16.msra.mxu0 %v754
  %971 = vmatprep.subr.bf16.mxu0 0
  %972 = vmatpush2.bf16.msra.mxu0 %v769
  %973 = vmatprep.subr.bf16.mxu0 0
  %974 = vmatpush2.bf16.msra.mxu0 %v768
  %975 = vmatprep.subr.bf16.mxu0 0
  %976 = vmatpush2.bf16.msra.mxu0 %v767
  %977 = vmatprep.subr.bf16.mxu0 0
  %978 = vmatpush2.bf16.msra.mxu0 %v766
  %979 = vmatprep.subr.bf16.mxu0 0
  %980 = vmatpush2.bf16.msra.mxu0 %v765
  %981 = vmatprep.subr.bf16.mxu0 0
  %982 = vmatpush2.bf16.msra.mxu0 %v764
  %983 = vmatprep.subr.bf16.mxu0 0
  %984 = vmatpush2.bf16.msra.mxu0 %v763
  %985 = vmatprep.subr.bf16.mxu0 0
  %986 = vmatpush2.bf16.msra.mxu0 %v762
  %987 = vmatprep.mubr.bf16.mxu0 %v373
  %988 = vmatmul.mubr.bf16.gmra.mxu0 %v372
  %v989 = vpop.f32.mrf.mxu0
  %v990 = vadd.f32 %v901, %v989
  %v991 = vpop.f32.mrf.mxu0
  %v992 = vpop.f32.mrf.mxu0
  %v993 = vadd.f32 %v904, %v992
  %v994 = vpop.f32.mrf.mxu0
  %995 = vmatprep.mubr.bf16.mxu0 %v381
  %996 = vmatmul.mubr.bf16.gmra.mxu0 %v380
  %v997 = vpop.f32.mrf.mxu0
  %v998 = vadd.f32 %v909, %v997
  %v999 = vpop.f32.mrf.mxu0
  %v1000 = vpop.f32.mrf.mxu0
  %v1001 = vadd.f32 %v912, %v1000
  %v1002 = vpop.f32.mrf.mxu0
  %1003 = vmatprep.mubr.bf16.mxu0 %v389
  %1004 = vmatmul.mubr.bf16.gmra.mxu0 %v388
  %v1005 = vpop.f32.mrf.mxu0
  %v1006 = vadd.f32 %v917, %v1005
  %v1007 = vpop.f32.mrf.mxu0
  %v1008 = vpop.f32.mrf.mxu0
  %v1009 = vadd.f32 %v920, %v1008
  %v1010 = vpop.f32.mrf.mxu0
  %1011 = vmatprep.mubr.bf16.mxu0 %v397
  %1012 = vmatmul.mubr.bf16.gmra.mxu0 %v396
  %v1013 = vpop.f32.mrf.mxu0
  %v1014 = vadd.f32 %v925, %v1013
  %v1015 = vpop.f32.mrf.mxu0
  %v1016 = vpop.f32.mrf.mxu0
  %v1017 = vadd.f32 %v928, %v1016
  %v1018 = vpop.f32.mrf.mxu0
  %1019 = vmatprep.mubr.bf16.mxu0 %v405
  %1020 = vmatmul.mubr.bf16.gmra.mxu0 %v404
  %v1021 = vpop.f32.mrf.mxu0
  %v1022 = vadd.f32 %v933, %v1021
  %v1023 = vpop.f32.mrf.mxu0
  %v1024 = vpop.f32.mrf.mxu0
  %v1025 = vadd.f32 %v936, %v1024
  %v1026 = vpop.f32.mrf.mxu0
  %1027 = vmatprep.mubr.bf16.mxu0 %v413
  %1028 = vmatmul.mubr.bf16.gmra.mxu0 %v412
  %v1029 = vpop.f32.mrf.mxu0
  %v1030 = vadd.f32 %v941, %v1029
  %v1031 = vpop.f32.mrf.mxu0
  %v1032 = vpop.f32.mrf.mxu0
  %v1033 = vadd.f32 %v944, %v1032
  %v1034 = vpop.f32.mrf.mxu0
  %1035 = vmatprep.mubr.bf16.mxu0 %v421
  %1036 = vmatmul.mubr.bf16.gmra.mxu0 %v420
  %v1037 = vpop.f32.mrf.mxu0
  %v1038 = vadd.f32 %v949, %v1037
  %v1039 = vpop.f32.mrf.mxu0
  %v1040 = vpop.f32.mrf.mxu0
  %v1041 = vadd.f32 %v952, %v1040
  %v1042 = vpop.f32.mrf.mxu0
  %1043 = vdwg.mxu0
  %1044 = vmatprep.subr.bf16.mxu0 0
  %1045 = vmatpush1.bf16.msra.mxu0 %v777
  %1046 = vmatprep.subr.bf16.mxu0 0
  %1047 = vmatpush1.bf16.msra.mxu0 %v776
  %1048 = vmatprep.subr.bf16.mxu0 0
  %1049 = vmatpush1.bf16.msra.mxu0 %v775
  %1050 = vmatprep.subr.bf16.mxu0 0
  %1051 = vmatpush1.bf16.msra.mxu0 %v774
  %1052 = vmatprep.subr.bf16.mxu0 0
  %1053 = vmatpush1.bf16.msra.mxu0 %v773
  %1054 = vmatprep.subr.bf16.mxu0 0
  %1055 = vmatpush1.bf16.msra.mxu0 %v772
  %1056 = vmatprep.subr.bf16.mxu0 0
  %1057 = vmatpush1.bf16.msra.mxu0 %v771
  %1058 = vmatprep.subr.bf16.mxu0 0
  %1059 = vmatpush1.bf16.msra.mxu0 %v770
  %1060 = vmatprep.subr.bf16.mxu0 0
  %1061 = vmatpush2.bf16.msra.mxu0 %v785
  %1062 = vmatprep.subr.bf16.mxu0 0
  %1063 = vmatpush2.bf16.msra.mxu0 %v784
  %1064 = vmatprep.subr.bf16.mxu0 0
  %1065 = vmatpush2.bf16.msra.mxu0 %v783
  %1066 = vmatprep.subr.bf16.mxu0 0
  %1067 = vmatpush2.bf16.msra.mxu0 %v782
  %1068 = vmatprep.subr.bf16.mxu0 0
  %1069 = vmatpush2.bf16.msra.mxu0 %v781
  %1070 = vmatprep.subr.bf16.mxu0 0
  %1071 = vmatpush2.bf16.msra.mxu0 %v780
  %1072 = vmatprep.subr.bf16.mxu0 0
  %1073 = vmatpush2.bf16.msra.mxu0 %v779
  %1074 = vmatprep.subr.bf16.mxu0 0
  %1075 = vmatpush2.bf16.msra.mxu0 %v778
  %1076 = vmatprep.mubr.bf16.mxu0 %v375
  %1077 = vmatmul.mubr.bf16.gmra.mxu0 %v374
  %v1078 = vpop.f32.mrf.mxu0
  %v1079 = vadd.f32 %v990, %v1078
  %v1080 = vpop.f32.mrf.mxu0
  %v1081 = vpop.f32.mrf.mxu0
  %v1082 = vadd.f32 %v993, %v1081
  %v1083 = vpop.f32.mrf.mxu0
  %1084 = vmatprep.mubr.bf16.mxu0 %v383
  %1085 = vmatmul.mubr.bf16.gmra.mxu0 %v382
  %v1086 = vpop.f32.mrf.mxu0
  %v1087 = vadd.f32 %v998, %v1086
  %v1088 = vpop.f32.mrf.mxu0
  %v1089 = vpop.f32.mrf.mxu0
  %v1090 = vadd.f32 %v1001, %v1089
  %v1091 = vpop.f32.mrf.mxu0
  %1092 = vmatprep.mubr.bf16.mxu0 %v391
  %1093 = vmatmul.mubr.bf16.gmra.mxu0 %v390
  %v1094 = vpop.f32.mrf.mxu0
  %v1095 = vadd.f32 %v1006, %v1094
  %v1096 = vpop.f32.mrf.mxu0
  %v1097 = vpop.f32.mrf.mxu0
  %v1098 = vadd.f32 %v1009, %v1097
  %v1099 = vpop.f32.mrf.mxu0
  %1100 = vmatprep.mubr.bf16.mxu0 %v399
  %1101 = vmatmul.mubr.bf16.gmra.mxu0 %v398
  %v1102 = vpop.f32.mrf.mxu0
  %v1103 = vadd.f32 %v1014, %v1102
  %v1104 = vpop.f32.mrf.mxu0
  %v1105 = vpop.f32.mrf.mxu0
  %v1106 = vadd.f32 %v1017, %v1105
  %v1107 = vpop.f32.mrf.mxu0
  %1108 = vmatprep.mubr.bf16.mxu0 %v407
  %1109 = vmatmul.mubr.bf16.gmra.mxu0 %v406
  %v1110 = vpop.f32.mrf.mxu0
  %v1111 = vadd.f32 %v1022, %v1110
  %v1112 = vpop.f32.mrf.mxu0
  %v1113 = vpop.f32.mrf.mxu0
  %v1114 = vadd.f32 %v1025, %v1113
  %v1115 = vpop.f32.mrf.mxu0
  %1116 = vmatprep.mubr.bf16.mxu0 %v415
  %1117 = vmatmul.mubr.bf16.gmra.mxu0 %v414
  %v1118 = vpop.f32.mrf.mxu0
  %v1119 = vadd.f32 %v1030, %v1118
  %v1120 = vpop.f32.mrf.mxu0
  %v1121 = vpop.f32.mrf.mxu0
  %v1122 = vadd.f32 %v1033, %v1121
  %v1123 = vpop.f32.mrf.mxu0
  %1124 = vmatprep.mubr.bf16.mxu0 %v423
  %1125 = vmatmul.mubr.bf16.gmra.mxu0 %v422
  %v1126 = vpop.f32.mrf.mxu0
  %v1127 = vadd.f32 %v1038, %v1126
  %v1128 = vpop.f32.mrf.mxu0
  %v1129 = vpop.f32.mrf.mxu0
  %v1130 = vadd.f32 %v1041, %v1129
  %v1131 = vpop.f32.mrf.mxu0
  %1132 = vdwg.mxu0
  %1133 = vmatprep.subr.bf16.mxu0 0
  %1134 = vmatpush1.bf16.msra.mxu0 %v793
  %1135 = vmatprep.subr.bf16.mxu0 0
  %1136 = vmatpush1.bf16.msra.mxu0 %v792
  %1137 = vmatprep.subr.bf16.mxu0 0
  %1138 = vmatpush1.bf16.msra.mxu0 %v791
  %1139 = vmatprep.subr.bf16.mxu0 0
  %1140 = vmatpush1.bf16.msra.mxu0 %v790
  %1141 = vmatprep.subr.bf16.mxu0 0
  %1142 = vmatpush1.bf16.msra.mxu0 %v789
  %1143 = vmatprep.subr.bf16.mxu0 0
  %1144 = vmatpush1.bf16.msra.mxu0 %v788
  %1145 = vmatprep.subr.bf16.mxu0 0
  %1146 = vmatpush1.bf16.msra.mxu0 %v787
  %1147 = vmatprep.subr.bf16.mxu0 0
  %1148 = vmatpush1.bf16.msra.mxu0 %v786
  %1149 = vmatprep.subr.bf16.mxu0 0
  %1150 = vmatpush2.bf16.msra.mxu0 %v801
  %1151 = vmatprep.subr.bf16.mxu0 0
  %1152 = vmatpush2.bf16.msra.mxu0 %v800
  %1153 = vmatprep.subr.bf16.mxu0 0
  %1154 = vmatpush2.bf16.msra.mxu0 %v799
  %1155 = vmatprep.subr.bf16.mxu0 0
  %1156 = vmatpush2.bf16.msra.mxu0 %v798
  %1157 = vmatprep.subr.bf16.mxu0 0
  %1158 = vmatpush2.bf16.msra.mxu0 %v797
  %1159 = vmatprep.subr.bf16.mxu0 0
  %1160 = vmatpush2.bf16.msra.mxu0 %v796
  %1161 = vmatprep.subr.bf16.mxu0 0
  %1162 = vmatpush2.bf16.msra.mxu0 %v795
  %1163 = vmatprep.subr.bf16.mxu0 0
  %1164 = vmatpush2.bf16.msra.mxu0 %v794
  %1165 = vmatprep.mubr.bf16.mxu0 %v377
  %1166 = vmatmul.mubr.bf16.gmra.mxu0 %v376
  %v1167 = vpop.f32.mrf.mxu0
  %v1168 = vadd.f32 %v1079, %v1167
  %v1169 = vpop.f32.mrf.mxu0
  %v1170 = vpop.f32.mrf.mxu0
  %v1171 = vadd.f32 %v1082, %v1170
  %v1172 = vpop.f32.mrf.mxu0
  %1173 = vmatprep.mubr.bf16.mxu0 %v385
  %1174 = vmatmul.mubr.bf16.gmra.mxu0 %v384
  %v1175 = vpop.f32.mrf.mxu0
  %v1176 = vadd.f32 %v1087, %v1175
  %v1177 = vpop.f32.mrf.mxu0
  %v1178 = vpop.f32.mrf.mxu0
  %v1179 = vadd.f32 %v1090, %v1178
  %v1180 = vpop.f32.mrf.mxu0
  %1181 = vmatprep.mubr.bf16.mxu0 %v393
  %1182 = vmatmul.mubr.bf16.gmra.mxu0 %v392
  %v1183 = vpop.f32.mrf.mxu0
  %v1184 = vadd.f32 %v1095, %v1183
  %v1185 = vpop.f32.mrf.mxu0
  %v1186 = vpop.f32.mrf.mxu0
  %v1187 = vadd.f32 %v1098, %v1186
  %v1188 = vpop.f32.mrf.mxu0
  %1189 = vmatprep.mubr.bf16.mxu0 %v401
  %1190 = vmatmul.mubr.bf16.gmra.mxu0 %v400
  %v1191 = vpop.f32.mrf.mxu0
  %v1192 = vadd.f32 %v1103, %v1191
  %v1193 = vpop.f32.mrf.mxu0
  %v1194 = vpop.f32.mrf.mxu0
  %v1195 = vadd.f32 %v1106, %v1194
  %v1196 = vpop.f32.mrf.mxu0
  %1197 = vmatprep.mubr.bf16.mxu0 %v409
  %1198 = vmatmul.mubr.bf16.gmra.mxu0 %v408
  %v1199 = vpop.f32.mrf.mxu0
  %v1200 = vadd.f32 %v1111, %v1199
  %v1201 = vpop.f32.mrf.mxu0
  %v1202 = vpop.f32.mrf.mxu0
  %v1203 = vadd.f32 %v1114, %v1202
  %v1204 = vpop.f32.mrf.mxu0
  %1205 = vmatprep.mubr.bf16.mxu0 %v417
  %1206 = vmatmul.mubr.bf16.gmra.mxu0 %v416
  %v1207 = vpop.f32.mrf.mxu0
  %v1208 = vadd.f32 %v1119, %v1207
  %v1209 = vpop.f32.mrf.mxu0
  %v1210 = vpop.f32.mrf.mxu0
  %v1211 = vadd.f32 %v1122, %v1210
  %v1212 = vpop.f32.mrf.mxu0
  %1213 = vmatprep.mubr.bf16.mxu0 %v425
  %1214 = vmatmul.mubr.bf16.gmra.mxu0 %v424
  %v1215 = vpop.f32.mrf.mxu0
  %v1216 = vadd.f32 %v1127, %v1215
  %v1217 = vpop.f32.mrf.mxu0
  %v1218 = vpop.f32.mrf.mxu0
  %v1219 = vadd.f32 %v1130, %v1218
  %v1220 = vpop.f32.mrf.mxu0
  %1221 = vdwg.mxu0
  %v1222 = vadd.f32 %v1168, %v1171
  %v1223 = vadd.f32 %v1222, %v1176
  %v1224 = vadd.f32 %v1223, %v1179
  %v1225 = vadd.f32 %v1224, %v1184
  %v1226 = vadd.f32 %v1225, %v1187
  %v1227 = vadd.f32 %v1226, %v1192
  %v1228 = vadd.f32 %v1227, %v1195
  %v1229 = vadd.f32 %v1228, %v1200
  %v1230 = vadd.f32 %v1229, %v1203
  %v1231 = vadd.f32 %v1230, %v1208
  %v1232 = vadd.f32 %v1231, %v1211
  %v1233 = vadd.f32 %v1232, %v1216
  %v1234 = vadd.f32 %v1233, %v1219
  %v1235 = vrot.slane %v1234, 4
  %v1236 = vadd.f32 %v1234, %v1235
  %v1237 = vrot.slane %v1236, 2
  %v1238 = vadd.f32 %v1236, %v1237
  %v1239 = vrot.slane %v1238, 1
  %v1240 = vadd.f32 %v1238, %v1239
  %v1241 = vmul.f32 %v1240, 0.010204081
  %v1242 = vmul.f32 %v1168, %v1168
  %v1243 = vmul.f32 %v1171, %v1171
  %v1244 = vmul.f32 %v1176, %v1176
  %v1245 = vmul.f32 %v1179, %v1179
  %v1246 = vmul.f32 %v1184, %v1184
  %v1247 = vmul.f32 %v1187, %v1187
  %v1248 = vmul.f32 %v1192, %v1192
  %v1249 = vmul.f32 %v1195, %v1195
  %v1250 = vmul.f32 %v1200, %v1200
  %v1251 = vmul.f32 %v1203, %v1203
  %v1252 = vmul.f32 %v1208, %v1208
  %v1253 = vmul.f32 %v1211, %v1211
  %v1254 = vmul.f32 %v1216, %v1216
  %v1255 = vmul.f32 %v1219, %v1219
  %v1256 = vadd.f32 %v1242, %v1243
  %v1257 = vadd.f32 %v1256, %v1244
  %v1258 = vadd.f32 %v1257, %v1245
  %v1259 = vadd.f32 %v1258, %v1246
  %v1260 = vadd.f32 %v1259, %v1247
  %v1261 = vadd.f32 %v1260, %v1248
  %v1262 = vadd.f32 %v1261, %v1249
  %v1263 = vadd.f32 %v1262, %v1250
  %v1264 = vadd.f32 %v1263, %v1251
  %v1265 = vadd.f32 %v1264, %v1252
  %v1266 = vadd.f32 %v1265, %v1253
  %v1267 = vadd.f32 %v1266, %v1254
  %v1268 = vadd.f32 %v1267, %v1255
  %v1269 = vrot.slane %v1268, 4
  %v1270 = vadd.f32 %v1268, %v1269
  %v1271 = vrot.slane %v1270, 2
  %v1272 = vadd.f32 %v1270, %v1271
  %v1273 = vrot.slane %v1272, 1
  %v1274 = vadd.f32 %v1272, %v1273
  %v1275 = vmul.f32 %v1274, 0.010204081
  %v1276 = vmul.f32 %v1241, %v1241
  %v1277 = vsub.f32 %v1275, %v1276
  %v1278 = vld [vmem:[%s2] sm:$0x1]
  %v1279 = vadd.f32 %v1277, 1e-05
  %v1280 = vrsqrt.pop %v1279
  %v1281 = vmul.f32 %v1278, %v1280
  %v1282 = vld [vmem:[%s3] sm:$0x1]
  %v1283 = vmul.f32 %v1241, %v1281
  %v1284 = vsub.f32 %v1282, %v1283
  %v1286 = vlaneseq
  %v1287 = vshrl.u32 %v1286, 7
  %v1288 = vsub.s32 0, %v1287
  %v1289 = vrot.slane %v1281, %v1288
  %v1291 = vmul.f32 %v1168, %v1289
  %v1292 = vmul.f32 %v1171, %v1289
  %v1293 = vmul.f32 %v1176, %v1289
  %v1294 = vmul.f32 %v1179, %v1289
  %v1295 = vmul.f32 %v1184, %v1289
  %v1296 = vmul.f32 %v1187, %v1289
  %v1297 = vmul.f32 %v1192, %v1289
  %v1298 = vmul.f32 %v1195, %v1289
  %v1299 = vmul.f32 %v1200, %v1289
  %v1300 = vmul.f32 %v1203, %v1289
  %v1301 = vmul.f32 %v1208, %v1289
  %v1302 = vmul.f32 %v1211, %v1289
  %v1303 = vmul.f32 %v1216, %v1289
  %v1304 = vmul.f32 %v1219, %v1289
  %v1306 = vlaneseq
  %v1307 = vshrl.u32 %v1306, 7
  %v1308 = vsub.s32 0, %v1307
  %v1309 = vrot.slane %v1284, %v1308
  %v1311 = vadd.f32 %v1291, %v1309
  %v1312 = vadd.f32 %v1292, %v1309
  %v1313 = vadd.f32 %v1293, %v1309
  %v1314 = vadd.f32 %v1294, %v1309
  %v1315 = vadd.f32 %v1295, %v1309
  %v1316 = vadd.f32 %v1296, %v1309
  %v1317 = vadd.f32 %v1297, %v1309
  %v1318 = vadd.f32 %v1298, %v1309
  %v1319 = vadd.f32 %v1299, %v1309
  %v1320 = vadd.f32 %v1300, %v1309
  %v1321 = vadd.f32 %v1301, %v1309
  %v1322 = vadd.f32 %v1302, %v1309
  %v1323 = vadd.f32 %v1303, %v1309
  %v1324 = vadd.f32 %v1304, %v1309
  %vm1325 = vcmp.ge.f32.partialorder %v1311, 0.0
  %vm1326 = vcmp.ge.f32.partialorder %v1312, 0.0
  %vm1327 = vcmp.ge.f32.partialorder %v1313, 0.0
  %vm1328 = vcmp.ge.f32.partialorder %v1314, 0.0
  %vm1329 = vcmp.ge.f32.partialorder %v1315, 0.0
  %vm1330 = vcmp.ge.f32.partialorder %v1316, 0.0
  %vm1331 = vcmp.ge.f32.partialorder %v1317, 0.0
  %vm1332 = vcmp.ge.f32.partialorder %v1318, 0.0
  %vm1333 = vcmp.ge.f32.partialorder %v1319, 0.0
  %vm1334 = vcmp.ge.f32.partialorder %v1320, 0.0
  %vm1335 = vcmp.ge.f32.partialorder %v1321, 0.0
  %vm1336 = vcmp.ge.f32.partialorder %v1322, 0.0
  %vm1337 = vcmp.ge.f32.partialorder %v1323, 0.0
  %vm1338 = vcmp.ge.f32.partialorder %v1324, 0.0
  %v1339 = vmul.f32 %v1311, 0.2
  %v1340 = vmul.f32 %v1312, 0.2
  %v1341 = vmul.f32 %v1313, 0.2
  %v1342 = vmul.f32 %v1314, 0.2
  %v1343 = vmul.f32 %v1315, 0.2
  %v1344 = vmul.f32 %v1316, 0.2
  %v1345 = vmul.f32 %v1317, 0.2
  %v1346 = vmul.f32 %v1318, 0.2
  %v1347 = vmul.f32 %v1319, 0.2
  %v1348 = vmul.f32 %v1320, 0.2
  %v1349 = vmul.f32 %v1321, 0.2
  %v1350 = vmul.f32 %v1322, 0.2
  %v1351 = vmul.f32 %v1323, 0.2
  %v1352 = vmul.f32 %v1324, 0.2
  %v1353 = vsel %vm1325, %v1311, %v1339
  %v1354 = vsel %vm1326, %v1312, %v1340
  %v1355 = vsel %vm1327, %v1313, %v1341
  %v1356 = vsel %vm1328, %v1314, %v1342
  %v1357 = vsel %vm1329, %v1315, %v1343
  %v1358 = vsel %vm1330, %v1316, %v1344
  %v1359 = vsel %vm1331, %v1317, %v1345
  %v1360 = vsel %vm1332, %v1318, %v1346
  %v1361 = vsel %vm1333, %v1319, %v1347
  %v1362 = vsel %vm1334, %v1320, %v1348
  %v1363 = vsel %vm1335, %v1321, %v1349
  %v1364 = vsel %vm1336, %v1322, %v1350
  %v1365 = vsel %vm1337, %v1323, %v1351
  %v1366 = vsel %vm1338, %v1324, %v1352
  %v1367 = vpack.c.bf16 %v1354, %v1353
  %v1368 = vpack.c.bf16 %v1356, %v1355
  %v1369 = vpack.c.bf16 %v1358, %v1357
  %v1370 = vpack.c.bf16 %v1360, %v1359
  %v1371 = vpack.c.bf16 %v1362, %v1361
  %v1372 = vpack.c.bf16 %v1364, %v1363
  %v1373 = vpack.c.bf16 %v1366, %v1365
  %v1381 = vunpack.c.l.b16 %v1367
  %v1382 = vunpack.c.h.b16 %v1367
  %v1383 = vunpack.c.l.b16 %v1368
  %v1384 = vunpack.c.h.b16 %v1368
  %v1385 = vunpack.c.l.b16 %v1369
  %v1386 = vunpack.c.h.b16 %v1369
  %v1387 = vunpack.c.l.b16 %v1370
  %v1388 = vunpack.c.h.b16 %v1370
  %v1389 = vunpack.c.l.b16 %v1371
  %v1390 = vunpack.c.h.b16 %v1371
  %v1391 = vunpack.c.l.b16 %v1372
  %v1392 = vunpack.c.h.b16 %v1372
  %v1393 = vunpack.c.l.b16 %v1373
  %v1394 = vunpack.c.h.b16 %v1373
  %v1395 = vpack.c.b16 %v1381, %v1381
  %v1396 = vpack.c.b16 %v1382, %v1382
  %v1397 = vpack.c.b16 %v1383, %v1383
  %v1398 = vpack.c.b16 %v1384, %v1384
  %v1399 = vpack.c.b16 %v1385, %v1385
  %v1400 = vpack.c.b16 %v1386, %v1386
  %v1401 = vpack.c.b16 %v1387, %v1387
  %v1402 = vpack.c.b16 %v1388, %v1388
  %v1403 = vpack.c.b16 %v1389, %v1389
  %v1404 = vpack.c.b16 %v1390, %v1390
  %v1405 = vpack.c.b16 %v1391, %v1391
  %v1406 = vpack.c.b16 %v1392, %v1392
  %v1407 = vpack.c.b16 %v1393, %v1393
  %v1408 = vpack.c.b16 %v1394, %v1394
  %1423 = vst [vmem:[%s4] sm:$0xf] %v1395
  %1424 = vst [vmem:[%s4 + $0x4] sm:$0xf] %v1396
  %1425 = vst [vmem:[%s4 + $0x8] sm:$0xf] %v1397
  %1426 = vst [vmem:[%s4 + $0xc] sm:$0xf] %v1398
  %1427 = vst [vmem:[%s4 + $0x10] sm:$0xf] %v1399
  %1428 = vst [vmem:[%s4 + $0x14] sm:$0xf] %v1400
  %1429 = vst [vmem:[%s4 + $0x18] sm:$0xf] %v1401
  %1430 = vst [vmem:[%s4 + $0x1c] sm:$0xf] %v1402
  %1431 = vst [vmem:[%s4 + $0x20] sm:$0xf] %v1403
  %1432 = vst [vmem:[%s4 + $0x24] sm:$0xf] %v1404
  %1433 = vst [vmem:[%s4 + $0x28] sm:$0xf] %v1405
  %1434 = vst [vmem:[%s4 + $0x2c] sm:$0xf] %v1406
  %1435 = vst [vmem:[%s4 + $0x30] sm:$0xf] %v1407
  %1436 = vst [vmem:[%s4 + $0x34] sm:$0xf] %v1408
  // Predicated region
  $region18: #{discriminator_forward.4} parent=0 // pred_check
    _
  $region19: #{discriminator_forward.4} parent=0 // pred_check_branch
    %1438 = sbr.rel (0) target = $region21
  $region20: #{discriminator_forward.4} parent=0 // pred_region
    _
  $region21: #{discriminator_forward.4} parent=0 // pred_fallthru
    _
  // Predicated region
  $region22: #{discriminator_forward.4} parent=0 // pred_check
    _
  $region23: #{discriminator_forward.4} parent=0 // pred_check_branch
    %1440 = sbr.rel (0) target = $region25
  $region24: #{discriminator_forward.4} parent=0 // pred_region
    _
  $region25: #{discriminator_forward.4} parent=0 // pred_fallthru
    _

// kernel: discriminator_forward.5
$region0: #{discriminator_forward.5}
  #allocation0 [shape = 'u32[]', space=smem, size = 0x4, offset = 0x4, fixed_abs, tag = 'smem constant byte address 0x4 - core index']
  #allocation1 [shape = 'u32[144,128]{1,0:T(1,128)}', space=vmem, size = 0x12000, scoped, tag = 'internal scratch']
  %s0 = inlined_call_operand.vmem [shape: bf16[32,2048], index: 0, kind: input, shape index: {}]
  %s1 = inlined_call_operand.vmem [shape: bf16[2048,256], index: 1, kind: input, shape index: {}]
  %s2 = inlined_call_operand.vmem [shape: f32[1,256], index: 2, kind: input, shape index: {}]
  %s3 = inlined_call_operand.vmem [shape: f32[1,256], index: 3, kind: input, shape index: {}]
  %s4 = inlined_call_operand.vmem [shape: f32[32,256], index: 4, kind: output, shape index: {}]
  %s5 = sld [smem:[#allocation0]]
  $region26: #{discriminator_forward.5} parent=0
    _
  %s7 = ssub.s32 1, %s5
  %s8 = scalar_select 0, %s7, %s5
  // Predicated region
  $region2: #{discriminator_forward.5} parent=0 // pred_check
    _
  $region3: #{discriminator_forward.5} parent=0 // pred_check_branch
    %10 = sbr.rel (0) target = $region5
  $region4: #{discriminator_forward.5} parent=0 // pred_region
    _
  $region5: #{discriminator_forward.5} parent=0 // pred_fallthru
    _
  // Predicated region
  $region6: #{discriminator_forward.5} parent=0 // pred_check
    _
  $region7: #{discriminator_forward.5} parent=0 // pred_check_branch
    %12 = sbr.rel (0) target = $region9
  $region8: #{discriminator_forward.5} parent=0 // pred_region
    _
  $region9: #{discriminator_forward.5} parent=0 // pred_fallthru
    _
  // Predicated region
  $region10: #{discriminator_forward.5} parent=0 // pred_check
    _
  $region11: #{discriminator_forward.5} parent=0 // pred_check_branch
    %14 = sbr.rel (0) target = $region13
  $region12: #{discriminator_forward.5} parent=0 // pred_region
    _
  $region13: #{discriminator_forward.5} parent=0 // pred_fallthru
    _
  // Predicated region
  $region14: #{discriminator_forward.5} parent=0 // pred_check
    _
  $region15: #{discriminator_forward.5} parent=0 // pred_check_branch
    %16 = sbr.rel (0) target = $region17
  $region16: #{discriminator_forward.5} parent=0 // pred_region
    _
  $region17: #{discriminator_forward.5} parent=0 // pred_fallthru
    _
  %v17 = vld [vmem:[%s0] sm:$0xff]
  %v18 = vld [vmem:[%s0 + $0x8] sm:$0xff]
  %v19 = vld [vmem:[%s0 + $0x10] sm:$0xff]
  %v20 = vld [vmem:[%s0 + $0x18] sm:$0xff]
  %v21 = vld [vmem:[%s0 + $0x20] sm:$0xff]
  %v22 = vld [vmem:[%s0 + $0x28] sm:$0xff]
  %v23 = vld [vmem:[%s0 + $0x30] sm:$0xff]
  %v24 = vld [vmem:[%s0 + $0x38] sm:$0xff]
  %v25 = vld [vmem:[%s0 + $0x40] sm:$0xff]
  %v26 = vld [vmem:[%s0 + $0x48] sm:$0xff]
  %v27 = vld [vmem:[%s0 + $0x50] sm:$0xff]
  %v28 = vld [vmem:[%s0 + $0x58] sm:$0xff]
  %v29 = vld [vmem:[%s0 + $0x60] sm:$0xff]
  %v30 = vld [vmem:[%s0 + $0x68] sm:$0xff]
  %v31 = vld [vmem:[%s0 + $0x70] sm:$0xff]
  %v32 = vld [vmem:[%s0 + $0x78] sm:$0xff]
  %v33 = vld [vmem:[%s0 + $0x80] sm:$0xff]
  %v34 = vld [vmem:[%s0 + $0x88] sm:$0xff]
  %v35 = vld [vmem:[%s0 + $0x90] sm:$0xff]
  %v36 = vld [vmem:[%s0 + $0x98] sm:$0xff]
  %v37 = vld [vmem:[%s0 + $0xa0] sm:$0xff]
  %v38 = vld [vmem:[%s0 + $0xa8] sm:$0xff]
  %v39 = vld [vmem:[%s0 + $0xb0] sm:$0xff]
  %v40 = vld [vmem:[%s0 + $0xb8] sm:$0xff]
  %v41 = vld [vmem:[%s0 + $0xc0] sm:$0xff]
  %v42 = vld [vmem:[%s0 + $0xc8] sm:$0xff]
  %v43 = vld [vmem:[%s0 + $0xd0] sm:$0xff]
  %v44 = vld [vmem:[%s0 + $0xd8] sm:$0xff]
  %v45 = vld [vmem:[%s0 + $0xe0] sm:$0xff]
  %v46 = vld [vmem:[%s0 + $0xe8] sm:$0xff]
  %v47 = vld [vmem:[%s0 + $0xf0] sm:$0xff]
  %v48 = vld [vmem:[%s0 + $0xf8] sm:$0xff]
  %v49 = vld [vmem:[%s1] sm:$0xff]
  %v50 = vld [vmem:[%s1 + $0x8] sm:$0xff]
  %v51 = vld [vmem:[%s1 + $0x10] sm:$0xff]
  %v52 = vld [vmem:[%s1 + $0x18] sm:$0xff]
  %v53 = vld [vmem:[%s1 + $0x20] sm:$0xff]
  %v54 = vld [vmem:[%s1 + $0x28] sm:$0xff]
  %v55 = vld [vmem:[%s1 + $0x30] sm:$0xff]
  %v56 = vld [vmem:[%s1 + $0x38] sm:$0xff]
  %v57 = vld [vmem:[%s1 + $0x40] sm:$0xff]
  %v58 = vld [vmem:[%s1 + $0x48] sm:$0xff]
  %v59 = vld [vmem:[%s1 + $0x50] sm:$0xff]
  %v60 = vld [vmem:[%s1 + $0x58] sm:$0xff]
  %v61 = vld [vmem:[%s1 + $0x60] sm:$0xff]
  %v62 = vld [vmem:[%s1 + $0x68] sm:$0xff]
  %v63 = vld [vmem:[%s1 + $0x70] sm:$0xff]
  %v64 = vld [vmem:[%s1 + $0x78] sm:$0xff]
  %v65 = vld [vmem:[%s1 + $0x80] sm:$0xff]
  %v66 = vld [vmem:[%s1 + $0x88] sm:$0xff]
  %v67 = vld [vmem:[%s1 + $0x90] sm:$0xff]
  %v68 = vld [vmem:[%s1 + $0x98] sm:$0xff]
  %v69 = vld [vmem:[%s1 + $0xa0] sm:$0xff]
  %v70 = vld [vmem:[%s1 + $0xa8] sm:$0xff]
  %v71 = vld [vmem:[%s1 + $0xb0] sm:$0xff]
  %v72 = vld [vmem:[%s1 + $0xb8] sm:$0xff]
  %v73 = vld [vmem:[%s1 + $0xc0] sm:$0xff]
  %v74 = vld [vmem:[%s1 + $0xc8] sm:$0xff]
  %v75 = vld [vmem:[%s1 + $0xd0] sm:$0xff]
  %v76 = vld [vmem:[%s1 + $0xd8] sm:$0xff]
  %v77 = vld [vmem:[%s1 + $0xe0] sm:$0xff]
  %v78 = vld [vmem:[%s1 + $0xe8] sm:$0xff]
  %v79 = vld [vmem:[%s1 + $0xf0] sm:$0xff]
  %v80 = vld [vmem:[%s1 + $0xf8] sm:$0xff]
  %v81 = vld [vmem:[%s1 + $0x100] sm:$0xff]
  %v82 = vld [vmem:[%s1 + $0x108] sm:$0xff]
  %v83 = vld [vmem:[%s1 + $0x110] sm:$0xff]
  %v84 = vld [vmem:[%s1 + $0x118] sm:$0xff]
  %v85 = vld [vmem:[%s1 + $0x120] sm:$0xff]
  %v86 = vld [vmem:[%s1 + $0x128] sm:$0xff]
  %v87 = vld [vmem:[%s1 + $0x130] sm:$0xff]
  %v88 = vld [vmem:[%s1 + $0x138] sm:$0xff]
  %v89 = vld [vmem:[%s1 + $0x140] sm:$0xff]
  %v90 = vld [vmem:[%s1 + $0x148] sm:$0xff]
  %v91 = vld [vmem:[%s1 + $0x150] sm:$0xff]
  %v92 = vld [vmem:[%s1 + $0x158] sm:$0xff]
  %v93 = vld [vmem:[%s1 + $0x160] sm:$0xff]
  %v94 = vld [vmem:[%s1 + $0x168] sm:$0xff]
  %v95 = vld [vmem:[%s1 + $0x170] sm:$0xff]
  %v96 = vld [vmem:[%s1 + $0x178] sm:$0xff]
  %v97 = vld [vmem:[%s1 + $0x180] sm:$0xff]
  %v98 = vld [vmem:[%s1 + $0x188] sm:$0xff]
  %v99 = vld [vmem:[%s1 + $0x190] sm:$0xff]
  %v100 = vld [vmem:[%s1 + $0x198] sm:$0xff]
  %v101 = vld [vmem:[%s1 + $0x1a0] sm:$0xff]
  %v102 = vld [vmem:[%s1 + $0x1a8] sm:$0xff]
  %v103 = vld [vmem:[%s1 + $0x1b0] sm:$0xff]
  %v104 = vld [vmem:[%s1 + $0x1b8] sm:$0xff]
  %v105 = vld [vmem:[%s1 + $0x1c0] sm:$0xff]
  %v106 = vld [vmem:[%s1 + $0x1c8] sm:$0xff]
  %v107 = vld [vmem:[%s1 + $0x1d0] sm:$0xff]
  %v108 = vld [vmem:[%s1 + $0x1d8] sm:$0xff]
  %v109 = vld [vmem:[%s1 + $0x1e0] sm:$0xff]
  %v110 = vld [vmem:[%s1 + $0x1e8] sm:$0xff]
  %v111 = vld [vmem:[%s1 + $0x1f0] sm:$0xff]
  %v112 = vld [vmem:[%s1 + $0x1f8] sm:$0xff]
  %v113 = vld [vmem:[%s1 + $0x200] sm:$0xff]
  %v114 = vld [vmem:[%s1 + $0x208] sm:$0xff]
  %v115 = vld [vmem:[%s1 + $0x210] sm:$0xff]
  %v116 = vld [vmem:[%s1 + $0x218] sm:$0xff]
  %v117 = vld [vmem:[%s1 + $0x220] sm:$0xff]
  %v118 = vld [vmem:[%s1 + $0x228] sm:$0xff]
  %v119 = vld [vmem:[%s1 + $0x230] sm:$0xff]
  %v120 = vld [vmem:[%s1 + $0x238] sm:$0xff]
  %v121 = vld [vmem:[%s1 + $0x240] sm:$0xff]
  %v122 = vld [vmem:[%s1 + $0x248] sm:$0xff]
  %v123 = vld [vmem:[%s1 + $0x250] sm:$0xff]
  %v124 = vld [vmem:[%s1 + $0x258] sm:$0xff]
  %v125 = vld [vmem:[%s1 + $0x260] sm:$0xff]
  %v126 = vld [vmem:[%s1 + $0x268] sm:$0xff]
  %v127 = vld [vmem:[%s1 + $0x270] sm:$0xff]
  %v128 = vld [vmem:[%s1 + $0x278] sm:$0xff]
  %v129 = vld [vmem:[%s1 + $0x280] sm:$0xff]
  %v130 = vld [vmem:[%s1 + $0x288] sm:$0xff]
  %v131 = vld [vmem:[%s1 + $0x290] sm:$0xff]
  %v132 = vld [vmem:[%s1 + $0x298] sm:$0xff]
  %v133 = vld [vmem:[%s1 + $0x2a0] sm:$0xff]
  %v134 = vld [vmem:[%s1 + $0x2a8] sm:$0xff]
  %v135 = vld [vmem:[%s1 + $0x2b0] sm:$0xff]
  %v136 = vld [vmem:[%s1 + $0x2b8] sm:$0xff]
  %v137 = vld [vmem:[%s1 + $0x2c0] sm:$0xff]
  %v138 = vld [vmem:[%s1 + $0x2c8] sm:$0xff]
  %v139 = vld [vmem:[%s1 + $0x2d0] sm:$0xff]
  %v140 = vld [vmem:[%s1 + $0x2d8] sm:$0xff]
  %v141 = vld [vmem:[%s1 + $0x2e0] sm:$0xff]
  %v142 = vld [vmem:[%s1 + $0x2e8] sm:$0xff]
  %v143 = vld [vmem:[%s1 + $0x2f0] sm:$0xff]
  %v144 = vld [vmem:[%s1 + $0x2f8] sm:$0xff]
  %v145 = vld [vmem:[%s1 + $0x300] sm:$0xff]
  %v146 = vld [vmem:[%s1 + $0x308] sm:$0xff]
  %v147 = vld [vmem:[%s1 + $0x310] sm:$0xff]
  %v148 = vld [vmem:[%s1 + $0x318] sm:$0xff]
  %v149 = vld [vmem:[%s1 + $0x320] sm:$0xff]
  %v150 = vld [vmem:[%s1 + $0x328] sm:$0xff]
  %v151 = vld [vmem:[%s1 + $0x330] sm:$0xff]
  %v152 = vld [vmem:[%s1 + $0x338] sm:$0xff]
  %v153 = vld [vmem:[%s1 + $0x340] sm:$0xff]
  %v154 = vld [vmem:[%s1 + $0x348] sm:$0xff]
  %v155 = vld [vmem:[%s1 + $0x350] sm:$0xff]
  %v156 = vld [vmem:[%s1 + $0x358] sm:$0xff]
  %v157 = vld [vmem:[%s1 + $0x360] sm:$0xff]
  %v158 = vld [vmem:[%s1 + $0x368] sm:$0xff]
  %v159 = vld [vmem:[%s1 + $0x370] sm:$0xff]
  %v160 = vld [vmem:[%s1 + $0x378] sm:$0xff]
  %v161 = vld [vmem:[%s1 + $0x380] sm:$0xff]
  %v162 = vld [vmem:[%s1 + $0x388] sm:$0xff]
  %v163 = vld [vmem:[%s1 + $0x390] sm:$0xff]
  %v164 = vld [vmem:[%s1 + $0x398] sm:$0xff]
  %v165 = vld [vmem:[%s1 + $0x3a0] sm:$0xff]
  %v166 = vld [vmem:[%s1 + $0x3a8] sm:$0xff]
  %v167 = vld [vmem:[%s1 + $0x3b0] sm:$0xff]
  %v168 = vld [vmem:[%s1 + $0x3b8] sm:$0xff]
  %v169 = vld [vmem:[%s1 + $0x3c0] sm:$0xff]
  %v170 = vld [vmem:[%s1 + $0x3c8] sm:$0xff]
  %v171 = vld [vmem:[%s1 + $0x3d0] sm:$0xff]
  %v172 = vld [vmem:[%s1 + $0x3d8] sm:$0xff]
  %v173 = vld [vmem:[%s1 + $0x3e0] sm:$0xff]
  %v174 = vld [vmem:[%s1 + $0x3e8] sm:$0xff]
  %v175 = vld [vmem:[%s1 + $0x3f0] sm:$0xff]
  %v176 = vld [vmem:[%s1 + $0x3f8] sm:$0xff]
  %v177 = vld [vmem:[%s1 + $0x400] sm:$0xff]
  %v178 = vld [vmem:[%s1 + $0x408] sm:$0xff]
  %v179 = vld [vmem:[%s1 + $0x410] sm:$0xff]
  %v180 = vld [vmem:[%s1 + $0x418] sm:$0xff]
  %v181 = vld [vmem:[%s1 + $0x420] sm:$0xff]
  %v182 = vld [vmem:[%s1 + $0x428] sm:$0xff]
  %v183 = vld [vmem:[%s1 + $0x430] sm:$0xff]
  %v184 = vld [vmem:[%s1 + $0x438] sm:$0xff]
  %v185 = vld [vmem:[%s1 + $0x440] sm:$0xff]
  %v186 = vld [vmem:[%s1 + $0x448] sm:$0xff]
  %v187 = vld [vmem:[%s1 + $0x450] sm:$0xff]
  %v188 = vld [vmem:[%s1 + $0x458] sm:$0xff]
  %v189 = vld [vmem:[%s1 + $0x460] sm:$0xff]
  %v190 = vld [vmem:[%s1 + $0x468] sm:$0xff]
  %v191 = vld [vmem:[%s1 + $0x470] sm:$0xff]
  %v192 = vld [vmem:[%s1 + $0x478] sm:$0xff]
  %v193 = vld [vmem:[%s1 + $0x480] sm:$0xff]
  %v194 = vld [vmem:[%s1 + $0x488] sm:$0xff]
  %v195 = vld [vmem:[%s1 + $0x490] sm:$0xff]
  %v196 = vld [vmem:[%s1 + $0x498] sm:$0xff]
  %v197 = vld [vmem:[%s1 + $0x4a0] sm:$0xff]
  %v198 = vld [vmem:[%s1 + $0x4a8] sm:$0xff]
  %v199 = vld [vmem:[%s1 + $0x4b0] sm:$0xff]
  %v200 = vld [vmem:[%s1 + $0x4b8] sm:$0xff]
  %v201 = vld [vmem:[%s1 + $0x4c0] sm:$0xff]
  %v202 = vld [vmem:[%s1 + $0x4c8] sm:$0xff]
  %v203 = vld [vmem:[%s1 + $0x4d0] sm:$0xff]
  %v204 = vld [vmem:[%s1 + $0x4d8] sm:$0xff]
  %v205 = vld [vmem:[%s1 + $0x4e0] sm:$0xff]
  %v206 = vld [vmem:[%s1 + $0x4e8] sm:$0xff]
  %v207 = vld [vmem:[%s1 + $0x4f0] sm:$0xff]
  %v208 = vld [vmem:[%s1 + $0x4f8] sm:$0xff]
  %v209 = vld [vmem:[%s1 + $0x500] sm:$0xff]
  %v210 = vld [vmem:[%s1 + $0x508] sm:$0xff]
  %v211 = vld [vmem:[%s1 + $0x510] sm:$0xff]
  %v212 = vld [vmem:[%s1 + $0x518] sm:$0xff]
  %v213 = vld [vmem:[%s1 + $0x520] sm:$0xff]
  %v214 = vld [vmem:[%s1 + $0x528] sm:$0xff]
  %v215 = vld [vmem:[%s1 + $0x530] sm:$0xff]
  %v216 = vld [vmem:[%s1 + $0x538] sm:$0xff]
  %v217 = vld [vmem:[%s1 + $0x540] sm:$0xff]
  %v218 = vld [vmem:[%s1 + $0x548] sm:$0xff]
  %v219 = vld [vmem:[%s1 + $0x550] sm:$0xff]
  %v220 = vld [vmem:[%s1 + $0x558] sm:$0xff]
  %v221 = vld [vmem:[%s1 + $0x560] sm:$0xff]
  %v222 = vld [vmem:[%s1 + $0x568] sm:$0xff]
  %v223 = vld [vmem:[%s1 + $0x570] sm:$0xff]
  %v224 = vld [vmem:[%s1 + $0x578] sm:$0xff]
  %v225 = vld [vmem:[%s1 + $0x580] sm:$0xff]
  %v226 = vld [vmem:[%s1 + $0x588] sm:$0xff]
  %v227 = vld [vmem:[%s1 + $0x590] sm:$0xff]
  %v228 = vld [vmem:[%s1 + $0x598] sm:$0xff]
  %v229 = vld [vmem:[%s1 + $0x5a0] sm:$0xff]
  %v230 = vld [vmem:[%s1 + $0x5a8] sm:$0xff]
  %v231 = vld [vmem:[%s1 + $0x5b0] sm:$0xff]
  %v232 = vld [vmem:[%s1 + $0x5b8] sm:$0xff]
  %v233 = vld [vmem:[%s1 + $0x5c0] sm:$0xff]
  %v234 = vld [vmem:[%s1 + $0x5c8] sm:$0xff]
  %v235 = vld [vmem:[%s1 + $0x5d0] sm:$0xff]
  %v236 = vld [vmem:[%s1 + $0x5d8] sm:$0xff]
  %v237 = vld [vmem:[%s1 + $0x5e0] sm:$0xff]
  %v238 = vld [vmem:[%s1 + $0x5e8] sm:$0xff]
  %v239 = vld [vmem:[%s1 + $0x5f0] sm:$0xff]
  %v240 = vld [vmem:[%s1 + $0x5f8] sm:$0xff]
  %v241 = vld [vmem:[%s1 + $0x600] sm:$0xff]
  %v242 = vld [vmem:[%s1 + $0x608] sm:$0xff]
  %v243 = vld [vmem:[%s1 + $0x610] sm:$0xff]
  %v244 = vld [vmem:[%s1 + $0x618] sm:$0xff]
  %v245 = vld [vmem:[%s1 + $0x620] sm:$0xff]
  %v246 = vld [vmem:[%s1 + $0x628] sm:$0xff]
  %v247 = vld [vmem:[%s1 + $0x630] sm:$0xff]
  %v248 = vld [vmem:[%s1 + $0x638] sm:$0xff]
  %v249 = vld [vmem:[%s1 + $0x640] sm:$0xff]
  %v250 = vld [vmem:[%s1 + $0x648] sm:$0xff]
  %v251 = vld [vmem:[%s1 + $0x650] sm:$0xff]
  %v252 = vld [vmem:[%s1 + $0x658] sm:$0xff]
  %v253 = vld [vmem:[%s1 + $0x660] sm:$0xff]
  %v254 = vld [vmem:[%s1 + $0x668] sm:$0xff]
  %v255 = vld [vmem:[%s1 + $0x670] sm:$0xff]
  %v256 = vld [vmem:[%s1 + $0x678] sm:$0xff]
  %v257 = vld [vmem:[%s1 + $0x680] sm:$0xff]
  %v258 = vld [vmem:[%s1 + $0x688] sm:$0xff]
  %v259 = vld [vmem:[%s1 + $0x690] sm:$0xff]
  %v260 = vld [vmem:[%s1 + $0x698] sm:$0xff]
  %v261 = vld [vmem:[%s1 + $0x6a0] sm:$0xff]
  %v262 = vld [vmem:[%s1 + $0x6a8] sm:$0xff]
  %v263 = vld [vmem:[%s1 + $0x6b0] sm:$0xff]
  %v264 = vld [vmem:[%s1 + $0x6b8] sm:$0xff]
  %v265 = vld [vmem:[%s1 + $0x6c0] sm:$0xff]
  %v266 = vld [vmem:[%s1 + $0x6c8] sm:$0xff]
  %v267 = vld [vmem:[%s1 + $0x6d0] sm:$0xff]
  %v268 = vld [vmem:[%s1 + $0x6d8] sm:$0xff]
  %v269 = vld [vmem:[%s1 + $0x6e0] sm:$0xff]
  %v270 = vld [vmem:[%s1 + $0x6e8] sm:$0xff]
  %v271 = vld [vmem:[%s1 + $0x6f0] sm:$0xff]
  %v272 = vld [vmem:[%s1 + $0x6f8] sm:$0xff]
  %v273 = vld [vmem:[%s1 + $0x700] sm:$0xff]
  %v274 = vld [vmem:[%s1 + $0x708] sm:$0xff]
  %v275 = vld [vmem:[%s1 + $0x710] sm:$0xff]
  %v276 = vld [vmem:[%s1 + $0x718] sm:$0xff]
  %v277 = vld [vmem:[%s1 + $0x720] sm:$0xff]
  %v278 = vld [vmem:[%s1 + $0x728] sm:$0xff]
  %v279 = vld [vmem:[%s1 + $0x730] sm:$0xff]
  %v280 = vld [vmem:[%s1 + $0x738] sm:$0xff]
  %v281 = vld [vmem:[%s1 + $0x740] sm:$0xff]
  %v282 = vld [vmem:[%s1 + $0x748] sm:$0xff]
  %v283 = vld [vmem:[%s1 + $0x750] sm:$0xff]
  %v284 = vld [vmem:[%s1 + $0x758] sm:$0xff]
  %v285 = vld [vmem:[%s1 + $0x760] sm:$0xff]
  %v286 = vld [vmem:[%s1 + $0x768] sm:$0xff]
  %v287 = vld [vmem:[%s1 + $0x770] sm:$0xff]
  %v288 = vld [vmem:[%s1 + $0x778] sm:$0xff]
  %v289 = vld [vmem:[%s1 + $0x780] sm:$0xff]
  %v290 = vld [vmem:[%s1 + $0x788] sm:$0xff]
  %v291 = vld [vmem:[%s1 + $0x790] sm:$0xff]
  %v292 = vld [vmem:[%s1 + $0x798] sm:$0xff]
  %v293 = vld [vmem:[%s1 + $0x7a0] sm:$0xff]
  %v294 = vld [vmem:[%s1 + $0x7a8] sm:$0xff]
  %v295 = vld [vmem:[%s1 + $0x7b0] sm:$0xff]
  %v296 = vld [vmem:[%s1 + $0x7b8] sm:$0xff]
  %v297 = vld [vmem:[%s1 + $0x7c0] sm:$0xff]
  %v298 = vld [vmem:[%s1 + $0x7c8] sm:$0xff]
  %v299 = vld [vmem:[%s1 + $0x7d0] sm:$0xff]
  %v300 = vld [vmem:[%s1 + $0x7d8] sm:$0xff]
  %v301 = vld [vmem:[%s1 + $0x7e0] sm:$0xff]
  %v302 = vld [vmem:[%s1 + $0x7e8] sm:$0xff]
  %v303 = vld [vmem:[%s1 + $0x7f0] sm:$0xff]
  %v304 = vld [vmem:[%s1 + $0x7f8] sm:$0xff]
  %v337 = vunpack.c.l.b16 %v17
  %v338 = vunpack.c.h.b16 %v17
  %v339 = vunpack.c.l.b16 %v18
  %v340 = vunpack.c.h.b16 %v18
  %v341 = vunpack.c.l.b16 %v19
  %v342 = vunpack.c.h.b16 %v19
  %v343 = vunpack.c.l.b16 %v20
  %v344 = vunpack.c.h.b16 %v20
  %v345 = vunpack.c.l.b16 %v21
  %v346 = vunpack.c.h.b16 %v21
  %v347 = vunpack.c.l.b16 %v22
  %v348 = vunpack.c.h.b16 %v22
  %v349 = vunpack.c.l.b16 %v23
  %v350 = vunpack.c.h.b16 %v23
  %v351 = vunpack.c.l.b16 %v24
  %v352 = vunpack.c.h.b16 %v24
  %v353 = vunpack.c.l.b16 %v25
  %v354 = vunpack.c.h.b16 %v25
  %v355 = vunpack.c.l.b16 %v26
  %v356 = vunpack.c.h.b16 %v26
  %v357 = vunpack.c.l.b16 %v27
  %v358 = vunpack.c.h.b16 %v27
  %v359 = vunpack.c.l.b16 %v28
  %v360 = vunpack.c.h.b16 %v28
  %v361 = vunpack.c.l.b16 %v29
  %v362 = vunpack.c.h.b16 %v29
  %v363 = vunpack.c.l.b16 %v30
  %v364 = vunpack.c.h.b16 %v30
  %v365 = vunpack.c.l.b16 %v31
  %v366 = vunpack.c.h.b16 %v31
  %v367 = vunpack.c.l.b16 %v32
  %v368 = vunpack.c.h.b16 %v32
  %v369 = vunpack.c.l.b16 %v33
  %v370 = vunpack.c.h.b16 %v33
  %v371 = vunpack.c.l.b16 %v34
  %v372 = vunpack.c.h.b16 %v34
  %v373 = vunpack.c.l.b16 %v35
  %v374 = vunpack.c.h.b16 %v35
  %v375 = vunpack.c.l.b16 %v36
  %v376 = vunpack.c.h.b16 %v36
  %v377 = vunpack.c.l.b16 %v37
  %v378 = vunpack.c.h.b16 %v37
  %v379 = vunpack.c.l.b16 %v38
  %v380 = vunpack.c.h.b16 %v38
  %v381 = vunpack.c.l.b16 %v39
  %v382 = vunpack.c.h.b16 %v39
  %v383 = vunpack.c.l.b16 %v40
  %v384 = vunpack.c.h.b16 %v40
  %v385 = vunpack.c.l.b16 %v41
  %v386 = vunpack.c.h.b16 %v41
  %v387 = vunpack.c.l.b16 %v42
  %v388 = vunpack.c.h.b16 %v42
  %v389 = vunpack.c.l.b16 %v43
  %v390 = vunpack.c.h.b16 %v43
  %v391 = vunpack.c.l.b16 %v44
  %v392 = vunpack.c.h.b16 %v44
  %v393 = vunpack.c.l.b16 %v45
  %v394 = vunpack.c.h.b16 %v45
  %v395 = vunpack.c.l.b16 %v46
  %v396 = vunpack.c.h.b16 %v46
  %v397 = vunpack.c.l.b16 %v47
  %v398 = vunpack.c.h.b16 %v47
  %v399 = vunpack.c.l.b16 %v48
  %v400 = vunpack.c.h.b16 %v48
  %v401 = vpack.c.b16 %v353, %v337
  %v402 = vpack.c.b16 %v354, %v338
  %v403 = vpack.c.b16 %v355, %v339
  %v404 = vpack.c.b16 %v356, %v340
  %v405 = vpack.c.b16 %v357, %v341
  %v406 = vpack.c.b16 %v358, %v342
  %v407 = vpack.c.b16 %v359, %v343
  %v408 = vpack.c.b16 %v360, %v344
  %v409 = vpack.c.b16 %v361, %v345
  %v410 = vpack.c.b16 %v362, %v346
  %v411 = vpack.c.b16 %v363, %v347
  %v412 = vpack.c.b16 %v364, %v348
  %v413 = vpack.c.b16 %v365, %v349
  %v414 = vpack.c.b16 %v366, %v350
  %v415 = vpack.c.b16 %v367, %v351
  %v416 = vpack.c.b16 %v368, %v352
  %v417 = vpack.c.b16 %v385, %v369
  %v418 = vpack.c.b16 %v386, %v370
  %v419 = vpack.c.b16 %v387, %v371
  %v420 = vpack.c.b16 %v388, %v372
  %v421 = vpack.c.b16 %v389, %v373
  %v422 = vpack.c.b16 %v390, %v374
  %v423 = vpack.c.b16 %v391, %v375
  %v424 = vpack.c.b16 %v392, %v376
  %v425 = vpack.c.b16 %v393, %v377
  %v426 = vpack.c.b16 %v394, %v378
  %v427 = vpack.c.b16 %v395, %v379
  %v428 = vpack.c.b16 %v396, %v380
  %v429 = vpack.c.b16 %v397, %v381
  %v430 = vpack.c.b16 %v398, %v382
  %v431 = vpack.c.b16 %v399, %v383
  %v432 = vpack.c.b16 %v400, %v384
  %v721 = vunpack.c.l.b16 %v49
  %v722 = vunpack.c.h.b16 %v49
  %v723 = vunpack.c.l.b16 %v50
  %v724 = vunpack.c.h.b16 %v50
  %v725 = vunpack.c.l.b16 %v51
  %v726 = vunpack.c.h.b16 %v51
  %v727 = vunpack.c.l.b16 %v52
  %v728 = vunpack.c.h.b16 %v52
  %v729 = vunpack.c.l.b16 %v53
  %v730 = vunpack.c.h.b16 %v53
  %v731 = vunpack.c.l.b16 %v54
  %v732 = vunpack.c.h.b16 %v54
  %v733 = vunpack.c.l.b16 %v55
  %v734 = vunpack.c.h.b16 %v55
  %v735 = vunpack.c.l.b16 %v56
  %v736 = vunpack.c.h.b16 %v56
  %v737 = vunpack.c.l.b16 %v57
  %v738 = vunpack.c.h.b16 %v57
  %v739 = vunpack.c.l.b16 %v58
  %v740 = vunpack.c.h.b16 %v58
  %v741 = vunpack.c.l.b16 %v59
  %v742 = vunpack.c.h.b16 %v59
  %v743 = vunpack.c.l.b16 %v60
  %v744 = vunpack.c.h.b16 %v60
  %v745 = vunpack.c.l.b16 %v61
  %v746 = vunpack.c.h.b16 %v61
  %v747 = vunpack.c.l.b16 %v62
  %v748 = vunpack.c.h.b16 %v62
  %v749 = vunpack.c.l.b16 %v63
  %v750 = vunpack.c.h.b16 %v63
  %v751 = vunpack.c.l.b16 %v64
  %v752 = vunpack.c.h.b16 %v64
  %v753 = vunpack.c.l.b16 %v65
  %v754 = vunpack.c.h.b16 %v65
  %v755 = vunpack.c.l.b16 %v66
  %v756 = vunpack.c.h.b16 %v66
  %v757 = vunpack.c.l.b16 %v67
  %v758 = vunpack.c.h.b16 %v67
  %v759 = vunpack.c.l.b16 %v68
  %v760 = vunpack.c.h.b16 %v68
  %v761 = vunpack.c.l.b16 %v69
  %v762 = vunpack.c.h.b16 %v69
  %v763 = vunpack.c.l.b16 %v70
  %v764 = vunpack.c.h.b16 %v70
  %v765 = vunpack.c.l.b16 %v71
  %v766 = vunpack.c.h.b16 %v71
  %v767 = vunpack.c.l.b16 %v72
  %v768 = vunpack.c.h.b16 %v72
  %v769 = vunpack.c.l.b16 %v73
  %v770 = vunpack.c.h.b16 %v73
  %v771 = vunpack.c.l.b16 %v74
  %v772 = vunpack.c.h.b16 %v74
  %v773 = vunpack.c.l.b16 %v75
  %v774 = vunpack.c.h.b16 %v75
  %v775 = vunpack.c.l.b16 %v76
  %v776 = vunpack.c.h.b16 %v76
  %v777 = vunpack.c.l.b16 %v77
  %v778 = vunpack.c.h.b16 %v77
  %v779 = vunpack.c.l.b16 %v78
  %v780 = vunpack.c.h.b16 %v78
  %v781 = vunpack.c.l.b16 %v79
  %v782 = vunpack.c.h.b16 %v79
  %v783 = vunpack.c.l.b16 %v80
  %v784 = vunpack.c.h.b16 %v80
  %v785 = vunpack.c.l.b16 %v81
  %v786 = vunpack.c.h.b16 %v81
  %v787 = vunpack.c.l.b16 %v82
  %v788 = vunpack.c.h.b16 %v82
  %v789 = vunpack.c.l.b16 %v83
  %v790 = vunpack.c.h.b16 %v83
  %v791 = vunpack.c.l.b16 %v84
  %v792 = vunpack.c.h.b16 %v84
  %v793 = vunpack.c.l.b16 %v85
  %v794 = vunpack.c.h.b16 %v85
  %v795 = vunpack.c.l.b16 %v86
  %v796 = vunpack.c.h.b16 %v86
  %v797 = vunpack.c.l.b16 %v87
  %v798 = vunpack.c.h.b16 %v87
  %v799 = vunpack.c.l.b16 %v88
  %v800 = vunpack.c.h.b16 %v88
  %v801 = vunpack.c.l.b16 %v89
  %v802 = vunpack.c.h.b16 %v89
  %v803 = vunpack.c.l.b16 %v90
  %v804 = vunpack.c.h.b16 %v90
  %v805 = vunpack.c.l.b16 %v91
  %v806 = vunpack.c.h.b16 %v91
  %v807 = vunpack.c.l.b16 %v92
  %v808 = vunpack.c.h.b16 %v92
  %v809 = vunpack.c.l.b16 %v93
  %v810 = vunpack.c.h.b16 %v93
  %v811 = vunpack.c.l.b16 %v94
  %v812 = vunpack.c.h.b16 %v94
  %v813 = vunpack.c.l.b16 %v95
  %v814 = vunpack.c.h.b16 %v95
  %v815 = vunpack.c.l.b16 %v96
  %v816 = vunpack.c.h.b16 %v96
  %v817 = vunpack.c.l.b16 %v97
  %v818 = vunpack.c.h.b16 %v97
  %v819 = vunpack.c.l.b16 %v98
  %v820 = vunpack.c.h.b16 %v98
  %v821 = vunpack.c.l.b16 %v99
  %v822 = vunpack.c.h.b16 %v99
  %v823 = vunpack.c.l.b16 %v100
  %v824 = vunpack.c.h.b16 %v100
  %v825 = vunpack.c.l.b16 %v101
  %v826 = vunpack.c.h.b16 %v101
  %v827 = vunpack.c.l.b16 %v102
  %v828 = vunpack.c.h.b16 %v102
  %v829 = vunpack.c.l.b16 %v103
  %v830 = vunpack.c.h.b16 %v103
  %v831 = vunpack.c.l.b16 %v104
  %v832 = vunpack.c.h.b16 %v104
  %v833 = vunpack.c.l.b16 %v105
  %v834 = vunpack.c.h.b16 %v105
  %v835 = vunpack.c.l.b16 %v106
  %v836 = vunpack.c.h.b16 %v106
  %v837 = vunpack.c.l.b16 %v107
  %v838 = vunpack.c.h.b16 %v107
  %v839 = vunpack.c.l.b16 %v108
  %v840 = vunpack.c.h.b16 %v108
  %v841 = vunpack.c.l.b16 %v109
  %v842 = vunpack.c.h.b16 %v109
  %v843 = vunpack.c.l.b16 %v110
  %v844 = vunpack.c.h.b16 %v110
  %v845 = vunpack.c.l.b16 %v111
  %v846 = vunpack.c.h.b16 %v111
  %v847 = vunpack.c.l.b16 %v112
  %v848 = vunpack.c.h.b16 %v112
  %v849 = vunpack.c.l.b16 %v113
  %v850 = vunpack.c.h.b16 %v113
  %v851 = vunpack.c.l.b16 %v114
  %v852 = vunpack.c.h.b16 %v114
  %v853 = vunpack.c.l.b16 %v115
  %v854 = vunpack.c.h.b16 %v115
  %v855 = vunpack.c.l.b16 %v116
  %v856 = vunpack.c.h.b16 %v116
  %v857 = vunpack.c.l.b16 %v117
  %v858 = vunpack.c.h.b16 %v117
  %v859 = vunpack.c.l.b16 %v118
  %v860 = vunpack.c.h.b16 %v118
  %v861 = vunpack.c.l.b16 %v119
  %v862 = vunpack.c.h.b16 %v119
  %v863 = vunpack.c.l.b16 %v120
  %v864 = vunpack.c.h.b16 %v120
  %v865 = vunpack.c.l.b16 %v121
  %v866 = vunpack.c.h.b16 %v121
  %v867 = vunpack.c.l.b16 %v122
  %v868 = vunpack.c.h.b16 %v122
  %v869 = vunpack.c.l.b16 %v123
  %v870 = vunpack.c.h.b16 %v123
  %v871 = vunpack.c.l.b16 %v124
  %v872 = vunpack.c.h.b16 %v124
  %v873 = vunpack.c.l.b16 %v125
  %v874 = vunpack.c.h.b16 %v125
  %v875 = vunpack.c.l.b16 %v126
  %v876 = vunpack.c.h.b16 %v126
  %v877 = vunpack.c.l.b16 %v127
  %v878 = vunpack.c.h.b16 %v127
  %v879 = vunpack.c.l.b16 %v128
  %v880 = vunpack.c.h.b16 %v128
  %v881 = vunpack.c.l.b16 %v129
  %v882 = vunpack.c.h.b16 %v129
  %v883 = vunpack.c.l.b16 %v130
  %v884 = vunpack.c.h.b16 %v130
  %v885 = vunpack.c.l.b16 %v131
  %v886 = vunpack.c.h.b16 %v131
  %v887 = vunpack.c.l.b16 %v132
  %v888 = vunpack.c.h.b16 %v132
  %v889 = vunpack.c.l.b16 %v133
  %v890 = vunpack.c.h.b16 %v133
  %v891 = vunpack.c.l.b16 %v134
  %v892 = vunpack.c.h.b16 %v134
  %v893 = vunpack.c.l.b16 %v135
  %v894 = vunpack.c.h.b16 %v135
  %v895 = vunpack.c.l.b16 %v136
  %v896 = vunpack.c.h.b16 %v136
  %v897 = vunpack.c.l.b16 %v137
  %v898 = vunpack.c.h.b16 %v137
  %v899 = vunpack.c.l.b16 %v138
  %v900 = vunpack.c.h.b16 %v138
  %v901 = vunpack.c.l.b16 %v139
  %v902 = vunpack.c.h.b16 %v139
  %v903 = vunpack.c.l.b16 %v140
  %v904 = vunpack.c.h.b16 %v140
  %v905 = vunpack.c.l.b16 %v141
  %v906 = vunpack.c.h.b16 %v141
  %v907 = vunpack.c.l.b16 %v142
  %v908 = vunpack.c.h.b16 %v142
  %v909 = vunpack.c.l.b16 %v143
  %v910 = vunpack.c.h.b16 %v143
  %v911 = vunpack.c.l.b16 %v144
  %v912 = vunpack.c.h.b16 %v144
  %v913 = vunpack.c.l.b16 %v145
  %v914 = vunpack.c.h.b16 %v145
  %v915 = vunpack.c.l.b16 %v146
  %v916 = vunpack.c.h.b16 %v146
  %v917 = vunpack.c.l.b16 %v147
  %v918 = vunpack.c.h.b16 %v147
  %v919 = vunpack.c.l.b16 %v148
  %v920 = vunpack.c.h.b16 %v148
  %v921 = vunpack.c.l.b16 %v149
  %v922 = vunpack.c.h.b16 %v149
  %v923 = vunpack.c.l.b16 %v150
  %v924 = vunpack.c.h.b16 %v150
  %v925 = vunpack.c.l.b16 %v151
  %v926 = vunpack.c.h.b16 %v151
  %v927 = vunpack.c.l.b16 %v152
  %v928 = vunpack.c.h.b16 %v152
  %v929 = vunpack.c.l.b16 %v153
  %v930 = vunpack.c.h.b16 %v153
  %v931 = vunpack.c.l.b16 %v154
  %v932 = vunpack.c.h.b16 %v154
  %v933 = vunpack.c.l.b16 %v155
  %v934 = vunpack.c.h.b16 %v155
  %v935 = vunpack.c.l.b16 %v156
  %v936 = vunpack.c.h.b16 %v156
  %v937 = vunpack.c.l.b16 %v157
  %v938 = vunpack.c.h.b16 %v157
  %v939 = vunpack.c.l.b16 %v158
  %v940 = vunpack.c.h.b16 %v158
  %v941 = vunpack.c.l.b16 %v159
  %v942 = vunpack.c.h.b16 %v159
  %v943 = vunpack.c.l.b16 %v160
  %v944 = vunpack.c.h.b16 %v160
  %v945 = vunpack.c.l.b16 %v161
  %v946 = vunpack.c.h.b16 %v161
  %v947 = vunpack.c.l.b16 %v162
  %v948 = vunpack.c.h.b16 %v162
  %v949 = vunpack.c.l.b16 %v163
  %v950 = vunpack.c.h.b16 %v163
  %v951 = vunpack.c.l.b16 %v164
  %v952 = vunpack.c.h.b16 %v164
  %v953 = vunpack.c.l.b16 %v165
  %v954 = vunpack.c.h.b16 %v165
  %v955 = vunpack.c.l.b16 %v166
  %v956 = vunpack.c.h.b16 %v166
  %v957 = vunpack.c.l.b16 %v167
  %v958 = vunpack.c.h.b16 %v167
  %v959 = vunpack.c.l.b16 %v168
  %v960 = vunpack.c.h.b16 %v168
  %v961 = vunpack.c.l.b16 %v169
  %v962 = vunpack.c.h.b16 %v169
  %v963 = vunpack.c.l.b16 %v170
  %v964 = vunpack.c.h.b16 %v170
  %v965 = vunpack.c.l.b16 %v171
  %v966 = vunpack.c.h.b16 %v171
  %v967 = vunpack.c.l.b16 %v172
  %v968 = vunpack.c.h.b16 %v172
  %v969 = vunpack.c.l.b16 %v173
  %v970 = vunpack.c.h.b16 %v173
  %v971 = vunpack.c.l.b16 %v174
  %v972 = vunpack.c.h.b16 %v174
  %v973 = vunpack.c.l.b16 %v175
  %v974 = vunpack.c.h.b16 %v175
  %v975 = vunpack.c.l.b16 %v176
  %v976 = vunpack.c.h.b16 %v176
  %v977 = vunpack.c.l.b16 %v177
  %v978 = vunpack.c.h.b16 %v177
  %v979 = vunpack.c.l.b16 %v178
  %v980 = vunpack.c.h.b16 %v178
  %v981 = vunpack.c.l.b16 %v179
  %v982 = vunpack.c.h.b16 %v179
  %v983 = vunpack.c.l.b16 %v180
  %v984 = vunpack.c.h.b16 %v180
  %v985 = vunpack.c.l.b16 %v181
  %v986 = vunpack.c.h.b16 %v181
  %v987 = vunpack.c.l.b16 %v182
  %v988 = vunpack.c.h.b16 %v182
  %v989 = vunpack.c.l.b16 %v183
  %v990 = vunpack.c.h.b16 %v183
  %v991 = vunpack.c.l.b16 %v184
  %v992 = vunpack.c.h.b16 %v184
  %v993 = vunpack.c.l.b16 %v185
  %v994 = vunpack.c.h.b16 %v185
  %v995 = vunpack.c.l.b16 %v186
  %v996 = vunpack.c.h.b16 %v186
  %v997 = vunpack.c.l.b16 %v187
  %v998 = vunpack.c.h.b16 %v187
  %v999 = vunpack.c.l.b16 %v188
  %v1000 = vunpack.c.h.b16 %v188
  %v1001 = vunpack.c.l.b16 %v189
  %v1002 = vunpack.c.h.b16 %v189
  %v1003 = vunpack.c.l.b16 %v190
  %v1004 = vunpack.c.h.b16 %v190
  %v1005 = vunpack.c.l.b16 %v191
  %v1006 = vunpack.c.h.b16 %v191
  %v1007 = vunpack.c.l.b16 %v192
  %v1008 = vunpack.c.h.b16 %v192
  %v1009 = vunpack.c.l.b16 %v193
  %v1010 = vunpack.c.h.b16 %v193
  %v1011 = vunpack.c.l.b16 %v194
  %v1012 = vunpack.c.h.b16 %v194
  %v1013 = vunpack.c.l.b16 %v195
  %v1014 = vunpack.c.h.b16 %v195
  %v1015 = vunpack.c.l.b16 %v196
  %v1016 = vunpack.c.h.b16 %v196
  %v1017 = vunpack.c.l.b16 %v197
  %v1018 = vunpack.c.h.b16 %v197
  %v1019 = vunpack.c.l.b16 %v198
  %v1020 = vunpack.c.h.b16 %v198
  %v1021 = vunpack.c.l.b16 %v199
  %v1022 = vunpack.c.h.b16 %v199
  %v1023 = vunpack.c.l.b16 %v200
  %v1024 = vunpack.c.h.b16 %v200
  %v1025 = vunpack.c.l.b16 %v201
  %v1026 = vunpack.c.h.b16 %v201
  %v1027 = vunpack.c.l.b16 %v202
  %v1028 = vunpack.c.h.b16 %v202
  %v1029 = vunpack.c.l.b16 %v203
  %v1030 = vunpack.c.h.b16 %v203
  %v1031 = vunpack.c.l.b16 %v204
  %v1032 = vunpack.c.h.b16 %v204
  %v1033 = vunpack.c.l.b16 %v205
  %v1034 = vunpack.c.h.b16 %v205
  %v1035 = vunpack.c.l.b16 %v206
  %v1036 = vunpack.c.h.b16 %v206
  %v1037 = vunpack.c.l.b16 %v207
  %v1038 = vunpack.c.h.b16 %v207
  %v1039 = vunpack.c.l.b16 %v208
  %v1040 = vunpack.c.h.b16 %v208
  %v1041 = vunpack.c.l.b16 %v209
  %v1042 = vunpack.c.h.b16 %v209
  %v1043 = vunpack.c.l.b16 %v210
  %v1044 = vunpack.c.h.b16 %v210
  %v1045 = vunpack.c.l.b16 %v211
  %v1046 = vunpack.c.h.b16 %v211
  %v1047 = vunpack.c.l.b16 %v212
  %v1048 = vunpack.c.h.b16 %v212
  %v1049 = vunpack.c.l.b16 %v213
  %v1050 = vunpack.c.h.b16 %v213
  %v1051 = vunpack.c.l.b16 %v214
  %v1052 = vunpack.c.h.b16 %v214
  %v1053 = vunpack.c.l.b16 %v215
  %v1054 = vunpack.c.h.b16 %v215
  %v1055 = vunpack.c.l.b16 %v216
  %v1056 = vunpack.c.h.b16 %v216
  %v1057 = vunpack.c.l.b16 %v217
  %v1058 = vunpack.c.h.b16 %v217
  %v1059 = vunpack.c.l.b16 %v218
  %v1060 = vunpack.c.h.b16 %v218
  %v1061 = vunpack.c.l.b16 %v219
  %v1062 = vunpack.c.h.b16 %v219
  %v1063 = vunpack.c.l.b16 %v220
  %v1064 = vunpack.c.h.b16 %v220
  %v1065 = vunpack.c.l.b16 %v221
  %v1066 = vunpack.c.h.b16 %v221
  %v1067 = vunpack.c.l.b16 %v222
  %v1068 = vunpack.c.h.b16 %v222
  %v1069 = vunpack.c.l.b16 %v223
  %v1070 = vunpack.c.h.b16 %v223
  %v1071 = vunpack.c.l.b16 %v224
  %v1072 = vunpack.c.h.b16 %v224
  %v1073 = vunpack.c.l.b16 %v225
  %v1074 = vunpack.c.h.b16 %v225
  %v1075 = vunpack.c.l.b16 %v226
  %v1076 = vunpack.c.h.b16 %v226
  %v1077 = vunpack.c.l.b16 %v227
  %v1078 = vunpack.c.h.b16 %v227
  %v1079 = vunpack.c.l.b16 %v228
  %v1080 = vunpack.c.h.b16 %v228
  %v1081 = vunpack.c.l.b16 %v229
  %v1082 = vunpack.c.h.b16 %v229
  %v1083 = vunpack.c.l.b16 %v230
  %v1084 = vunpack.c.h.b16 %v230
  %v1085 = vunpack.c.l.b16 %v231
  %v1086 = vunpack.c.h.b16 %v231
  %v1087 = vunpack.c.l.b16 %v232
  %v1088 = vunpack.c.h.b16 %v232
  %v1089 = vunpack.c.l.b16 %v233
  %v1090 = vunpack.c.h.b16 %v233
  %v1091 = vunpack.c.l.b16 %v234
  %v1092 = vunpack.c.h.b16 %v234
  %v1093 = vunpack.c.l.b16 %v235
  %v1094 = vunpack.c.h.b16 %v235
  %v1095 = vunpack.c.l.b16 %v236
  %v1096 = vunpack.c.h.b16 %v236
  %v1097 = vunpack.c.l.b16 %v237
  %v1098 = vunpack.c.h.b16 %v237
  %v1099 = vunpack.c.l.b16 %v238
  %v1100 = vunpack.c.h.b16 %v238
  %v1101 = vunpack.c.l.b16 %v239
  %v1102 = vunpack.c.h.b16 %v239
  %v1103 = vunpack.c.l.b16 %v240
  %v1104 = vunpack.c.h.b16 %v240
  %v1105 = vunpack.c.l.b16 %v241
  %v1106 = vunpack.c.h.b16 %v241
  %v1107 = vunpack.c.l.b16 %v242
  %v1108 = vunpack.c.h.b16 %v242
  %v1109 = vunpack.c.l.b16 %v243
  %v1110 = vunpack.c.h.b16 %v243
  %v1111 = vunpack.c.l.b16 %v244
  %v1112 = vunpack.c.h.b16 %v244
  %v1113 = vunpack.c.l.b16 %v245
  %v1114 = vunpack.c.h.b16 %v245
  %v1115 = vunpack.c.l.b16 %v246
  %v1116 = vunpack.c.h.b16 %v246
  %v1117 = vunpack.c.l.b16 %v247
  %v1118 = vunpack.c.h.b16 %v247
  %v1119 = vunpack.c.l.b16 %v248
  %v1120 = vunpack.c.h.b16 %v248
  %v1121 = vunpack.c.l.b16 %v249
  %v1122 = vunpack.c.h.b16 %v249
  %v1123 = vunpack.c.l.b16 %v250
  %v1124 = vunpack.c.h.b16 %v250
  %v1125 = vunpack.c.l.b16 %v251
  %v1126 = vunpack.c.h.b16 %v251
  %v1127 = vunpack.c.l.b16 %v252
  %v1128 = vunpack.c.h.b16 %v252
  %v1129 = vunpack.c.l.b16 %v253
  %v1130 = vunpack.c.h.b16 %v253
  %v1131 = vunpack.c.l.b16 %v254
  %v1132 = vunpack.c.h.b16 %v254
  %v1133 = vunpack.c.l.b16 %v255
  %v1134 = vunpack.c.h.b16 %v255
  %v1135 = vunpack.c.l.b16 %v256
  %v1136 = vunpack.c.h.b16 %v256
  %v1137 = vunpack.c.l.b16 %v257
  %v1138 = vunpack.c.h.b16 %v257
  %v1139 = vunpack.c.l.b16 %v258
  %v1140 = vunpack.c.h.b16 %v258
  %v1141 = vunpack.c.l.b16 %v259
  %v1142 = vunpack.c.h.b16 %v259
  %v1143 = vunpack.c.l.b16 %v260
  %v1144 = vunpack.c.h.b16 %v260
  %v1145 = vunpack.c.l.b16 %v261
  %v1146 = vunpack.c.h.b16 %v261
  %v1147 = vunpack.c.l.b16 %v262
  %v1148 = vunpack.c.h.b16 %v262
  %v1149 = vunpack.c.l.b16 %v263
  %v1150 = vunpack.c.h.b16 %v263
  %v1151 = vunpack.c.l.b16 %v264
  %v1152 = vunpack.c.h.b16 %v264
  %v1153 = vunpack.c.l.b16 %v265
  %v1154 = vunpack.c.h.b16 %v265
  %v1155 = vunpack.c.l.b16 %v266
  %v1156 = vunpack.c.h.b16 %v266
  %v1157 = vunpack.c.l.b16 %v267
  %v1158 = vunpack.c.h.b16 %v267
  %v1159 = vunpack.c.l.b16 %v268
  %v1160 = vunpack.c.h.b16 %v268
  %v1161 = vunpack.c.l.b16 %v269
  %v1162 = vunpack.c.h.b16 %v269
  %v1163 = vunpack.c.l.b16 %v270
  %v1164 = vunpack.c.h.b16 %v270
  %v1165 = vunpack.c.l.b16 %v271
  %v1166 = vunpack.c.h.b16 %v271
  %v1167 = vunpack.c.l.b16 %v272
  %v1168 = vunpack.c.h.b16 %v272
  %v1169 = vunpack.c.l.b16 %v273
  %v1170 = vunpack.c.h.b16 %v273
  %v1171 = vunpack.c.l.b16 %v274
  %v1172 = vunpack.c.h.b16 %v274
  %v1173 = vunpack.c.l.b16 %v275
  %v1174 = vunpack.c.h.b16 %v275
  %v1175 = vunpack.c.l.b16 %v276
  %v1176 = vunpack.c.h.b16 %v276
  %v1177 = vunpack.c.l.b16 %v277
  %v1178 = vunpack.c.h.b16 %v277
  %v1179 = vunpack.c.l.b16 %v278
  %v1180 = vunpack.c.h.b16 %v278
  %v1181 = vunpack.c.l.b16 %v279
  %v1182 = vunpack.c.h.b16 %v279
  %v1183 = vunpack.c.l.b16 %v280
  %v1184 = vunpack.c.h.b16 %v280
  %v1185 = vunpack.c.l.b16 %v281
  %v1186 = vunpack.c.h.b16 %v281
  %v1187 = vunpack.c.l.b16 %v282
  %v1188 = vunpack.c.h.b16 %v282
  %v1189 = vunpack.c.l.b16 %v283
  %v1190 = vunpack.c.h.b16 %v283
  %v1191 = vunpack.c.l.b16 %v284
  %v1192 = vunpack.c.h.b16 %v284
  %v1193 = vunpack.c.l.b16 %v285
  %v1194 = vunpack.c.h.b16 %v285
  %v1195 = vunpack.c.l.b16 %v286
  %v1196 = vunpack.c.h.b16 %v286
  %v1197 = vunpack.c.l.b16 %v287
  %v1198 = vunpack.c.h.b16 %v287
  %v1199 = vunpack.c.l.b16 %v288
  %v1200 = vunpack.c.h.b16 %v288
  %v1201 = vunpack.c.l.b16 %v289
  %v1202 = vunpack.c.h.b16 %v289
  %v1203 = vunpack.c.l.b16 %v290
  %v1204 = vunpack.c.h.b16 %v290
  %v1205 = vunpack.c.l.b16 %v291
  %v1206 = vunpack.c.h.b16 %v291
  %v1207 = vunpack.c.l.b16 %v292
  %v1208 = vunpack.c.h.b16 %v292
  %v1209 = vunpack.c.l.b16 %v293
  %v1210 = vunpack.c.h.b16 %v293
  %v1211 = vunpack.c.l.b16 %v294
  %v1212 = vunpack.c.h.b16 %v294
  %v1213 = vunpack.c.l.b16 %v295
  %v1214 = vunpack.c.h.b16 %v295
  %v1215 = vunpack.c.l.b16 %v296
  %v1216 = vunpack.c.h.b16 %v296
  %v1217 = vunpack.c.l.b16 %v297
  %v1218 = vunpack.c.h.b16 %v297
  %v1219 = vunpack.c.l.b16 %v298
  %v1220 = vunpack.c.h.b16 %v298
  %v1221 = vunpack.c.l.b16 %v299
  %v1222 = vunpack.c.h.b16 %v299
  %v1223 = vunpack.c.l.b16 %v300
  %v1224 = vunpack.c.h.b16 %v300
  %v1225 = vunpack.c.l.b16 %v301
  %v1226 = vunpack.c.h.b16 %v301
  %v1227 = vunpack.c.l.b16 %v302
  %v1228 = vunpack.c.h.b16 %v302
  %v1229 = vunpack.c.l.b16 %v303
  %v1230 = vunpack.c.h.b16 %v303
  %v1231 = vunpack.c.l.b16 %v304
  %v1232 = vunpack.c.h.b16 %v304
  %v1233 = vpack.c.b16 %v723, %v721
  %v1234 = vpack.c.b16 %v724, %v722
  %v1235 = vpack.c.b16 %v727, %v725
  %v1236 = vpack.c.b16 %v728, %v726
  %v1237 = vpack.c.b16 %v731, %v729
  %v1238 = vpack.c.b16 %v732, %v730
  %v1239 = vpack.c.b16 %v735, %v733
  %v1240 = vpack.c.b16 %v736, %v734
  %v1241 = vpack.c.b16 %v739, %v737
  %v1242 = vpack.c.b16 %v740, %v738
  %v1243 = vpack.c.b16 %v743, %v741
  %v1244 = vpack.c.b16 %v744, %v742
  %v1245 = vpack.c.b16 %v747, %v745
  %v1246 = vpack.c.b16 %v748, %v746
  %v1247 = vpack.c.b16 %v751, %v749
  %v1248 = vpack.c.b16 %v752, %v750
  %v1249 = vpack.c.b16 %v755, %v753
  %v1250 = vpack.c.b16 %v756, %v754
  %v1251 = vpack.c.b16 %v759, %v757
  %v1252 = vpack.c.b16 %v760, %v758
  %v1253 = vpack.c.b16 %v763, %v761
  %v1254 = vpack.c.b16 %v764, %v762
  %v1255 = vpack.c.b16 %v767, %v765
  %v1256 = vpack.c.b16 %v768, %v766
  %v1257 = vpack.c.b16 %v771, %v769
  %v1258 = vpack.c.b16 %v772, %v770
  %v1259 = vpack.c.b16 %v775, %v773
  %v1260 = vpack.c.b16 %v776, %v774
  %v1261 = vpack.c.b16 %v779, %v777
  %v1262 = vpack.c.b16 %v780, %v778
  %v1263 = vpack.c.b16 %v783, %v781
  %v1264 = vpack.c.b16 %v784, %v782
  %v1265 = vpack.c.b16 %v787, %v785
  %v1266 = vpack.c.b16 %v788, %v786
  %v1267 = vpack.c.b16 %v791, %v789
  %v1268 = vpack.c.b16 %v792, %v790
  %v1269 = vpack.c.b16 %v795, %v793
  %v1270 = vpack.c.b16 %v796, %v794
  %v1271 = vpack.c.b16 %v799, %v797
  %v1272 = vpack.c.b16 %v800, %v798
  %v1273 = vpack.c.b16 %v803, %v801
  %v1274 = vpack.c.b16 %v804, %v802
  %v1275 = vpack.c.b16 %v807, %v805
  %v1276 = vpack.c.b16 %v808, %v806
  %v1277 = vpack.c.b16 %v811, %v809
  %v1278 = vpack.c.b16 %v812, %v810
  %v1279 = vpack.c.b16 %v815, %v813
  %v1280 = vpack.c.b16 %v816, %v814
  %v1281 = vpack.c.b16 %v819, %v817
  %v1282 = vpack.c.b16 %v820, %v818
  %v1283 = vpack.c.b16 %v823, %v821
  %v1284 = vpack.c.b16 %v824, %v822
  %v1285 = vpack.c.b16 %v827, %v825
  %v1286 = vpack.c.b16 %v828, %v826
  %v1287 = vpack.c.b16 %v831, %v829
  %v1288 = vpack.c.b16 %v832, %v830
  %v1289 = vpack.c.b16 %v835, %v833
  %v1290 = vpack.c.b16 %v836, %v834
  %v1291 = vpack.c.b16 %v839, %v837
  %v1292 = vpack.c.b16 %v840, %v838
  %v1293 = vpack.c.b16 %v843, %v841
  %v1294 = vpack.c.b16 %v844, %v842
  %v1295 = vpack.c.b16 %v847, %v845
  %v1296 = vpack.c.b16 %v848, %v846
  %v1297 = vpack.c.b16 %v851, %v849
  %v1298 = vpack.c.b16 %v852, %v850
  %v1299 = vpack.c.b16 %v855, %v853
  %v1300 = vpack.c.b16 %v856, %v854
  %v1301 = vpack.c.b16 %v859, %v857
  %v1302 = vpack.c.b16 %v860, %v858
  %v1303 = vpack.c.b16 %v863, %v861
  %v1304 = vpack.c.b16 %v864, %v862
  %v1305 = vpack.c.b16 %v867, %v865
  %v1306 = vpack.c.b16 %v868, %v866
  %v1307 = vpack.c.b16 %v871, %v869
  %v1308 = vpack.c.b16 %v872, %v870
  %v1309 = vpack.c.b16 %v875, %v873
  %v1310 = vpack.c.b16 %v876, %v874
  %v1311 = vpack.c.b16 %v879, %v877
  %v1312 = vpack.c.b16 %v880, %v878
  %v1313 = vpack.c.b16 %v883, %v881
  %v1314 = vpack.c.b16 %v884, %v882
  %v1315 = vpack.c.b16 %v887, %v885
  %v1316 = vpack.c.b16 %v888, %v886
  %v1317 = vpack.c.b16 %v891, %v889
  %v1318 = vpack.c.b16 %v892, %v890
  %v1319 = vpack.c.b16 %v895, %v893
  %v1320 = vpack.c.b16 %v896, %v894
  %v1321 = vpack.c.b16 %v899, %v897
  %v1322 = vpack.c.b16 %v900, %v898
  %v1323 = vpack.c.b16 %v903, %v901
  %v1324 = vpack.c.b16 %v904, %v902
  %v1325 = vpack.c.b16 %v907, %v905
  %v1326 = vpack.c.b16 %v908, %v906
  %v1327 = vpack.c.b16 %v911, %v909
  %v1328 = vpack.c.b16 %v912, %v910
  %v1329 = vpack.c.b16 %v915, %v913
  %v1330 = vpack.c.b16 %v916, %v914
  %v1331 = vpack.c.b16 %v919, %v917
  %v1332 = vpack.c.b16 %v920, %v918
  %v1333 = vpack.c.b16 %v923, %v921
  %v1334 = vpack.c.b16 %v924, %v922
  %v1335 = vpack.c.b16 %v927, %v925
  %v1336 = vpack.c.b16 %v928, %v926
  %v1337 = vpack.c.b16 %v931, %v929
  %v1338 = vpack.c.b16 %v932, %v930
  %v1339 = vpack.c.b16 %v935, %v933
  %v1340 = vpack.c.b16 %v936, %v934
  %v1341 = vpack.c.b16 %v939, %v937
  %v1342 = vpack.c.b16 %v940, %v938
  %v1343 = vpack.c.b16 %v943, %v941
  %v1344 = vpack.c.b16 %v944, %v942
  %v1345 = vpack.c.b16 %v947, %v945
  %v1346 = vpack.c.b16 %v948, %v946
  %v1347 = vpack.c.b16 %v951, %v949
  %v1348 = vpack.c.b16 %v952, %v950
  %v1349 = vpack.c.b16 %v955, %v953
  %v1350 = vpack.c.b16 %v956, %v954
  %v1351 = vpack.c.b16 %v959, %v957
  %v1352 = vpack.c.b16 %v960, %v958
  %v1353 = vpack.c.b16 %v963, %v961
  %v1354 = vpack.c.b16 %v964, %v962
  %v1355 = vpack.c.b16 %v967, %v965
  %v1356 = vpack.c.b16 %v968, %v966
  %v1357 = vpack.c.b16 %v971, %v969
  %v1358 = vpack.c.b16 %v972, %v970
  %v1359 = vpack.c.b16 %v975, %v973
  %v1360 = vpack.c.b16 %v976, %v974
  %v1361 = vpack.c.b16 %v979, %v977
  %v1362 = vpack.c.b16 %v980, %v978
  %v1363 = vpack.c.b16 %v983, %v981
  %v1364 = vpack.c.b16 %v984, %v982
  %v1365 = vpack.c.b16 %v987, %v985
  %v1366 = vpack.c.b16 %v988, %v986
  %v1367 = vpack.c.b16 %v991, %v989
  %v1368 = vpack.c.b16 %v992, %v990
  %v1369 = vpack.c.b16 %v995, %v993
  %v1370 = vpack.c.b16 %v996, %v994
  %v1371 = vpack.c.b16 %v999, %v997
  %v1372 = vpack.c.b16 %v1000, %v998
  %v1373 = vpack.c.b16 %v1003, %v1001
  %v1374 = vpack.c.b16 %v1004, %v1002
  %v1375 = vpack.c.b16 %v1007, %v1005
  %v1376 = vpack.c.b16 %v1008, %v1006
  %v1377 = vpack.c.b16 %v1011, %v1009
  %v1378 = vpack.c.b16 %v1012, %v1010
  %v1379 = vpack.c.b16 %v1015, %v1013
  %v1380 = vpack.c.b16 %v1016, %v1014
  %v1381 = vpack.c.b16 %v1019, %v1017
  %v1382 = vpack.c.b16 %v1020, %v1018
  %v1383 = vpack.c.b16 %v1023, %v1021
  %v1384 = vpack.c.b16 %v1024, %v1022
  %v1385 = vpack.c.b16 %v1027, %v1025
  %v1386 = vpack.c.b16 %v1028, %v1026
  %v1387 = vpack.c.b16 %v1031, %v1029
  %v1388 = vpack.c.b16 %v1032, %v1030
  %v1389 = vpack.c.b16 %v1035, %v1033
  %v1390 = vpack.c.b16 %v1036, %v1034
  %v1391 = vpack.c.b16 %v1039, %v1037
  %v1392 = vpack.c.b16 %v1040, %v1038
  %v1393 = vpack.c.b16 %v1043, %v1041
  %v1394 = vpack.c.b16 %v1044, %v1042
  %v1395 = vpack.c.b16 %v1047, %v1045
  %v1396 = vpack.c.b16 %v1048, %v1046
  %v1397 = vpack.c.b16 %v1051, %v1049
  %v1398 = vpack.c.b16 %v1052, %v1050
  %v1399 = vpack.c.b16 %v1055, %v1053
  %v1400 = vpack.c.b16 %v1056, %v1054
  %v1401 = vpack.c.b16 %v1059, %v1057
  %v1402 = vpack.c.b16 %v1060, %v1058
  %v1403 = vpack.c.b16 %v1063, %v1061
  %v1404 = vpack.c.b16 %v1064, %v1062
  %v1405 = vpack.c.b16 %v1067, %v1065
  %v1406 = vpack.c.b16 %v1068, %v1066
  %v1407 = vpack.c.b16 %v1071, %v1069
  %v1408 = vpack.c.b16 %v1072, %v1070
  %v1409 = vpack.c.b16 %v1075, %v1073
  %v1410 = vpack.c.b16 %v1076, %v1074
  %v1411 = vpack.c.b16 %v1079, %v1077
  %v1412 = vpack.c.b16 %v1080, %v1078
  %v1413 = vpack.c.b16 %v1083, %v1081
  %v1414 = vpack.c.b16 %v1084, %v1082
  %v1415 = vpack.c.b16 %v1087, %v1085
  %v1416 = vpack.c.b16 %v1088, %v1086
  %v1417 = vpack.c.b16 %v1091, %v1089
  %v1418 = vpack.c.b16 %v1092, %v1090
  %v1419 = vpack.c.b16 %v1095, %v1093
  %v1420 = vpack.c.b16 %v1096, %v1094
  %v1421 = vpack.c.b16 %v1099, %v1097
  %v1422 = vpack.c.b16 %v1100, %v1098
  %v1423 = vpack.c.b16 %v1103, %v1101
  %v1424 = vpack.c.b16 %v1104, %v1102
  %v1425 = vpack.c.b16 %v1107, %v1105
  %v1426 = vpack.c.b16 %v1108, %v1106
  %v1427 = vpack.c.b16 %v1111, %v1109
  %v1428 = vpack.c.b16 %v1112, %v1110
  %v1429 = vpack.c.b16 %v1115, %v1113
  %v1430 = vpack.c.b16 %v1116, %v1114
  %v1431 = vpack.c.b16 %v1119, %v1117
  %v1432 = vpack.c.b16 %v1120, %v1118
  %v1433 = vpack.c.b16 %v1123, %v1121
  %v1434 = vpack.c.b16 %v1124, %v1122
  %v1435 = vpack.c.b16 %v1127, %v1125
  %v1436 = vpack.c.b16 %v1128, %v1126
  %v1437 = vpack.c.b16 %v1131, %v1129
  %v1438 = vpack.c.b16 %v1132, %v1130
  %v1439 = vpack.c.b16 %v1135, %v1133
  %v1440 = vpack.c.b16 %v1136, %v1134
  %v1441 = vpack.c.b16 %v1139, %v1137
  %v1442 = vpack.c.b16 %v1140, %v1138
  %v1443 = vpack.c.b16 %v1143, %v1141
  %v1444 = vpack.c.b16 %v1144, %v1142
  %v1445 = vpack.c.b16 %v1147, %v1145
  %v1446 = vpack.c.b16 %v1148, %v1146
  %v1447 = vpack.c.b16 %v1151, %v1149
  %v1448 = vpack.c.b16 %v1152, %v1150
  %v1449 = vpack.c.b16 %v1155, %v1153
  %v1450 = vpack.c.b16 %v1156, %v1154
  %v1451 = vpack.c.b16 %v1159, %v1157
  %v1452 = vpack.c.b16 %v1160, %v1158
  %v1453 = vpack.c.b16 %v1163, %v1161
  %v1454 = vpack.c.b16 %v1164, %v1162
  %v1455 = vpack.c.b16 %v1167, %v1165
  %v1456 = vpack.c.b16 %v1168, %v1166
  %v1457 = vpack.c.b16 %v1171, %v1169
  %v1458 = vpack.c.b16 %v1172, %v1170
  %v1459 = vpack.c.b16 %v1175, %v1173
  %v1460 = vpack.c.b16 %v1176, %v1174
  %v1461 = vpack.c.b16 %v1179, %v1177
  %v1462 = vpack.c.b16 %v1180, %v1178
  %v1463 = vpack.c.b16 %v1183, %v1181
  %v1464 = vpack.c.b16 %v1184, %v1182
  %v1465 = vpack.c.b16 %v1187, %v1185
  %v1466 = vpack.c.b16 %v1188, %v1186
  %v1467 = vpack.c.b16 %v1191, %v1189
  %v1468 = vpack.c.b16 %v1192, %v1190
  %v1469 = vpack.c.b16 %v1195, %v1193
  %v1470 = vpack.c.b16 %v1196, %v1194
  %v1471 = vpack.c.b16 %v1199, %v1197
  %v1472 = vpack.c.b16 %v1200, %v1198
  %v1473 = vpack.c.b16 %v1203, %v1201
  %v1474 = vpack.c.b16 %v1204, %v1202
  %v1475 = vpack.c.b16 %v1207, %v1205
  %v1476 = vpack.c.b16 %v1208, %v1206
  %v1477 = vpack.c.b16 %v1211, %v1209
  %v1478 = vpack.c.b16 %v1212, %v1210
  %v1479 = vpack.c.b16 %v1215, %v1213
  %v1480 = vpack.c.b16 %v1216, %v1214
  %v1481 = vpack.c.b16 %v1219, %v1217
  %v1482 = vpack.c.b16 %v1220, %v1218
  %v1483 = vpack.c.b16 %v1223, %v1221
  %v1484 = vpack.c.b16 %v1224, %v1222
  %v1485 = vpack.c.b16 %v1227, %v1225
  %v1486 = vpack.c.b16 %v1228, %v1226
  %v1487 = vpack.c.b16 %v1231, %v1229
  %v1488 = vpack.c.b16 %v1232, %v1230
  %1745 = vmatprep.subr.bf16.mxu0 %v1248
  %1746 = vmatpush1.bf16.msra.mxu0 %v1247
  %1747 = vmatprep.subr.bf16.mxu0 %v1246
  %1748 = vmatpush1.bf16.msra.mxu0 %v1245
  %1749 = vmatprep.subr.bf16.mxu0 %v1244
  %1750 = vmatpush1.bf16.msra.mxu0 %v1243
  %1751 = vmatprep.subr.bf16.mxu0 %v1242
  %1752 = vmatpush1.bf16.msra.mxu0 %v1241
  %1753 = vmatprep.subr.bf16.mxu0 %v1240
  %1754 = vmatpush1.bf16.msra.mxu0 %v1239
  %1755 = vmatprep.subr.bf16.mxu0 %v1238
  %1756 = vmatpush1.bf16.msra.mxu0 %v1237
  %1757 = vmatprep.subr.bf16.mxu0 %v1236
  %1758 = vmatpush1.bf16.msra.mxu0 %v1235
  %1759 = vmatprep.subr.bf16.mxu0 %v1234
  %1760 = vmatpush1.bf16.msra.mxu0 %v1233
  %1761 = vmatprep.subr.bf16.mxu0 %v1264
  %1762 = vmatpush2.bf16.msra.mxu0 %v1263
  %1763 = vmatprep.subr.bf16.mxu0 %v1262
  %1764 = vmatpush2.bf16.msra.mxu0 %v1261
  %1765 = vmatprep.subr.bf16.mxu0 %v1260
  %1766 = vmatpush2.bf16.msra.mxu0 %v1259
  %1767 = vmatprep.subr.bf16.mxu0 %v1258
  %1768 = vmatpush2.bf16.msra.mxu0 %v1257
  %1769 = vmatprep.subr.bf16.mxu0 %v1256
  %1770 = vmatpush2.bf16.msra.mxu0 %v1255
  %1771 = vmatprep.subr.bf16.mxu0 %v1254
  %1772 = vmatpush2.bf16.msra.mxu0 %v1253
  %1773 = vmatprep.subr.bf16.mxu0 %v1252
  %1774 = vmatpush2.bf16.msra.mxu0 %v1251
  %1775 = vmatprep.subr.bf16.mxu0 %v1250
  %1776 = vmatpush2.bf16.msra.mxu0 %v1249
  %1777 = vmatprep.mubr.bf16.mxu0 %v402
  %1778 = vmatmul.mubr.bf16.gmra.mxu0 %v401
  %v1779 = vpop.f32.mrf.mxu0
  %v1780 = vadd.f32 0.0, %v1779
  %v1781 = vpop.f32.mrf.mxu0
  %v1782 = vadd.f32 0.0, %v1781
  %v1783 = vpop.f32.mrf.mxu0
  %v1784 = vadd.f32 0.0, %v1783
  %v1785 = vpop.f32.mrf.mxu0
  %v1786 = vadd.f32 0.0, %v1785
  %1787 = vmatprep.mubr.bf16.mxu0 %v418
  %1788 = vmatmul.mubr.bf16.gmra.mxu0 %v417
  %v1789 = vpop.f32.mrf.mxu0
  %v1790 = vadd.f32 0.0, %v1789
  %v1791 = vpop.f32.mrf.mxu0
  %v1792 = vadd.f32 0.0, %v1791
  %v1793 = vpop.f32.mrf.mxu0
  %v1794 = vadd.f32 0.0, %v1793
  %v1795 = vpop.f32.mrf.mxu0
  %v1796 = vadd.f32 0.0, %v1795
  %1797 = vdwg.mxu0
  %1798 = vmatprep.subr.bf16.mxu0 %v1280
  %1799 = vmatpush1.bf16.msra.mxu0 %v1279
  %1800 = vmatprep.subr.bf16.mxu0 %v1278
  %1801 = vmatpush1.bf16.msra.mxu0 %v1277
  %1802 = vmatprep.subr.bf16.mxu0 %v1276
  %1803 = vmatpush1.bf16.msra.mxu0 %v1275
  %1804 = vmatprep.subr.bf16.mxu0 %v1274
  %1805 = vmatpush1.bf16.msra.mxu0 %v1273
  %1806 = vmatprep.subr.bf16.mxu0 %v1272
  %1807 = vmatpush1.bf16.msra.mxu0 %v1271
  %1808 = vmatprep.subr.bf16.mxu0 %v1270
  %1809 = vmatpush1.bf16.msra.mxu0 %v1269
  %1810 = vmatprep.subr.bf16.mxu0 %v1268
  %1811 = vmatpush1.bf16.msra.mxu0 %v1267
  %1812 = vmatprep.subr.bf16.mxu0 %v1266
  %1813 = vmatpush1.bf16.msra.mxu0 %v1265
  %1814 = vmatprep.subr.bf16.mxu0 %v1296
  %1815 = vmatpush2.bf16.msra.mxu0 %v1295
  %1816 = vmatprep.subr.bf16.mxu0 %v1294
  %1817 = vmatpush2.bf16.msra.mxu0 %v1293
  %1818 = vmatprep.subr.bf16.mxu0 %v1292
  %1819 = vmatpush2.bf16.msra.mxu0 %v1291
  %1820 = vmatprep.subr.bf16.mxu0 %v1290
  %1821 = vmatpush2.bf16.msra.mxu0 %v1289
  %1822 = vmatprep.subr.bf16.mxu0 %v1288
  %1823 = vmatpush2.bf16.msra.mxu0 %v1287
  %1824 = vmatprep.subr.bf16.mxu0 %v1286
  %1825 = vmatpush2.bf16.msra.mxu0 %v1285
  %1826 = vmatprep.subr.bf16.mxu0 %v1284
  %1827 = vmatpush2.bf16.msra.mxu0 %v1283
  %1828 = vmatprep.subr.bf16.mxu0 %v1282
  %1829 = vmatpush2.bf16.msra.mxu0 %v1281
  %1830 = vmatprep.mubr.bf16.mxu0 %v404
  %1831 = vmatmul.mubr.bf16.gmra.mxu0 %v403
  %v1832 = vpop.f32.mrf.mxu0
  %v1833 = vadd.f32 %v1780, %v1832
  %v1834 = vpop.f32.mrf.mxu0
  %v1835 = vadd.f32 %v1782, %v1834
  %v1836 = vpop.f32.mrf.mxu0
  %v1837 = vadd.f32 %v1784, %v1836
  %v1838 = vpop.f32.mrf.mxu0
  %v1839 = vadd.f32 %v1786, %v1838
  %1840 = vmatprep.mubr.bf16.mxu0 %v420
  %1841 = vmatmul.mubr.bf16.gmra.mxu0 %v419
  %v1842 = vpop.f32.mrf.mxu0
  %v1843 = vadd.f32 %v1790, %v1842
  %v1844 = vpop.f32.mrf.mxu0
  %v1845 = vadd.f32 %v1792, %v1844
  %v1846 = vpop.f32.mrf.mxu0
  %v1847 = vadd.f32 %v1794, %v1846
  %v1848 = vpop.f32.mrf.mxu0
  %v1849 = vadd.f32 %v1796, %v1848
  %1850 = vdwg.mxu0
  %1851 = vmatprep.subr.bf16.mxu0 %v1312
  %1852 = vmatpush1.bf16.msra.mxu0 %v1311
  %1853 = vmatprep.subr.bf16.mxu0 %v1310
  %1854 = vmatpush1.bf16.msra.mxu0 %v1309
  %1855 = vmatprep.subr.bf16.mxu0 %v1308
  %1856 = vmatpush1.bf16.msra.mxu0 %v1307
  %1857 = vmatprep.subr.bf16.mxu0 %v1306
  %1858 = vmatpush1.bf16.msra.mxu0 %v1305
  %1859 = vmatprep.subr.bf16.mxu0 %v1304
  %1860 = vmatpush1.bf16.msra.mxu0 %v1303
  %1861 = vmatprep.subr.bf16.mxu0 %v1302
  %1862 = vmatpush1.bf16.msra.mxu0 %v1301
  %1863 = vmatprep.subr.bf16.mxu0 %v1300
  %1864 = vmatpush1.bf16.msra.mxu0 %v1299
  %1865 = vmatprep.subr.bf16.mxu0 %v1298
  %1866 = vmatpush1.bf16.msra.mxu0 %v1297
  %1867 = vmatprep.subr.bf16.mxu0 %v1328
  %1868 = vmatpush2.bf16.msra.mxu0 %v1327
  %1869 = vmatprep.subr.bf16.mxu0 %v1326
  %1870 = vmatpush2.bf16.msra.mxu0 %v1325
  %1871 = vmatprep.subr.bf16.mxu0 %v1324
  %1872 = vmatpush2.bf16.msra.mxu0 %v1323
  %1873 = vmatprep.subr.bf16.mxu0 %v1322
  %1874 = vmatpush2.bf16.msra.mxu0 %v1321
  %1875 = vmatprep.subr.bf16.mxu0 %v1320
  %1876 = vmatpush2.bf16.msra.mxu0 %v1319
  %1877 = vmatprep.subr.bf16.mxu0 %v1318
  %1878 = vmatpush2.bf16.msra.mxu0 %v1317
  %1879 = vmatprep.subr.bf16.mxu0 %v1316
  %1880 = vmatpush2.bf16.msra.mxu0 %v1315
  %1881 = vmatprep.subr.bf16.mxu0 %v1314
  %1882 = vmatpush2.bf16.msra.mxu0 %v1313
  %1883 = vmatprep.mubr.bf16.mxu0 %v406
  %1884 = vmatmul.mubr.bf16.gmra.mxu0 %v405
  %v1885 = vpop.f32.mrf.mxu0
  %v1886 = vadd.f32 %v1833, %v1885
  %v1887 = vpop.f32.mrf.mxu0
  %v1888 = vadd.f32 %v1835, %v1887
  %v1889 = vpop.f32.mrf.mxu0
  %v1890 = vadd.f32 %v1837, %v1889
  %v1891 = vpop.f32.mrf.mxu0
  %v1892 = vadd.f32 %v1839, %v1891
  %1893 = vmatprep.mubr.bf16.mxu0 %v422
  %1894 = vmatmul.mubr.bf16.gmra.mxu0 %v421
  %v1895 = vpop.f32.mrf.mxu0
  %v1896 = vadd.f32 %v1843, %v1895
  %v1897 = vpop.f32.mrf.mxu0
  %v1898 = vadd.f32 %v1845, %v1897
  %v1899 = vpop.f32.mrf.mxu0
  %v1900 = vadd.f32 %v1847, %v1899
  %v1901 = vpop.f32.mrf.mxu0
  %v1902 = vadd.f32 %v1849, %v1901
  %1903 = vdwg.mxu0
  %1904 = vmatprep.subr.bf16.mxu0 %v1344
  %1905 = vmatpush1.bf16.msra.mxu0 %v1343
  %1906 = vmatprep.subr.bf16.mxu0 %v1342
  %1907 = vmatpush1.bf16.msra.mxu0 %v1341
  %1908 = vmatprep.subr.bf16.mxu0 %v1340
  %1909 = vmatpush1.bf16.msra.mxu0 %v1339
  %1910 = vmatprep.subr.bf16.mxu0 %v1338
  %1911 = vmatpush1.bf16.msra.mxu0 %v1337
  %1912 = vmatprep.subr.bf16.mxu0 %v1336
  %1913 = vmatpush1.bf16.msra.mxu0 %v1335
  %1914 = vmatprep.subr.bf16.mxu0 %v1334
  %1915 = vmatpush1.bf16.msra.mxu0 %v1333
  %1916 = vmatprep.subr.bf16.mxu0 %v1332
  %1917 = vmatpush1.bf16.msra.mxu0 %v1331
  %1918 = vmatprep.subr.bf16.mxu0 %v1330
  %1919 = vmatpush1.bf16.msra.mxu0 %v1329
  %1920 = vmatprep.subr.bf16.mxu0 %v1360
  %1921 = vmatpush2.bf16.msra.mxu0 %v1359
  %1922 = vmatprep.subr.bf16.mxu0 %v1358
  %1923 = vmatpush2.bf16.msra.mxu0 %v1357
  %1924 = vmatprep.subr.bf16.mxu0 %v1356
  %1925 = vmatpush2.bf16.msra.mxu0 %v1355
  %1926 = vmatprep.subr.bf16.mxu0 %v1354
  %1927 = vmatpush2.bf16.msra.mxu0 %v1353
  %1928 = vmatprep.subr.bf16.mxu0 %v1352
  %1929 = vmatpush2.bf16.msra.mxu0 %v1351
  %1930 = vmatprep.subr.bf16.mxu0 %v1350
  %1931 = vmatpush2.bf16.msra.mxu0 %v1349
  %1932 = vmatprep.subr.bf16.mxu0 %v1348
  %1933 = vmatpush2.bf16.msra.mxu0 %v1347
  %1934 = vmatprep.subr.bf16.mxu0 %v1346
  %1935 = vmatpush2.bf16.msra.mxu0 %v1345
  %1936 = vmatprep.mubr.bf16.mxu0 %v408
  %1937 = vmatmul.mubr.bf16.gmra.mxu0 %v407
  %v1938 = vpop.f32.mrf.mxu0
  %v1939 = vadd.f32 %v1886, %v1938
  %v1940 = vpop.f32.mrf.mxu0
  %v1941 = vadd.f32 %v1888, %v1940
  %v1942 = vpop.f32.mrf.mxu0
  %v1943 = vadd.f32 %v1890, %v1942
  %v1944 = vpop.f32.mrf.mxu0
  %v1945 = vadd.f32 %v1892, %v1944
  %1946 = vmatprep.mubr.bf16.mxu0 %v424
  %1947 = vmatmul.mubr.bf16.gmra.mxu0 %v423
  %v1948 = vpop.f32.mrf.mxu0
  %v1949 = vadd.f32 %v1896, %v1948
  %v1950 = vpop.f32.mrf.mxu0
  %v1951 = vadd.f32 %v1898, %v1950
  %v1952 = vpop.f32.mrf.mxu0
  %v1953 = vadd.f32 %v1900, %v1952
  %v1954 = vpop.f32.mrf.mxu0
  %v1955 = vadd.f32 %v1902, %v1954
  %1956 = vdwg.mxu0
  %1957 = vmatprep.subr.bf16.mxu0 %v1376
  %1958 = vmatpush1.bf16.msra.mxu0 %v1375
  %1959 = vmatprep.subr.bf16.mxu0 %v1374
  %1960 = vmatpush1.bf16.msra.mxu0 %v1373
  %1961 = vmatprep.subr.bf16.mxu0 %v1372
  %1962 = vmatpush1.bf16.msra.mxu0 %v1371
  %1963 = vmatprep.subr.bf16.mxu0 %v1370
  %1964 = vmatpush1.bf16.msra.mxu0 %v1369
  %1965 = vmatprep.subr.bf16.mxu0 %v1368
  %1966 = vmatpush1.bf16.msra.mxu0 %v1367
  %1967 = vmatprep.subr.bf16.mxu0 %v1366
  %1968 = vmatpush1.bf16.msra.mxu0 %v1365
  %1969 = vmatprep.subr.bf16.mxu0 %v1364
  %1970 = vmatpush1.bf16.msra.mxu0 %v1363
  %1971 = vmatprep.subr.bf16.mxu0 %v1362
  %1972 = vmatpush1.bf16.msra.mxu0 %v1361
  %1973 = vmatprep.subr.bf16.mxu0 %v1392
  %1974 = vmatpush2.bf16.msra.mxu0 %v1391
  %1975 = vmatprep.subr.bf16.mxu0 %v1390
  %1976 = vmatpush2.bf16.msra.mxu0 %v1389
  %1977 = vmatprep.subr.bf16.mxu0 %v1388
  %1978 = vmatpush2.bf16.msra.mxu0 %v1387
  %1979 = vmatprep.subr.bf16.mxu0 %v1386
  %1980 = vmatpush2.bf16.msra.mxu0 %v1385
  %1981 = vmatprep.subr.bf16.mxu0 %v1384
  %1982 = vmatpush2.bf16.msra.mxu0 %v1383
  %1983 = vmatprep.subr.bf16.mxu0 %v1382
  %1984 = vmatpush2.bf16.msra.mxu0 %v1381
  %1985 = vmatprep.subr.bf16.mxu0 %v1380
  %1986 = vmatpush2.bf16.msra.mxu0 %v1379
  %1987 = vmatprep.subr.bf16.mxu0 %v1378
  %1988 = vmatpush2.bf16.msra.mxu0 %v1377
  %1989 = vmatprep.mubr.bf16.mxu0 %v410
  %1990 = vmatmul.mubr.bf16.gmra.mxu0 %v409
  %v1991 = vpop.f32.mrf.mxu0
  %v1992 = vadd.f32 %v1939, %v1991
  %v1993 = vpop.f32.mrf.mxu0
  %v1994 = vadd.f32 %v1941, %v1993
  %v1995 = vpop.f32.mrf.mxu0
  %v1996 = vadd.f32 %v1943, %v1995
  %v1997 = vpop.f32.mrf.mxu0
  %v1998 = vadd.f32 %v1945, %v1997
  %1999 = vmatprep.mubr.bf16.mxu0 %v426
  %2000 = vmatmul.mubr.bf16.gmra.mxu0 %v425
  %v2001 = vpop.f32.mrf.mxu0
  %v2002 = vadd.f32 %v1949, %v2001
  %v2003 = vpop.f32.mrf.mxu0
  %v2004 = vadd.f32 %v1951, %v2003
  %v2005 = vpop.f32.mrf.mxu0
  %v2006 = vadd.f32 %v1953, %v2005
  %v2007 = vpop.f32.mrf.mxu0
  %v2008 = vadd.f32 %v1955, %v2007
  %2009 = vdwg.mxu0
  %2010 = vmatprep.subr.bf16.mxu0 %v1408
  %2011 = vmatpush1.bf16.msra.mxu0 %v1407
  %2012 = vmatprep.subr.bf16.mxu0 %v1406
  %2013 = vmatpush1.bf16.msra.mxu0 %v1405
  %2014 = vmatprep.subr.bf16.mxu0 %v1404
  %2015 = vmatpush1.bf16.msra.mxu0 %v1403
  %2016 = vmatprep.subr.bf16.mxu0 %v1402
  %2017 = vmatpush1.bf16.msra.mxu0 %v1401
  %2018 = vmatprep.subr.bf16.mxu0 %v1400
  %2019 = vmatpush1.bf16.msra.mxu0 %v1399
  %2020 = vmatprep.subr.bf16.mxu0 %v1398
  %2021 = vmatpush1.bf16.msra.mxu0 %v1397
  %2022 = vmatprep.subr.bf16.mxu0 %v1396
  %2023 = vmatpush1.bf16.msra.mxu0 %v1395
  %2024 = vmatprep.subr.bf16.mxu0 %v1394
  %2025 = vmatpush1.bf16.msra.mxu0 %v1393
  %2026 = vmatprep.subr.bf16.mxu0 %v1424
  %2027 = vmatpush2.bf16.msra.mxu0 %v1423
  %2028 = vmatprep.subr.bf16.mxu0 %v1422
  %2029 = vmatpush2.bf16.msra.mxu0 %v1421
  %2030 = vmatprep.subr.bf16.mxu0 %v1420
  %2031 = vmatpush2.bf16.msra.mxu0 %v1419
  %2032 = vmatprep.subr.bf16.mxu0 %v1418
  %2033 = vmatpush2.bf16.msra.mxu0 %v1417
  %2034 = vmatprep.subr.bf16.mxu0 %v1416
  %2035 = vmatpush2.bf16.msra.mxu0 %v1415
  %2036 = vmatprep.subr.bf16.mxu0 %v1414
  %2037 = vmatpush2.bf16.msra.mxu0 %v1413
  %2038 = vmatprep.subr.bf16.mxu0 %v1412
  %2039 = vmatpush2.bf16.msra.mxu0 %v1411
  %2040 = vmatprep.subr.bf16.mxu0 %v1410
  %2041 = vmatpush2.bf16.msra.mxu0 %v1409
  %2042 = vmatprep.mubr.bf16.mxu0 %v412
  %2043 = vmatmul.mubr.bf16.gmra.mxu0 %v411
  %v2044 = vpop.f32.mrf.mxu0
  %v2045 = vadd.f32 %v1992, %v2044
  %v2046 = vpop.f32.mrf.mxu0
  %v2047 = vadd.f32 %v1994, %v2046
  %v2048 = vpop.f32.mrf.mxu0
  %v2049 = vadd.f32 %v1996, %v2048
  %v2050 = vpop.f32.mrf.mxu0
  %v2051 = vadd.f32 %v1998, %v2050
  %2052 = vmatprep.mubr.bf16.mxu0 %v428
  %2053 = vmatmul.mubr.bf16.gmra.mxu0 %v427
  %v2054 = vpop.f32.mrf.mxu0
  %v2055 = vadd.f32 %v2002, %v2054
  %v2056 = vpop.f32.mrf.mxu0
  %v2057 = vadd.f32 %v2004, %v2056
  %v2058 = vpop.f32.mrf.mxu0
  %v2059 = vadd.f32 %v2006, %v2058
  %v2060 = vpop.f32.mrf.mxu0
  %v2061 = vadd.f32 %v2008, %v2060
  %2062 = vdwg.mxu0
  %2063 = vmatprep.subr.bf16.mxu0 %v1440
  %2064 = vmatpush1.bf16.msra.mxu0 %v1439
  %2065 = vmatprep.subr.bf16.mxu0 %v1438
  %2066 = vmatpush1.bf16.msra.mxu0 %v1437
  %2067 = vmatprep.subr.bf16.mxu0 %v1436
  %2068 = vmatpush1.bf16.msra.mxu0 %v1435
  %2069 = vmatprep.subr.bf16.mxu0 %v1434
  %2070 = vmatpush1.bf16.msra.mxu0 %v1433
  %2071 = vmatprep.subr.bf16.mxu0 %v1432
  %2072 = vmatpush1.bf16.msra.mxu0 %v1431
  %2073 = vmatprep.subr.bf16.mxu0 %v1430
  %2074 = vmatpush1.bf16.msra.mxu0 %v1429
  %2075 = vmatprep.subr.bf16.mxu0 %v1428
  %2076 = vmatpush1.bf16.msra.mxu0 %v1427
  %2077 = vmatprep.subr.bf16.mxu0 %v1426
  %2078 = vmatpush1.bf16.msra.mxu0 %v1425
  %2079 = vmatprep.subr.bf16.mxu0 %v1456
  %2080 = vmatpush2.bf16.msra.mxu0 %v1455
  %2081 = vmatprep.subr.bf16.mxu0 %v1454
  %2082 = vmatpush2.bf16.msra.mxu0 %v1453
  %2083 = vmatprep.subr.bf16.mxu0 %v1452
  %2084 = vmatpush2.bf16.msra.mxu0 %v1451
  %2085 = vmatprep.subr.bf16.mxu0 %v1450
  %2086 = vmatpush2.bf16.msra.mxu0 %v1449
  %2087 = vmatprep.subr.bf16.mxu0 %v1448
  %2088 = vmatpush2.bf16.msra.mxu0 %v1447
  %2089 = vmatprep.subr.bf16.mxu0 %v1446
  %2090 = vmatpush2.bf16.msra.mxu0 %v1445
  %2091 = vmatprep.subr.bf16.mxu0 %v1444
  %2092 = vmatpush2.bf16.msra.mxu0 %v1443
  %2093 = vmatprep.subr.bf16.mxu0 %v1442
  %2094 = vmatpush2.bf16.msra.mxu0 %v1441
  %2095 = vmatprep.mubr.bf16.mxu0 %v414
  %2096 = vmatmul.mubr.bf16.gmra.mxu0 %v413
  %v2097 = vpop.f32.mrf.mxu0
  %v2098 = vadd.f32 %v2045, %v2097
  %v2099 = vpop.f32.mrf.mxu0
  %v2100 = vadd.f32 %v2047, %v2099
  %v2101 = vpop.f32.mrf.mxu0
  %v2102 = vadd.f32 %v2049, %v2101
  %v2103 = vpop.f32.mrf.mxu0
  %v2104 = vadd.f32 %v2051, %v2103
  %2105 = vmatprep.mubr.bf16.mxu0 %v430
  %2106 = vmatmul.mubr.bf16.gmra.mxu0 %v429
  %v2107 = vpop.f32.mrf.mxu0
  %v2108 = vadd.f32 %v2055, %v2107
  %v2109 = vpop.f32.mrf.mxu0
  %v2110 = vadd.f32 %v2057, %v2109
  %v2111 = vpop.f32.mrf.mxu0
  %v2112 = vadd.f32 %v2059, %v2111
  %v2113 = vpop.f32.mrf.mxu0
  %v2114 = vadd.f32 %v2061, %v2113
  %2115 = vdwg.mxu0
  %2116 = vmatprep.subr.bf16.mxu0 %v1472
  %2117 = vmatpush1.bf16.msra.mxu0 %v1471
  %2118 = vmatprep.subr.bf16.mxu0 %v1470
  %2119 = vmatpush1.bf16.msra.mxu0 %v1469
  %2120 = vmatprep.subr.bf16.mxu0 %v1468
  %2121 = vmatpush1.bf16.msra.mxu0 %v1467
  %2122 = vmatprep.subr.bf16.mxu0 %v1466
  %2123 = vmatpush1.bf16.msra.mxu0 %v1465
  %2124 = vmatprep.subr.bf16.mxu0 %v1464
  %2125 = vmatpush1.bf16.msra.mxu0 %v1463
  %2126 = vmatprep.subr.bf16.mxu0 %v1462
  %2127 = vmatpush1.bf16.msra.mxu0 %v1461
  %2128 = vmatprep.subr.bf16.mxu0 %v1460
  %2129 = vmatpush1.bf16.msra.mxu0 %v1459
  %2130 = vmatprep.subr.bf16.mxu0 %v1458
  %2131 = vmatpush1.bf16.msra.mxu0 %v1457
  %2132 = vmatprep.subr.bf16.mxu0 %v1488
  %2133 = vmatpush2.bf16.msra.mxu0 %v1487
  %2134 = vmatprep.subr.bf16.mxu0 %v1486
  %2135 = vmatpush2.bf16.msra.mxu0 %v1485
  %2136 = vmatprep.subr.bf16.mxu0 %v1484
  %2137 = vmatpush2.bf16.msra.mxu0 %v1483
  %2138 = vmatprep.subr.bf16.mxu0 %v1482
  %2139 = vmatpush2.bf16.msra.mxu0 %v1481
  %2140 = vmatprep.subr.bf16.mxu0 %v1480
  %2141 = vmatpush2.bf16.msra.mxu0 %v1479
  %2142 = vmatprep.subr.bf16.mxu0 %v1478
  %2143 = vmatpush2.bf16.msra.mxu0 %v1477
  %2144 = vmatprep.subr.bf16.mxu0 %v1476
  %2145 = vmatpush2.bf16.msra.mxu0 %v1475
  %2146 = vmatprep.subr.bf16.mxu0 %v1474
  %2147 = vmatpush2.bf16.msra.mxu0 %v1473
  %2148 = vmatprep.mubr.bf16.mxu0 %v416
  %2149 = vmatmul.mubr.bf16.gmra.mxu0 %v415
  %v2150 = vpop.f32.mrf.mxu0
  %v2151 = vadd.f32 %v2098, %v2150
  %v2152 = vpop.f32.mrf.mxu0
  %v2153 = vadd.f32 %v2100, %v2152
  %v2154 = vpop.f32.mrf.mxu0
  %v2155 = vadd.f32 %v2102, %v2154
  %v2156 = vpop.f32.mrf.mxu0
  %v2157 = vadd.f32 %v2104, %v2156
  %2158 = vmatprep.mubr.bf16.mxu0 %v432
  %2159 = vmatmul.mubr.bf16.gmra.mxu0 %v431
  %v2160 = vpop.f32.mrf.mxu0
  %v2161 = vadd.f32 %v2108, %v2160
  %v2162 = vpop.f32.mrf.mxu0
  %v2163 = vadd.f32 %v2110, %v2162
  %v2164 = vpop.f32.mrf.mxu0
  %v2165 = vadd.f32 %v2112, %v2164
  %v2166 = vpop.f32.mrf.mxu0
  %v2167 = vadd.f32 %v2114, %v2166
  %2168 = vdwg.mxu0
  %v2169 = vadd.f32 %v2151, %v2155
  %v2170 = vadd.f32 %v2169, %v2161
  %v2171 = vadd.f32 %v2170, %v2165
  %v2172 = vrot.slane %v2171, 4
  %v2173 = vadd.f32 %v2171, %v2172
  %v2174 = vrot.slane %v2173, 2
  %v2175 = vadd.f32 %v2173, %v2174
  %v2176 = vrot.slane %v2175, 1
  %v2177 = vadd.f32 %v2175, %v2176
  %v2178 = vadd.f32 %v2153, %v2157
  %v2179 = vadd.f32 %v2178, %v2163
  %v2180 = vadd.f32 %v2179, %v2167
  %v2181 = vrot.slane %v2180, 4
  %v2182 = vadd.f32 %v2180, %v2181
  %v2183 = vrot.slane %v2182, 2
  %v2184 = vadd.f32 %v2182, %v2183
  %v2185 = vrot.slane %v2184, 1
  %v2186 = vadd.f32 %v2184, %v2185
  %v2187 = vmul.f32 %v2177, 0.055555556
  %v2188 = vmul.f32 %v2186, 0.055555556
  %v2189 = vmul.f32 %v2151, %v2151
  %v2190 = vmul.f32 %v2153, %v2153
  %v2191 = vmul.f32 %v2155, %v2155
  %v2192 = vmul.f32 %v2157, %v2157
  %v2193 = vmul.f32 %v2161, %v2161
  %v2194 = vmul.f32 %v2163, %v2163
  %v2195 = vmul.f32 %v2165, %v2165
  %v2196 = vmul.f32 %v2167, %v2167
  %v2197 = vadd.f32 %v2189, %v2191
  %v2198 = vadd.f32 %v2197, %v2193
  %v2199 = vadd.f32 %v2198, %v2195
  %v2200 = vrot.slane %v2199, 4
  %v2201 = vadd.f32 %v2199, %v2200
  %v2202 = vrot.slane %v2201, 2
  %v2203 = vadd.f32 %v2201, %v2202
  %v2204 = vrot.slane %v2203, 1
  %v2205 = vadd.f32 %v2203, %v2204
  %v2206 = vadd.f32 %v2190, %v2192
  %v2207 = vadd.f32 %v2206, %v2194
  %v2208 = vadd.f32 %v2207, %v2196
  %v2209 = vrot.slane %v2208, 4
  %v2210 = vadd.f32 %v2208, %v2209
  %v2211 = vrot.slane %v2210, 2
  %v2212 = vadd.f32 %v2210, %v2211
  %v2213 = vrot.slane %v2212, 1
  %v2214 = vadd.f32 %v2212, %v2213
  %v2215 = vmul.f32 %v2205, 0.055555556
  %v2216 = vmul.f32 %v2214, 0.055555556
  %v2217 = vmul.f32 %v2187, %v2187
  %v2218 = vmul.f32 %v2188, %v2188
  %v2219 = vsub.f32 %v2215, %v2217
  %v2220 = vsub.f32 %v2216, %v2218
  %v2221 = vld [vmem:[%s2] sm:$0x3]
  %v2222 = vadd.f32 %v2219, 1e-05
  %v2223 = vadd.f32 %v2220, 1e-05
  %v2224 = vrsqrt.pop %v2222
  %v2225 = vrsqrt.pop %v2223
  %v2228 = vcombine.low %v2224, %v2225
  %v2230 = vunpack.c.l.s4 1966171168
  %v2231 = vunpack.c.0.s8 %v2230
  %v2232 = vlaneseq
  %v2233 = vshrl.u32 %v2232, 7
  %v2234 = vsub.s32 %v2231, %v2233
  %v2235 = vrot.slane %v2228, %v2234
  %v2237 = vunpack.c.l.s4 1966171168
  %v2238 = vunpack.c.0.s8 %v2237
  %v2239 = vlaneseq
  %v2240 = vshrl.u32 %v2239, 7
  %v2241 = vsub.s32 %v2238, %v2240
  %v2242 = vrot.slane %v2235, %v2241
  %v2244 = vmul.f32 %v2221, %v2242
  %v2245 = vld [vmem:[%s3] sm:$0x3]
  %v2247 = vlaneseq
  %v2248 = vshrl.u32 %v2247, 7
  %v2249 = vsub.s32 0, %v2248
  %v2250 = vrot.slane %v2244, %v2249
  %v2251 = vlaneseq
  %v2252 = vshrl.u32 %v2251, 7
  %v2253 = vsub.s32 1, %v2252
  %v2254 = vrot.slane %v2244, %v2253
  %v2257 = vmul.f32 %v2187, %v2250
  %v2258 = vmul.f32 %v2188, %v2254
  %v2261 = vcombine.low %v2257, %v2258
  %v2263 = vunpack.c.l.s4 1966171168
  %v2264 = vunpack.c.0.s8 %v2263
  %v2265 = vlaneseq
  %v2266 = vshrl.u32 %v2265, 7
  %v2267 = vsub.s32 %v2264, %v2266
  %v2268 = vrot.slane %v2261, %v2267
  %v2270 = vunpack.c.l.s4 1966171168
  %v2271 = vunpack.c.0.s8 %v2270
  %v2272 = vlaneseq
  %v2273 = vshrl.u32 %v2272, 7
  %v2274 = vsub.s32 %v2271, %v2273
  %v2275 = vrot.slane %v2268, %v2274
  %v2277 = vsub.f32 %v2245, %v2275
  %v2278 = vmul.f32 %v2151, %v2250
  %v2279 = vmul.f32 %v2153, %v2254
  %v2280 = vmul.f32 %v2155, %v2250
  %v2281 = vmul.f32 %v2157, %v2254
  %v2282 = vmul.f32 %v2161, %v2250
  %v2283 = vmul.f32 %v2163, %v2254
  %v2284 = vmul.f32 %v2165, %v2250
  %v2285 = vmul.f32 %v2167, %v2254
  %v2287 = vlaneseq
  %v2288 = vshrl.u32 %v2287, 7
  %v2289 = vsub.s32 0, %v2288
  %v2290 = vrot.slane %v2277, %v2289
  %v2291 = vlaneseq
  %v2292 = vshrl.u32 %v2291, 7
  %v2293 = vsub.s32 1, %v2292
  %v2294 = vrot.slane %v2277, %v2293
  %v2297 = vadd.f32 %v2278, %v2290
  %v2298 = vadd.f32 %v2279, %v2294
  %v2299 = vadd.f32 %v2280, %v2290
  %v2300 = vadd.f32 %v2281, %v2294
  %v2301 = vadd.f32 %v2282, %v2290
  %v2302 = vadd.f32 %v2283, %v2294
  %v2303 = vadd.f32 %v2284, %v2290
  %v2304 = vadd.f32 %v2285, %v2294
  %vm2305 = vcmp.ge.f32.partialorder %v2297, 0.0
  %vm2306 = vcmp.ge.f32.partialorder %v2298, 0.0
  %vm2307 = vcmp.ge.f32.partialorder %v2299, 0.0
  %vm2308 = vcmp.ge.f32.partialorder %v2300, 0.0
  %vm2309 = vcmp.ge.f32.partialorder %v2301, 0.0
  %vm2310 = vcmp.ge.f32.partialorder %v2302, 0.0
  %vm2311 = vcmp.ge.f32.partialorder %v2303, 0.0
  %vm2312 = vcmp.ge.f32.partialorder %v2304, 0.0
  %v2313 = vmul.f32 %v2297, 0.2
  %v2314 = vmul.f32 %v2298, 0.2
  %v2315 = vmul.f32 %v2299, 0.2
  %v2316 = vmul.f32 %v2300, 0.2
  %v2317 = vmul.f32 %v2301, 0.2
  %v2318 = vmul.f32 %v2302, 0.2
  %v2319 = vmul.f32 %v2303, 0.2
  %v2320 = vmul.f32 %v2304, 0.2
  %v2321 = vsel %vm2305, %v2297, %v2313
  %v2322 = vsel %vm2306, %v2298, %v2314
  %v2323 = vsel %vm2307, %v2299, %v2315
  %v2324 = vsel %vm2308, %v2300, %v2316
  %v2325 = vsel %vm2309, %v2301, %v2317
  %v2326 = vsel %vm2310, %v2302, %v2318
  %v2327 = vsel %vm2311, %v2303, %v2319
  %v2328 = vsel %vm2312, %v2304, %v2320
  %2329 = vst [vmem:[%s4] sm:$0xff] %v2321
  %2330 = vst [vmem:[%s4 + $0x8] sm:$0xff] %v2322
  %2331 = vst [vmem:[%s4 + $0x10] sm:$0xff] %v2323
  %2332 = vst [vmem:[%s4 + $0x18] sm:$0xff] %v2324
  %2333 = vst [vmem:[%s4 + $0x20] sm:$0xff] %v2325
  %2334 = vst [vmem:[%s4 + $0x28] sm:$0xff] %v2326
  %2335 = vst [vmem:[%s4 + $0x30] sm:$0xff] %v2327
  %2336 = vst [vmem:[%s4 + $0x38] sm:$0xff] %v2328
  // Predicated region
  $region18: #{discriminator_forward.5} parent=0 // pred_check
    _
  $region19: #{discriminator_forward.5} parent=0 // pred_check_branch
    %2338 = sbr.rel (0) target = $region21
  $region20: #{discriminator_forward.5} parent=0 // pred_region
    _
  $region21: #{discriminator_forward.5} parent=0 // pred_fallthru
    _
  // Predicated region
  $region22: #{discriminator_forward.5} parent=0 // pred_check
    _
  $region23: #{discriminator_forward.5} parent=0 // pred_check_branch
    %2340 = sbr.rel (0) target = $region25
  $region24: #{discriminator_forward.5} parent=0 // pred_region
    _
  $region25: #{discriminator_forward.5} parent=0 // pred_fallthru
    _

</llo_original>
